<compile_context>
chip_gen: v6e
topology: v6e:2x2x1
jax: 0.10.0
libtpu: 0.0.40
codegen_flags: <defaults>
</compile_context>

<pallas_src>
import functools

import jax
import jax.numpy as jnp
import numpy as np
from jax.experimental import pallas as pl
from jax.experimental.pallas import tpu as pltpu


def _lattice_cell_kernel(
    h_ref, hp_ref, c_ref, cp_ref, x_ref,      # batch-tiled activations
    wh_ref, bh_ref,                            # hidden_processor [2H,H], [1,H]
    wc_ref, bc_ref,                            # cell_processor   [2H,H], [1,H]
    wg_ref, bg_ref,                            # gates [IN+H,4H], [1,4H] (cols i,f,o,g)
    h_out_ref, c_out_ref,                      # [TB,H] each
):
    hdim = bh_ref.shape[-1]

    # hidden_processor: ReLU(cat(h, h_prev) @ Wh + bh) — one K=2H matmul.
    hh = jnp.concatenate([h_ref[...], hp_ref[...]], axis=-1)           # [TB, 2H]
    ph = jnp.dot(hh, wh_ref[...], preferred_element_type=jnp.float32) + bh_ref[...]
    ph = jnp.maximum(ph, 0.0)                                          # f32

    # cell_processor: ReLU(cat(c, c_prev) @ Wc + bc)
    cc = jnp.concatenate([c_ref[...], cp_ref[...]], axis=-1)           # [TB, 2H]
    pc = jnp.dot(cc, wc_ref[...], preferred_element_type=jnp.float32) + bc_ref[...]
    pc = jnp.maximum(pc, 0.0)                                          # f32

    # LSTMCell gates: cat(x, ph) @ [Wih; Whh] + (b_ih + b_hh) — one K=IN+H matmul.
    xin = x_ref[:, 0, :]                                               # [TB, IN]
    xg = jnp.concatenate([xin, ph.astype(xin.dtype)], axis=-1)         # [TB, IN+H]
    gates = jnp.dot(xg, wg_ref[...], preferred_element_type=jnp.float32) + bg_ref[...]

    # Columns were pre-permuted to (i, f, o, g): one wide sigmoid + one tanh.
    s = jax.nn.sigmoid(gates[:, : 3 * hdim])
    i_g = s[:, 0 * hdim:1 * hdim]
    f_g = s[:, 1 * hdim:2 * hdim]
    o_g = s[:, 2 * hdim:3 * hdim]
    g_g = jnp.tanh(gates[:, 3 * hdim:])

    c_new = f_g * pc + i_g * g_g
    h_new = o_g * jnp.tanh(c_new)

    h_out_ref[...] = h_new.astype(h_out_ref.dtype)
    c_out_ref[...] = c_new.astype(c_out_ref.dtype)


def _default_num_batch_blocks():
    """>=2 grid steps on dual-TensorCore chips (v7x), 1 on single-TC chips."""
    try:
        kind = jax.devices()[0].device_kind.lower()
    except Exception:  # pragma: no cover - defensive; default to single block
        return 1
    return 2 if ("v7" in kind or "7x" in kind) else 1


def prepare_params(params, *, matmul_dtype=jnp.float32):
    """One-time (outside jit) weight prep: transpose, stack, permute, fold biases."""
    f32 = jnp.float32
    H = params["bh"].shape[0]

    wh_t = jnp.asarray(params["wh"], f32).T                 # [2H, H]
    wc_t = jnp.asarray(params["wc"], f32).T                 # [2H, H]

    w_ih_t = jnp.asarray(params["w_ih"], f32).T             # [IN, 4H]
    w_hh_t = jnp.asarray(params["w_hh"], f32).T             # [H, 4H]
    w_gates = jnp.concatenate([w_ih_t, w_hh_t], axis=0)     # [IN+H, 4H]
    b_gates = (jnp.asarray(params["b_ih"], f32)
               + jnp.asarray(params["b_hh"], f32)).reshape(1, 4 * H)

    # PyTorch LSTMCell column order is (i, f, g, o); permute to (i, f, o, g)
    # so the kernel applies a single wide sigmoid and a single tanh.
    perm = np.concatenate([np.arange(0, H), np.arange(H, 2 * H),
                           np.arange(3 * H, 4 * H), np.arange(2 * H, 3 * H)])
    w_gates = w_gates[:, perm]
    b_gates = b_gates[:, perm]

    return {
        # Matmul operands (optionally bf16); biases always f32 (added post-acc).
        "wh": wh_t.astype(matmul_dtype),
        "wc": wc_t.astype(matmul_dtype),
        "w_gates": w_gates.astype(matmul_dtype),
        "bh": jnp.asarray(params["bh"], f32).reshape(1, H),
        "bc": jnp.asarray(params["bc"], f32).reshape(1, H),
        "b_gates": b_gates,
    }


def lattice_rnn_cell_forward(x, hidden_states, prepped, *, block_b=None):
    """x: [B, 1, input_size]; hidden_states: 4-tuple of [B, H] arrays."""
    hidden, cell, hidden_prev, cell_prev = hidden_states
    B, H = hidden.shape
    IN = x.shape[-1]

    mm_dtype = prepped["wh"].dtype
    cast = lambda a: a.astype(mm_dtype)   # no-op in the default f32 path
    x_c, h_c, c_c, hp_c, cp_c = map(cast, (x, hidden, cell, hidden_prev, cell_prev))

    # Batch tile: full batch on single-TC chips, >=2 blocks on v7x.
    if block_b is None:
        TB = -(-B // _default_num_batch_blocks())
    else:
        TB = min(block_b, B)
    if TB >= B:
        TB = B
    else:
        TB = -(-TB // 8) * 8        # sublane-align partial batch tiles
        TB = min(TB, B)
    num_blocks = pl.cdiv(B, TB)
    # Ragged last block (B % TB != 0) relies on Pallas masked block handling:
    # overhang rows are never written to the valid output region.

    def bspec(d):   # batch-tiled [B, d] operand
        return pl.BlockSpec((TB, d), lambda i: (i, 0))

    def wspec(shape):   # weight / bias: constant block, resident in VMEM
        return pl.BlockSpec(shape, lambda i: (0, 0))

    h_out, c_out = pl.pallas_call(
        _lattice_cell_kernel,
        out_shape=(jax.ShapeDtypeStruct((B, H), jnp.float32),
                   jax.ShapeDtypeStruct((B, H), jnp.float32)),
        grid_spec=pltpu.PrefetchScalarGridSpec(
            num_scalar_prefetch=0,
            grid=(num_blocks,),
            in_specs=[
                bspec(H), bspec(H), bspec(H), bspec(H),
                pl.BlockSpec((TB, 1, IN), lambda i: (i, 0, 0)),   # x, squeezed in-kernel
                wspec((2 * H, H)), wspec((1, H)),
                wspec((2 * H, H)), wspec((1, H)),
                wspec((IN + H, 4 * H)), wspec((1, 4 * H)),
            ],
            out_specs=[bspec(H), bspec(H)],
        ),
        compiler_params=pltpu.CompilerParams(
            dimension_semantics=("parallel",)),
    )(h_c, hp_c, c_c, cp_c, x_c,
      prepped["wh"], prepped["bh"],
      prepped["wc"], prepped["bc"],
      prepped["w_gates"], prepped["b_gates"])

    return h_out, c_out


def _init_params(key, input_size, hidden_size):
    """Deterministic init mimicking PyTorch uniform(-1/sqrt(fan_in), 1/sqrt(fan_in))."""
    ks = jax.random.split(key, 8)

    def unif(k, shape, fan_in):
        bound = 1.0 / np.sqrt(fan_in)
        return jax.random.uniform(k, shape, jnp.float32, -bound, bound)

    H = hidden_size
    return {
        # hidden_processor Linear(2H -> H)
        "wh": unif(ks[0], (H, 2 * H), 2 * H),
        "bh": unif(ks[1], (H,), 2 * H),
        # cell_processor Linear(2H -> H)
        "wc": unif(ks[2], (H, 2 * H), 2 * H),
        "bc": unif(ks[3], (H,), 2 * H),
        # LSTMCell
        "w_ih": unif(ks[4], (4 * H, input_size), H),
        "w_hh": unif(ks[5], (4 * H, H), H),
        "b_ih": unif(ks[6], (4 * H,), H),
        "b_hh": unif(ks[7], (4 * H,), H),
    }


def _reference_forward(x, hidden_states, params):
    """Pure-JAX reference mirroring the PyTorch module."""
    hidden, cell, hidden_prev, cell_prev = hidden_states
    comb_h = jnp.concatenate([hidden, hidden_prev], axis=1)
    comb_c = jnp.concatenate([cell, cell_prev], axis=1)
    ph = jax.nn.relu(comb_h @ params["wh"].T + params["bh"])
    pc = jax.nn.relu(comb_c @ params["wc"].T + params["bc"])
    x2 = jnp.squeeze(x, axis=1).astype(jnp.float32)
    gates = (x2 @ params["w_ih"].T + params["b_ih"]
             + ph @ params["w_hh"].T + params["b_hh"])
    H = hidden.shape[1]
    i = jax.nn.sigmoid(gates[:, 0:H])
    f = jax.nn.sigmoid(gates[:, H:2 * H])
    g = jnp.tanh(gates[:, 2 * H:3 * H])
    o = jax.nn.sigmoid(gates[:, 3 * H:4 * H])
    c_new = f * pc + i * g
    h_new = o * jnp.tanh(c_new)
    return h_new, c_new


if __name__ == "__main__":
    # Lane-aligned small shapes: H = IN = 128, batch 256.
    B, INPUT_SIZE, HIDDEN_SIZE = 256, 128, 128

    root = jax.random.PRNGKey(0)
    k_x, k_h, k_c, k_hp, k_cp, k_p = jax.random.split(root, 6)

    x = jax.random.normal(k_x, (B, 1, INPUT_SIZE), jnp.float32)
    hidden = jax.random.normal(k_h, (B, HIDDEN_SIZE), jnp.float32)
    cell = jax.random.normal(k_c, (B, HIDDEN_SIZE), jnp.float32)
    hidden_prev = jax.random.normal(k_hp, (B, HIDDEN_SIZE), jnp.float32)
    cell_prev = jax.random.normal(k_cp, (B, HIDDEN_SIZE), jnp.float32)
    hidden_states = (hidden, cell, hidden_prev, cell_prev)

    params = _init_params(k_p, INPUT_SIZE, HIDDEN_SIZE)
    h_ref, c_ref = _reference_forward(x, hidden_states, params)

    fwd = jax.jit(lattice_rnn_cell_forward)

    # 1) Default f32 matmul path: strict tolerance.
    prepped_f32 = prepare_params(params)            # one-time weight prep, outside jit
    h_out, c_out = fwd(x, hidden_states, prepped_f32)
    jax.block_until_ready((h_out, c_out))
    np.testing.assert_allclose(np.asarray(h_out), np.asarray(h_ref), rtol=1e-4, atol=1e-5)
    np.testing.assert_allclose(np.asarray(c_out), np.asarray(c_ref), rtol=1e-4, atol=1e-5)

    # 2) bf16 matmul operands (v6e/v7x throughput lever), f32 accumulation and
    #    f32 elementwise gate math: relaxed tolerance.
    prepped_bf16 = prepare_params(params, matmul_dtype=jnp.bfloat16)
    h16, c16 = fwd(x, hidden_states, prepped_bf16)
    jax.block_until_ready((h16, c16))
    np.testing.assert_allclose(np.asarray(h16), np.asarray(h_ref), rtol=5e-2, atol=5e-2)
    np.testing.assert_allclose(np.asarray(c16), np.asarray(c_ref), rtol=5e-2, atol=5e-2)

    print("KERNEL_OK")
</pallas_src>

<mosaic_0001>
module attributes {stable_mosaic.version = 11 : i64} {
  func.func @_lattice_cell_kernel(%arg0: i32, %arg1: memref<256x128xf32, #tpu.memory_space<vmem>>, %arg2: memref<256x128xf32, #tpu.memory_space<vmem>>, %arg3: memref<256x128xf32, #tpu.memory_space<vmem>>, %arg4: memref<256x128xf32, #tpu.memory_space<vmem>>, %arg5: memref<256x1x128xf32, #tpu.memory_space<vmem>>, %arg6: memref<256x128xf32, #tpu.memory_space<vmem>>, %arg7: memref<1x128xf32, #tpu.memory_space<vmem>>, %arg8: memref<256x128xf32, #tpu.memory_space<vmem>>, %arg9: memref<1x128xf32, #tpu.memory_space<vmem>>, %arg10: memref<256x512xf32, #tpu.memory_space<vmem>>, %arg11: memref<1x512xf32, #tpu.memory_space<vmem>>, %arg12: memref<256x128xf32, #tpu.memory_space<vmem>>, %arg13: memref<256x128xf32, #tpu.memory_space<vmem>>) attributes {dimension_semantics = [#tpu.dimension_semantics<parallel>], iteration_bounds = array<i64: 1>, scalar_prefetch = 0 : i64, scratch_operands = 0 : i64, tpu.core_type = #tpu.core_type<tc>, window_params = [{transform_indices = @transform_0, window_bounds = array<i64: 256, 128>}, {transform_indices = @transform_1, window_bounds = array<i64: 256, 128>}, {transform_indices = @transform_2, window_bounds = array<i64: 256, 128>}, {transform_indices = @transform_3, window_bounds = array<i64: 256, 128>}, {transform_indices = @transform_4, window_bounds = array<i64: 256, 1, 128>}, {pipeline_mode = #tpu.pipeline_mode<synchronous>, transform_indices = @transform_5, window_bounds = array<i64: 256, 128>}, {pipeline_mode = #tpu.pipeline_mode<synchronous>, transform_indices = @transform_6, window_bounds = array<i64: 1, 128>}, {pipeline_mode = #tpu.pipeline_mode<synchronous>, transform_indices = @transform_7, window_bounds = array<i64: 256, 128>}, {pipeline_mode = #tpu.pipeline_mode<synchronous>, transform_indices = @transform_8, window_bounds = array<i64: 1, 128>}, {pipeline_mode = #tpu.pipeline_mode<synchronous>, transform_indices = @transform_9, window_bounds = array<i64: 256, 512>}, {pipeline_mode = #tpu.pipeline_mode<synchronous>, transform_indices = @transform_10, window_bounds = array<i64: 1, 512>}, {transform_indices = @transform_11, window_bounds = array<i64: 256, 128>}, {transform_indices = @transform_12, window_bounds = array<i64: 256, 128>}]} {
    %c0 = arith.constant 0 : index
    %c0_0 = arith.constant 0 : index
    %0 = vector.load %arg1[%c0, %c0_0] : memref<256x128xf32, #tpu.memory_space<vmem>>, vector<256x128xf32>
    %c0_1 = arith.constant 0 : index
    %c0_2 = arith.constant 0 : index
    %1 = vector.load %arg2[%c0_1, %c0_2] : memref<256x128xf32, #tpu.memory_space<vmem>>, vector<256x128xf32>
    %2 = tpu.concatenate %0, %1 in 1 : vector<256x128xf32>, vector<256x128xf32> -> vector<256x256xf32>
    %c0_3 = arith.constant 0 : index
    %c0_4 = arith.constant 0 : index
    %3 = vector.load %arg6[%c0_3, %c0_4] : memref<256x128xf32, #tpu.memory_space<vmem>>, vector<256x128xf32>
    %cst = arith.constant dense<0.000000e+00> : vector<256x128xf32>
    %4 = tpu.matmul %2, %3, %cst {dimension_numbers = #tpu.dot_dimension_numbers<[1], [0], [0], [1], [0, 0, 1, 1], [], []>} : vector<256x256xf32>, vector<256x128xf32>, vector<256x128xf32> -> vector<256x128xf32>
    %c0_5 = arith.constant 0 : index
    %c0_6 = arith.constant 0 : index
    %5 = vector.load %arg7[%c0_5, %c0_6] : memref<1x128xf32, #tpu.memory_space<vmem>>, vector<1x128xf32>
    %6 = vector.broadcast %5 : vector<1x128xf32> to vector<256x128xf32>
    %7 = arith.addf %4, %6 : vector<256x128xf32>
    %cst_7 = arith.constant 0.000000e+00 : f32
    %8 = vector.broadcast %cst_7 : f32 to vector<256x128xf32>
    %9 = arith.maximumf %7, %8 : vector<256x128xf32>
    %c0_8 = arith.constant 0 : index
    %c0_9 = arith.constant 0 : index
    %10 = vector.load %arg3[%c0_8, %c0_9] : memref<256x128xf32, #tpu.memory_space<vmem>>, vector<256x128xf32>
    %c0_10 = arith.constant 0 : index
    %c0_11 = arith.constant 0 : index
    %11 = vector.load %arg4[%c0_10, %c0_11] : memref<256x128xf32, #tpu.memory_space<vmem>>, vector<256x128xf32>
    %12 = tpu.concatenate %10, %11 in 1 : vector<256x128xf32>, vector<256x128xf32> -> vector<256x256xf32>
    %c0_12 = arith.constant 0 : index
    %c0_13 = arith.constant 0 : index
    %13 = vector.load %arg8[%c0_12, %c0_13] : memref<256x128xf32, #tpu.memory_space<vmem>>, vector<256x128xf32>
    %cst_14 = arith.constant dense<0.000000e+00> : vector<256x128xf32>
    %14 = tpu.matmul %12, %13, %cst_14 {dimension_numbers = #tpu.dot_dimension_numbers<[1], [0], [0], [1], [0, 0, 1, 1], [], []>} : vector<256x256xf32>, vector<256x128xf32>, vector<256x128xf32> -> vector<256x128xf32>
    %c0_15 = arith.constant 0 : index
    %c0_16 = arith.constant 0 : index
    %15 = vector.load %arg9[%c0_15, %c0_16] : memref<1x128xf32, #tpu.memory_space<vmem>>, vector<1x128xf32>
    %16 = vector.broadcast %15 : vector<1x128xf32> to vector<256x128xf32>
    %17 = arith.addf %14, %16 : vector<256x128xf32>
    %cst_17 = arith.constant 0.000000e+00 : f32
    %18 = vector.broadcast %cst_17 : f32 to vector<256x128xf32>
    %19 = arith.maximumf %17, %18 : vector<256x128xf32>
    %c0_18 = arith.constant 0 : index
    %c0_19 = arith.constant 0 : index
    %c0_20 = arith.constant 0 : index
    %20 = vector.load %arg5[%c0_18, %c0_19, %c0_20] : memref<256x1x128xf32, #tpu.memory_space<vmem>>, vector<256x1x128xf32>
    %21 = vector.shape_cast %20 : vector<256x1x128xf32> to vector<256x128xf32>
    %22 = tpu.concatenate %21, %9 in 1 : vector<256x128xf32>, vector<256x128xf32> -> vector<256x256xf32>
    %c0_21 = arith.constant 0 : index
    %c0_22 = arith.constant 0 : index
    %23 = vector.load %arg10[%c0_21, %c0_22] : memref<256x512xf32, #tpu.memory_space<vmem>>, vector<256x512xf32>
    %cst_23 = arith.constant dense<0.000000e+00> : vector<256x512xf32>
    %24 = tpu.matmul %22, %23, %cst_23 {dimension_numbers = #tpu.dot_dimension_numbers<[1], [0], [0], [1], [0, 0, 1, 1], [], []>} : vector<256x256xf32>, vector<256x512xf32>, vector<256x512xf32> -> vector<256x512xf32>
    %c0_24 = arith.constant 0 : index
    %c0_25 = arith.constant 0 : index
    %25 = vector.load %arg11[%c0_24, %c0_25] : memref<1x512xf32, #tpu.memory_space<vmem>>, vector<1x512xf32>
    %26 = vector.broadcast %25 : vector<1x512xf32> to vector<256x512xf32>
    %27 = arith.addf %24, %26 : vector<256x512xf32>
    %28 = vector.extract_strided_slice %27 {offsets = [0, 0], sizes = [256, 384], strides = [1, 1]} : vector<256x512xf32> to vector<256x384xf32>
    %29 = arith.negf %28 : vector<256x384xf32>
    %30 = math.exp %29 : vector<256x384xf32>
    %cst_26 = arith.constant 1.000000e+00 : f32
    %31 = vector.broadcast %cst_26 : f32 to vector<256x384xf32>
    %32 = arith.addf %31, %30 : vector<256x384xf32>
    %33 = arith.divf %31, %32 : vector<256x384xf32>
    %34 = vector.extract_strided_slice %33 {offsets = [0, 0], sizes = [256, 128], strides = [1, 1]} : vector<256x384xf32> to vector<256x128xf32>
    %35 = vector.extract_strided_slice %33 {offsets = [0, 128], sizes = [256, 128], strides = [1, 1]} : vector<256x384xf32> to vector<256x128xf32>
    %36 = vector.extract_strided_slice %33 {offsets = [0, 256], sizes = [256, 128], strides = [1, 1]} : vector<256x384xf32> to vector<256x128xf32>
    %37 = vector.extract_strided_slice %27 {offsets = [0, 384], sizes = [256, 128], strides = [1, 1]} : vector<256x512xf32> to vector<256x128xf32>
    %38 = math.tanh %37 : vector<256x128xf32>
    %39 = arith.mulf %35, %19 : vector<256x128xf32>
    %40 = arith.mulf %34, %38 : vector<256x128xf32>
    %41 = arith.addf %39, %40 : vector<256x128xf32>
    %42 = math.tanh %41 : vector<256x128xf32>
    %43 = arith.mulf %36, %42 : vector<256x128xf32>
    %c0_27 = arith.constant 0 : index
    %c0_28 = arith.constant 0 : index
    %44 = vector.load %arg12[%c0_27, %c0_28] : memref<256x128xf32, #tpu.memory_space<vmem>>, vector<256x128xf32>
    tpu.vector_store %arg12[%c0_27, %c0_28], %43 {strides = array<i32>} : memref<256x128xf32, #tpu.memory_space<vmem>>, vector<256x128xf32>,
    %c0_29 = arith.constant 0 : index
    %c0_30 = arith.constant 0 : index
    %45 = vector.load %arg13[%c0_29, %c0_30] : memref<256x128xf32, #tpu.memory_space<vmem>>, vector<256x128xf32>
    tpu.vector_store %arg13[%c0_29, %c0_30], %41 {strides = array<i32>} : memref<256x128xf32, #tpu.memory_space<vmem>>, vector<256x128xf32>,
    return
  }
  func.func @transform_0(%arg0: i32) -> (i32, i32) {
    %c0_i32 = arith.constant 0 : i32
    %c0_i32_0 = arith.constant 0 : i32
    return %arg0, %c0_i32 : i32, i32
  }
  func.func @transform_1(%arg0: i32) -> (i32, i32) {
    %c0_i32 = arith.constant 0 : i32
    %c0_i32_0 = arith.constant 0 : i32
    return %arg0, %c0_i32 : i32, i32
  }
  func.func @transform_2(%arg0: i32) -> (i32, i32) {
    %c0_i32 = arith.constant 0 : i32
    %c0_i32_0 = arith.constant 0 : i32
    return %arg0, %c0_i32 : i32, i32
  }
  func.func @transform_3(%arg0: i32) -> (i32, i32) {
    %c0_i32 = arith.constant 0 : i32
    %c0_i32_0 = arith.constant 0 : i32
    return %arg0, %c0_i32 : i32, i32
  }
  func.func @transform_4(%arg0: i32) -> (i32, i32, i32) {
    %c0_i32 = arith.constant 0 : i32
    %c0_i32_0 = arith.constant 0 : i32
    %c0_i32_1 = arith.constant 0 : i32
    return %arg0, %c0_i32, %c0_i32_0 : i32, i32, i32
  }
  func.func @transform_5(%arg0: i32) -> (i32, i32) {
    %c0_i32 = arith.constant 0 : i32
    %c0_i32_0 = arith.constant 0 : i32
    %c0_i32_1 = arith.constant 0 : i32
    return %c0_i32, %c0_i32_0 : i32, i32
  }
  func.func @transform_6(%arg0: i32) -> (i32, i32) {
    %c0_i32 = arith.constant 0 : i32
    %c0_i32_0 = arith.constant 0 : i32
    %c0_i32_1 = arith.constant 0 : i32
    return %c0_i32, %c0_i32_0 : i32, i32
  }
  func.func @transform_7(%arg0: i32) -> (i32, i32) {
    %c0_i32 = arith.constant 0 : i32
    %c0_i32_0 = arith.constant 0 : i32
    %c0_i32_1 = arith.constant 0 : i32
    return %c0_i32, %c0_i32_0 : i32, i32
  }
  func.func @transform_8(%arg0: i32) -> (i32, i32) {
    %c0_i32 = arith.constant 0 : i32
    %c0_i32_0 = arith.constant 0 : i32
    %c0_i32_1 = arith.constant 0 : i32
    return %c0_i32, %c0_i32_0 : i32, i32
  }
  func.func @transform_9(%arg0: i32) -> (i32, i32) {
    %c0_i32 = arith.constant 0 : i32
    %c0_i32_0 = arith.constant 0 : i32
    %c0_i32_1 = arith.constant 0 : i32
    return %c0_i32, %c0_i32_0 : i32, i32
  }
  func.func @transform_10(%arg0: i32) -> (i32, i32) {
    %c0_i32 = arith.constant 0 : i32
    %c0_i32_0 = arith.constant 0 : i32
    %c0_i32_1 = arith.constant 0 : i32
    return %c0_i32, %c0_i32_0 : i32, i32
  }
  func.func @transform_11(%arg0: i32) -> (i32, i32) {
    %c0_i32 = arith.constant 0 : i32
    %c0_i32_0 = arith.constant 0 : i32
    return %arg0, %c0_i32 : i32, i32
  }
  func.func @transform_12(%arg0: i32) -> (i32, i32) {
    %c0_i32 = arith.constant 0 : i32
    %c0_i32_0 = arith.constant 0 : i32
    return %arg0, %c0_i32 : i32, i32
  }
}

</mosaic_0001>

<llo_original>
// kernel: lattice_rnn_cell_forward.1
$region0: #{lattice_rnn_cell_forward.1}
  #allocation0 [shape = 'u32[]', space=smem, size = 0x4, offset = 0x4, fixed_abs, tag = 'smem constant byte address 0x4 - core index']
  #allocation1 [shape = 'u32[144,128]{1,0:T(1,128)}', space=vmem, size = 0x12000, scoped, tag = 'internal scratch']
  %s0 = inlined_call_operand.hbm [shape: f32[256,128], index: 0, kind: input, shape index: {}]
  %s1 = inlined_call_operand.hbm [shape: f32[256,128], index: 1, kind: input, shape index: {}]
  %s2 = inlined_call_operand.hbm [shape: f32[256,128], index: 2, kind: input, shape index: {}]
  %s3 = inlined_call_operand.hbm [shape: f32[256,128], index: 3, kind: input, shape index: {}]
  %s4 = inlined_call_operand.hbm [shape: f32[256,1,128], index: 4, kind: input, shape index: {}]
  %s5 = inlined_call_operand.hbm [shape: f32[256,128], index: 5, kind: input, shape index: {}]
  %s6 = inlined_call_operand.vmem [shape: f32[1,128], index: 6, kind: input, shape index: {}]
  %s7 = inlined_call_operand.hbm [shape: f32[256,128], index: 7, kind: input, shape index: {}]
  %s8 = inlined_call_operand.vmem [shape: f32[1,128], index: 8, kind: input, shape index: {}]
  %s9 = inlined_call_operand.hbm [shape: f32[256,512], index: 9, kind: input, shape index: {}]
  %s10 = inlined_call_operand.vmem [shape: f32[1,512], index: 10, kind: input, shape index: {}]
  %s11 = inlined_call_operand.hbm [shape: f32[256,128], index: 11, kind: output, shape index: {0}]
  %s12 = inlined_call_operand.hbm [shape: f32[256,128], index: 12, kind: output, shape index: {1}]
  %13 = xla_tuple %s11, %s12
  %s14 = sld [smem:[#allocation0]]
  $region94: #{lattice_rnn_cell_forward.1} parent=0
    _
  %s16 = ssub.s32 1, %s14
  %s17 = scalar_select 0, %s16, %s14
  $region1: #{lattice_rnn_cell_forward.1} parent=0
    #allocation2 [shape = 'u8[131072]{0}', space=vmem, size = 0x20000, scoped, tag = 'input window, operand 0, single buffered']
    #allocation3 [shape = 's32[1]{0}', space=sflag, size = 0x4, scoped, tag = 'scoped memory for lattice_rnn_cell_forward.1']
    #allocation4 [shape = 's32[1]{0}', space=sflag, size = 0x4, scoped, tag = 'scoped memory for lattice_rnn_cell_forward.1']
    #allocation5 [shape = 'u8[131072]{0}', space=vmem, size = 0x20000, scoped, tag = 'input window, operand 1, single buffered']
    #allocation6 [shape = 's32[1]{0}', space=sflag, size = 0x4, scoped, tag = 'scoped memory for lattice_rnn_cell_forward.1']
    #allocation7 [shape = 'u8[131072]{0}', space=vmem, size = 0x20000, scoped, tag = 'input window, operand 2, single buffered']
    #allocation8 [shape = 'u8[131072]{0}', space=vmem, size = 0x20000, scoped, tag = 'input window, operand 3, single buffered']
    #allocation9 [shape = 's32[1]{0}', space=sflag, size = 0x4, scoped, tag = 'scoped memory for lattice_rnn_cell_forward.1']
    #allocation10 [shape = 'u8[131072]{0}', space=vmem, size = 0x20000, scoped, tag = 'input window, operand 4, single buffered']
    #allocation11 [shape = 'u8[131072]{0}', space=vmem, size = 0x20000, scoped, tag = 'input window, operand 5, single buffered']
    #allocation12 [shape = 's32[1]{0}', space=sflag, size = 0x4, scoped, tag = 'scoped memory for lattice_rnn_cell_forward.1']
    #allocation13 [shape = 'u8[131072]{0}', space=vmem, size = 0x20000, scoped, tag = 'input window, operand 7, single buffered']
    #allocation14 [shape = 'u8[524288]{0}', space=vmem, size = 0x80000, scoped, tag = 'input window, operand 9, single buffered']
    #allocation15 [shape = 's32[1]{0}', space=sflag, size = 0x4, scoped, tag = 'scoped memory for lattice_rnn_cell_forward.1']
    #allocation16 [shape = 'u8[131072]{0}', space=vmem, size = 0x20000, scoped, tag = 'output window, operand 0, single buffered']
    #allocation17 [shape = 'u8[131072]{0}', space=vmem, size = 0x20000, scoped, tag = 'output window, operand 1, single buffered']
    #allocation18 [shape = 's32[1]{0}', space=sflag, size = 0x4, scoped, tag = 'scoped memory for lattice_rnn_cell_forward.1']
    %18 = vsyncpa [#allocation3], 0
    %19 = vsyncpa [#allocation6], 0
    %20 = vsyncpa [#allocation9], 0
    %21 = vsyncpa [#allocation12], 0
    %22 = vsyncpa [#allocation15], 0
    %23 = vsyncpa [#allocation4], 0
    %24 = vsyncpa [#allocation18], 0
    // Predicated region
    $region2: #{lattice_rnn_cell_forward.1} parent=1 // pred_check
      _
    $region3: #{lattice_rnn_cell_forward.1} parent=1 // pred_check_branch
      %26 = sbr.rel (0) target = $region5
    $region4: #{lattice_rnn_cell_forward.1} parent=1 // pred_region
      %s28 = ssub.s32 4096, 4096
      %29 = vsyncadd [#allocation3], %s28
      %s30 = sshll.u32 [#allocation2], 4
      %s31 = int_to_ptr.vmem [resolvable:$true] %s30
      %36 = dma.hbm_to_vmem [thread:$0]  %s0, 4096, %s31, [#allocation3], 128, 128, 8
    $region5: #{lattice_rnn_cell_forward.1} parent=1 // pred_fallthru
      _
    // Predicated region
    $region6: #{lattice_rnn_cell_forward.1} parent=1 // pred_check
      _
    $region7: #{lattice_rnn_cell_forward.1} parent=1 // pred_check_branch
      %38 = sbr.rel (0) target = $region9
    $region8: #{lattice_rnn_cell_forward.1} parent=1 // pred_region
      %s40 = ssub.s32 4096, 4096
      %41 = vsyncadd [#allocation6], %s40
      %s42 = sshll.u32 [#allocation5], 4
      %s43 = int_to_ptr.vmem [resolvable:$true] %s42
      %48 = dma.hbm_to_vmem [thread:$0]  %s1, 4096, %s43, [#allocation6], 128, 128, 8
    $region9: #{lattice_rnn_cell_forward.1} parent=1 // pred_fallthru
      _
    // Predicated region
    $region10: #{lattice_rnn_cell_forward.1} parent=1 // pred_check
      _
    $region11: #{lattice_rnn_cell_forward.1} parent=1 // pred_check_branch
      %50 = sbr.rel (0) target = $region13
    $region12: #{lattice_rnn_cell_forward.1} parent=1 // pred_region
      %s52 = ssub.s32 4096, 4096
      %53 = vsyncadd [#allocation6], %s52
      %s54 = sshll.u32 [#allocation7], 4
      %s55 = int_to_ptr.vmem [resolvable:$true] %s54
      %60 = dma.hbm_to_vmem [thread:$0]  %s2, 4096, %s55, [#allocation6], 128, 128, 8
    $region13: #{lattice_rnn_cell_forward.1} parent=1 // pred_fallthru
      _
    // Predicated region
    $region14: #{lattice_rnn_cell_forward.1} parent=1 // pred_check
      _
    $region15: #{lattice_rnn_cell_forward.1} parent=1 // pred_check_branch
      %62 = sbr.rel (0) target = $region17
    $region16: #{lattice_rnn_cell_forward.1} parent=1 // pred_region
      %s64 = ssub.s32 4096, 4096
      %65 = vsyncadd [#allocation9], %s64
      %s66 = sshll.u32 [#allocation8], 4
      %s67 = int_to_ptr.vmem [resolvable:$true] %s66
      %72 = dma.hbm_to_vmem [thread:$0]  %s3, 4096, %s67, [#allocation9], 128, 128, 8
    $region17: #{lattice_rnn_cell_forward.1} parent=1 // pred_fallthru
      _
    // Predicated region
    $region18: #{lattice_rnn_cell_forward.1} parent=1 // pred_check
      _
    $region19: #{lattice_rnn_cell_forward.1} parent=1 // pred_check_branch
      %74 = sbr.rel (0) target = $region21
    $region20: #{lattice_rnn_cell_forward.1} parent=1 // pred_region
      %s76 = ssub.s32 4096, 4096
      %77 = vsyncadd [#allocation9], %s76
      %s78 = sshll.u32 [#allocation10], 4
      %s79 = int_to_ptr.vmem [resolvable:$true] %s78
      %84 = dma.hbm_to_vmem [thread:$0]  %s4, 4096, %s79, [#allocation9], 16, 16, 1
    $region21: #{lattice_rnn_cell_forward.1} parent=1 // pred_fallthru
      _
    // Predicated region
    $region22: #{lattice_rnn_cell_forward.1} parent=1 // pred_check
      _
    $region23: #{lattice_rnn_cell_forward.1} parent=1 // pred_check_branch
      %86 = sbr.rel (0) target = $region25
    $region24: #{lattice_rnn_cell_forward.1} parent=1 // pred_region
      %s88 = ssub.s32 4096, 4096
      %89 = vsyncadd [#allocation12], %s88
      %s90 = sshll.u32 [#allocation11], 4
      %s91 = int_to_ptr.vmem [resolvable:$true] %s90
      %96 = dma.hbm_to_vmem [thread:$0]  %s5, 4096, %s91, [#allocation12], 128, 128, 8
    $region25: #{lattice_rnn_cell_forward.1} parent=1 // pred_fallthru
      _
    // Predicated region
    $region26: #{lattice_rnn_cell_forward.1} parent=1 // pred_check
      _
    $region27: #{lattice_rnn_cell_forward.1} parent=1 // pred_check_branch
      %98 = sbr.rel (0) target = $region29
    $region28: #{lattice_rnn_cell_forward.1} parent=1 // pred_region
      _
    $region29: #{lattice_rnn_cell_forward.1} parent=1 // pred_fallthru
      _
    // Predicated region
    $region30: #{lattice_rnn_cell_forward.1} parent=1 // pred_check
      _
    $region31: #{lattice_rnn_cell_forward.1} parent=1 // pred_check_branch
      %100 = sbr.rel (0) target = $region33
    $region32: #{lattice_rnn_cell_forward.1} parent=1 // pred_region
      %s102 = ssub.s32 4096, 4096
      %103 = vsyncadd [#allocation12], %s102
      %s104 = sshll.u32 [#allocation13], 4
      %s105 = int_to_ptr.vmem [resolvable:$true] %s104
      %110 = dma.hbm_to_vmem [thread:$0]  %s7, 4096, %s105, [#allocation12], 128, 128, 8
    $region33: #{lattice_rnn_cell_forward.1} parent=1 // pred_fallthru
      _
    // Predicated region
    $region34: #{lattice_rnn_cell_forward.1} parent=1 // pred_check
      _
    $region35: #{lattice_rnn_cell_forward.1} parent=1 // pred_check_branch
      %112 = sbr.rel (0) target = $region37
    $region36: #{lattice_rnn_cell_forward.1} parent=1 // pred_region
      _
    $region37: #{lattice_rnn_cell_forward.1} parent=1 // pred_fallthru
      _
    // Predicated region
    $region38: #{lattice_rnn_cell_forward.1} parent=1 // pred_check
      _
    $region39: #{lattice_rnn_cell_forward.1} parent=1 // pred_check_branch
      %114 = sbr.rel (0) target = $region41
    $region40: #{lattice_rnn_cell_forward.1} parent=1 // pred_region
      %s116 = ssub.s32 16384, 16384
      %117 = vsyncadd [#allocation15], %s116
      %s118 = sshll.u32 [#allocation14], 4
      %s119 = int_to_ptr.vmem [resolvable:$true] %s118
      %124 = dma.hbm_to_vmem [thread:$0]  %s9, 16384, %s119, [#allocation15], 512, 512, 32
    $region41: #{lattice_rnn_cell_forward.1} parent=1 // pred_fallthru
      _
    // Predicated region
    $region42: #{lattice_rnn_cell_forward.1} parent=1 // pred_check
      _
    $region43: #{lattice_rnn_cell_forward.1} parent=1 // pred_check_branch
      %126 = sbr.rel (0) target = $region45
    $region44: #{lattice_rnn_cell_forward.1} parent=1 // pred_region
      _
    $region45: #{lattice_rnn_cell_forward.1} parent=1 // pred_fallthru
      _
    // Predicated region
    $region46: #{lattice_rnn_cell_forward.1} parent=1 // pred_check
      _
    $region47: #{lattice_rnn_cell_forward.1} parent=1 // pred_check_branch
      %128 = sbr.rel (0) target = $region49
    $region48: #{lattice_rnn_cell_forward.1} parent=1 // pred_region
      %129 = dma.done [#allocation3], 4096
    $region49: #{lattice_rnn_cell_forward.1} parent=1 // pred_fallthru
      _
    // Predicated region
    $region50: #{lattice_rnn_cell_forward.1} parent=1 // pred_check
      _
    $region51: #{lattice_rnn_cell_forward.1} parent=1 // pred_check_branch
      %131 = sbr.rel (0) target = $region53
    $region52: #{lattice_rnn_cell_forward.1} parent=1 // pred_region
      %132 = dma.done [#allocation6], 4096
    $region53: #{lattice_rnn_cell_forward.1} parent=1 // pred_fallthru
      _
    // Predicated region
    $region54: #{lattice_rnn_cell_forward.1} parent=1 // pred_check
      _
    $region55: #{lattice_rnn_cell_forward.1} parent=1 // pred_check_branch
      %134 = sbr.rel (0) target = $region57
    $region56: #{lattice_rnn_cell_forward.1} parent=1 // pred_region
      %135 = dma.done [#allocation6], 4096
    $region57: #{lattice_rnn_cell_forward.1} parent=1 // pred_fallthru
      _
    // Predicated region
    $region58: #{lattice_rnn_cell_forward.1} parent=1 // pred_check
      _
    $region59: #{lattice_rnn_cell_forward.1} parent=1 // pred_check_branch
      %137 = sbr.rel (0) target = $region61
    $region60: #{lattice_rnn_cell_forward.1} parent=1 // pred_region
      %138 = dma.done [#allocation9], 4096
    $region61: #{lattice_rnn_cell_forward.1} parent=1 // pred_fallthru
      _
    // Predicated region
    $region62: #{lattice_rnn_cell_forward.1} parent=1 // pred_check
      _
    $region63: #{lattice_rnn_cell_forward.1} parent=1 // pred_check_branch
      %140 = sbr.rel (0) target = $region65
    $region64: #{lattice_rnn_cell_forward.1} parent=1 // pred_region
      %141 = dma.done [#allocation9], 4096
    $region65: #{lattice_rnn_cell_forward.1} parent=1 // pred_fallthru
      _
    // Predicated region
    $region66: #{lattice_rnn_cell_forward.1} parent=1 // pred_check
      _
    $region67: #{lattice_rnn_cell_forward.1} parent=1 // pred_check_branch
      %143 = sbr.rel (0) target = $region69
    $region68: #{lattice_rnn_cell_forward.1} parent=1 // pred_region
      %144 = dma.done [#allocation12], 4096
    $region69: #{lattice_rnn_cell_forward.1} parent=1 // pred_fallthru
      _
    // Predicated region
    $region70: #{lattice_rnn_cell_forward.1} parent=1 // pred_check
      _
    $region71: #{lattice_rnn_cell_forward.1} parent=1 // pred_check_branch
      %146 = sbr.rel (0) target = $region73
    $region72: #{lattice_rnn_cell_forward.1} parent=1 // pred_region
      %147 = dma.done [#allocation12], 4096
    $region73: #{lattice_rnn_cell_forward.1} parent=1 // pred_fallthru
      _
    // Predicated region
    $region74: #{lattice_rnn_cell_forward.1} parent=1 // pred_check
      _
    $region75: #{lattice_rnn_cell_forward.1} parent=1 // pred_check_branch
      %149 = sbr.rel (0) target = $region77
    $region76: #{lattice_rnn_cell_forward.1} parent=1 // pred_region
      %150 = dma.done [#allocation15], 16384
    $region77: #{lattice_rnn_cell_forward.1} parent=1 // pred_fallthru
      _
    %v151 = vld [vmem:[#allocation2] sm:$0xff]
    %v152 = vld [vmem:[#allocation2 + $0x8] sm:$0xff]
    %v153 = vld [vmem:[#allocation2 + $0x10] sm:$0xff]
    %v154 = vld [vmem:[#allocation2 + $0x18] sm:$0xff]
    %v155 = vld [vmem:[#allocation2 + $0x20] sm:$0xff]
    %v156 = vld [vmem:[#allocation2 + $0x28] sm:$0xff]
    %v157 = vld [vmem:[#allocation2 + $0x30] sm:$0xff]
    %v158 = vld [vmem:[#allocation2 + $0x38] sm:$0xff]
    %v159 = vld [vmem:[#allocation2 + $0x40] sm:$0xff]
    %v160 = vld [vmem:[#allocation2 + $0x48] sm:$0xff]
    %v161 = vld [vmem:[#allocation2 + $0x50] sm:$0xff]
    %v162 = vld [vmem:[#allocation2 + $0x58] sm:$0xff]
    %v163 = vld [vmem:[#allocation2 + $0x60] sm:$0xff]
    %v164 = vld [vmem:[#allocation2 + $0x68] sm:$0xff]
    %v165 = vld [vmem:[#allocation2 + $0x70] sm:$0xff]
    %v166 = vld [vmem:[#allocation2 + $0x78] sm:$0xff]
    %v167 = vld [vmem:[#allocation2 + $0x80] sm:$0xff]
    %v168 = vld [vmem:[#allocation2 + $0x88] sm:$0xff]
    %v169 = vld [vmem:[#allocation2 + $0x90] sm:$0xff]
    %v170 = vld [vmem:[#allocation2 + $0x98] sm:$0xff]
    %v171 = vld [vmem:[#allocation2 + $0xa0] sm:$0xff]
    %v172 = vld [vmem:[#allocation2 + $0xa8] sm:$0xff]
    %v173 = vld [vmem:[#allocation2 + $0xb0] sm:$0xff]
    %v174 = vld [vmem:[#allocation2 + $0xb8] sm:$0xff]
    %v175 = vld [vmem:[#allocation2 + $0xc0] sm:$0xff]
    %v176 = vld [vmem:[#allocation2 + $0xc8] sm:$0xff]
    %v177 = vld [vmem:[#allocation2 + $0xd0] sm:$0xff]
    %v178 = vld [vmem:[#allocation2 + $0xd8] sm:$0xff]
    %v179 = vld [vmem:[#allocation2 + $0xe0] sm:$0xff]
    %v180 = vld [vmem:[#allocation2 + $0xe8] sm:$0xff]
    %v181 = vld [vmem:[#allocation2 + $0xf0] sm:$0xff]
    %v182 = vld [vmem:[#allocation2 + $0xf8] sm:$0xff]
    %v183 = vld [vmem:[#allocation5] sm:$0xff]
    %v184 = vld [vmem:[#allocation5 + $0x8] sm:$0xff]
    %v185 = vld [vmem:[#allocation5 + $0x10] sm:$0xff]
    %v186 = vld [vmem:[#allocation5 + $0x18] sm:$0xff]
    %v187 = vld [vmem:[#allocation5 + $0x20] sm:$0xff]
    %v188 = vld [vmem:[#allocation5 + $0x28] sm:$0xff]
    %v189 = vld [vmem:[#allocation5 + $0x30] sm:$0xff]
    %v190 = vld [vmem:[#allocation5 + $0x38] sm:$0xff]
    %v191 = vld [vmem:[#allocation5 + $0x40] sm:$0xff]
    %v192 = vld [vmem:[#allocation5 + $0x48] sm:$0xff]
    %v193 = vld [vmem:[#allocation5 + $0x50] sm:$0xff]
    %v194 = vld [vmem:[#allocation5 + $0x58] sm:$0xff]
    %v195 = vld [vmem:[#allocation5 + $0x60] sm:$0xff]
    %v196 = vld [vmem:[#allocation5 + $0x68] sm:$0xff]
    %v197 = vld [vmem:[#allocation5 + $0x70] sm:$0xff]
    %v198 = vld [vmem:[#allocation5 + $0x78] sm:$0xff]
    %v199 = vld [vmem:[#allocation5 + $0x80] sm:$0xff]
    %v200 = vld [vmem:[#allocation5 + $0x88] sm:$0xff]
    %v201 = vld [vmem:[#allocation5 + $0x90] sm:$0xff]
    %v202 = vld [vmem:[#allocation5 + $0x98] sm:$0xff]
    %v203 = vld [vmem:[#allocation5 + $0xa0] sm:$0xff]
    %v204 = vld [vmem:[#allocation5 + $0xa8] sm:$0xff]
    %v205 = vld [vmem:[#allocation5 + $0xb0] sm:$0xff]
    %v206 = vld [vmem:[#allocation5 + $0xb8] sm:$0xff]
    %v207 = vld [vmem:[#allocation5 + $0xc0] sm:$0xff]
    %v208 = vld [vmem:[#allocation5 + $0xc8] sm:$0xff]
    %v209 = vld [vmem:[#allocation5 + $0xd0] sm:$0xff]
    %v210 = vld [vmem:[#allocation5 + $0xd8] sm:$0xff]
    %v211 = vld [vmem:[#allocation5 + $0xe0] sm:$0xff]
    %v212 = vld [vmem:[#allocation5 + $0xe8] sm:$0xff]
    %v213 = vld [vmem:[#allocation5 + $0xf0] sm:$0xff]
    %v214 = vld [vmem:[#allocation5 + $0xf8] sm:$0xff]
    %v215 = vld [vmem:[#allocation11] sm:$0xff]
    %v216 = vld [vmem:[#allocation11 + $0x8] sm:$0xff]
    %v217 = vld [vmem:[#allocation11 + $0x10] sm:$0xff]
    %v218 = vld [vmem:[#allocation11 + $0x18] sm:$0xff]
    %v219 = vld [vmem:[#allocation11 + $0x20] sm:$0xff]
    %v220 = vld [vmem:[#allocation11 + $0x28] sm:$0xff]
    %v221 = vld [vmem:[#allocation11 + $0x30] sm:$0xff]
    %v222 = vld [vmem:[#allocation11 + $0x38] sm:$0xff]
    %v223 = vld [vmem:[#allocation11 + $0x40] sm:$0xff]
    %v224 = vld [vmem:[#allocation11 + $0x48] sm:$0xff]
    %v225 = vld [vmem:[#allocation11 + $0x50] sm:$0xff]
    %v226 = vld [vmem:[#allocation11 + $0x58] sm:$0xff]
    %v227 = vld [vmem:[#allocation11 + $0x60] sm:$0xff]
    %v228 = vld [vmem:[#allocation11 + $0x68] sm:$0xff]
    %v229 = vld [vmem:[#allocation11 + $0x70] sm:$0xff]
    %v230 = vld [vmem:[#allocation11 + $0x78] sm:$0xff]
    %v231 = vld [vmem:[#allocation11 + $0x80] sm:$0xff]
    %v232 = vld [vmem:[#allocation11 + $0x88] sm:$0xff]
    %v233 = vld [vmem:[#allocation11 + $0x90] sm:$0xff]
    %v234 = vld [vmem:[#allocation11 + $0x98] sm:$0xff]
    %v235 = vld [vmem:[#allocation11 + $0xa0] sm:$0xff]
    %v236 = vld [vmem:[#allocation11 + $0xa8] sm:$0xff]
    %v237 = vld [vmem:[#allocation11 + $0xb0] sm:$0xff]
    %v238 = vld [vmem:[#allocation11 + $0xb8] sm:$0xff]
    %v239 = vld [vmem:[#allocation11 + $0xc0] sm:$0xff]
    %v240 = vld [vmem:[#allocation11 + $0xc8] sm:$0xff]
    %v241 = vld [vmem:[#allocation11 + $0xd0] sm:$0xff]
    %v242 = vld [vmem:[#allocation11 + $0xd8] sm:$0xff]
    %v243 = vld [vmem:[#allocation11 + $0xe0] sm:$0xff]
    %v244 = vld [vmem:[#allocation11 + $0xe8] sm:$0xff]
    %v245 = vld [vmem:[#allocation11 + $0xf0] sm:$0xff]
    %v246 = vld [vmem:[#allocation11 + $0xf8] sm:$0xff]
    %v247 = vld [vmem:[%s6] sm:$0x1]
    %v249 = vlaneseq
    %v250 = vshrl.u32 %v249, 7
    %v251 = vsub.s32 0, %v250
    %v252 = vrot.slane %v247, %v251
    %254 = vmatprep.subr.mxu0 0.0
    %255 = vmatpush1.msra.mxu0 %v230
    %256 = vmatprep.subr.mxu0 0.0
    %257 = vmatpush1.msra.mxu0 %v229
    %258 = vmatprep.subr.mxu0 0.0
    %259 = vmatpush1.msra.mxu0 %v228
    %260 = vmatprep.subr.mxu0 0.0
    %261 = vmatpush1.msra.mxu0 %v227
    %262 = vmatprep.subr.mxu0 0.0
    %263 = vmatpush1.msra.mxu0 %v226
    %264 = vmatprep.subr.mxu0 0.0
    %265 = vmatpush1.msra.mxu0 %v225
    %266 = vmatprep.subr.mxu0 0.0
    %267 = vmatpush1.msra.mxu0 %v224
    %268 = vmatprep.subr.mxu0 0.0
    %269 = vmatpush1.msra.mxu0 %v223
    %270 = vmatprep.subr.mxu0 0.0
    %271 = vmatpush1.msra.mxu0 %v222
    %272 = vmatprep.subr.mxu0 0.0
    %273 = vmatpush1.msra.mxu0 %v221
    %274 = vmatprep.subr.mxu0 0.0
    %275 = vmatpush1.msra.mxu0 %v220
    %276 = vmatprep.subr.mxu0 0.0
    %277 = vmatpush1.msra.mxu0 %v219
    %278 = vmatprep.subr.mxu0 0.0
    %279 = vmatpush1.msra.mxu0 %v218
    %280 = vmatprep.subr.mxu0 0.0
    %281 = vmatpush1.msra.mxu0 %v217
    %282 = vmatprep.subr.mxu0 0.0
    %283 = vmatpush1.msra.mxu0 %v216
    %284 = vmatprep.subr.mxu0 0.0
    %285 = vmatpush1.msra.mxu0 %v215
    %286 = vmatprep.subr.mxu0 0.0
    %287 = vmatpush2.msra.mxu0 %v246
    %288 = vmatprep.subr.mxu0 0.0
    %289 = vmatpush2.msra.mxu0 %v245
    %290 = vmatprep.subr.mxu0 0.0
    %291 = vmatpush2.msra.mxu0 %v244
    %292 = vmatprep.subr.mxu0 0.0
    %293 = vmatpush2.msra.mxu0 %v243
    %294 = vmatprep.subr.mxu0 0.0
    %295 = vmatpush2.msra.mxu0 %v242
    %296 = vmatprep.subr.mxu0 0.0
    %297 = vmatpush2.msra.mxu0 %v241
    %298 = vmatprep.subr.mxu0 0.0
    %299 = vmatpush2.msra.mxu0 %v240
    %300 = vmatprep.subr.mxu0 0.0
    %301 = vmatpush2.msra.mxu0 %v239
    %302 = vmatprep.subr.mxu0 0.0
    %303 = vmatpush2.msra.mxu0 %v238
    %304 = vmatprep.subr.mxu0 0.0
    %305 = vmatpush2.msra.mxu0 %v237
    %306 = vmatprep.subr.mxu0 0.0
    %307 = vmatpush2.msra.mxu0 %v236
    %308 = vmatprep.subr.mxu0 0.0
    %309 = vmatpush2.msra.mxu0 %v235
    %310 = vmatprep.subr.mxu0 0.0
    %311 = vmatpush2.msra.mxu0 %v234
    %312 = vmatprep.subr.mxu0 0.0
    %313 = vmatpush2.msra.mxu0 %v233
    %314 = vmatprep.subr.mxu0 0.0
    %315 = vmatpush2.msra.mxu0 %v232
    %316 = vmatprep.subr.mxu0 0.0
    %317 = vmatpush2.msra.mxu0 %v231
    %318 = vmatprep.mubr.f32.mxu0 %v183
    %319 = vmatmul.mubr.f32.gmra.mxu0 %v151
    %v320 = vpop.f32.mrf.mxu0
    %v321 = vadd.f32 %v252, %v320
    %v322 = vpop.f32.mrf.mxu0
    %323 = vmatprep.mubr.f32.mxu0 %v184
    %324 = vmatmul.mubr.f32.gmra.mxu0 %v152
    %v325 = vpop.f32.mrf.mxu0
    %v326 = vadd.f32 %v252, %v325
    %v327 = vpop.f32.mrf.mxu0
    %328 = vmatprep.mubr.f32.mxu0 %v185
    %329 = vmatmul.mubr.f32.gmra.mxu0 %v153
    %v330 = vpop.f32.mrf.mxu0
    %v331 = vadd.f32 %v252, %v330
    %v332 = vpop.f32.mrf.mxu0
    %333 = vmatprep.mubr.f32.mxu0 %v186
    %334 = vmatmul.mubr.f32.gmra.mxu0 %v154
    %v335 = vpop.f32.mrf.mxu0
    %v336 = vadd.f32 %v252, %v335
    %v337 = vpop.f32.mrf.mxu0
    %338 = vmatprep.mubr.f32.mxu0 %v187
    %339 = vmatmul.mubr.f32.gmra.mxu0 %v155
    %v340 = vpop.f32.mrf.mxu0
    %v341 = vadd.f32 %v252, %v340
    %v342 = vpop.f32.mrf.mxu0
    %343 = vmatprep.mubr.f32.mxu0 %v188
    %344 = vmatmul.mubr.f32.gmra.mxu0 %v156
    %v345 = vpop.f32.mrf.mxu0
    %v346 = vadd.f32 %v252, %v345
    %v347 = vpop.f32.mrf.mxu0
    %348 = vmatprep.mubr.f32.mxu0 %v189
    %349 = vmatmul.mubr.f32.gmra.mxu0 %v157
    %v350 = vpop.f32.mrf.mxu0
    %v351 = vadd.f32 %v252, %v350
    %v352 = vpop.f32.mrf.mxu0
    %353 = vmatprep.mubr.f32.mxu0 %v190
    %354 = vmatmul.mubr.f32.gmra.mxu0 %v158
    %v355 = vpop.f32.mrf.mxu0
    %v356 = vadd.f32 %v252, %v355
    %v357 = vpop.f32.mrf.mxu0
    %358 = vmatprep.mubr.f32.mxu0 %v191
    %359 = vmatmul.mubr.f32.gmra.mxu0 %v159
    %v360 = vpop.f32.mrf.mxu0
    %v361 = vadd.f32 %v252, %v360
    %v362 = vpop.f32.mrf.mxu0
    %363 = vmatprep.mubr.f32.mxu0 %v192
    %364 = vmatmul.mubr.f32.gmra.mxu0 %v160
    %v365 = vpop.f32.mrf.mxu0
    %v366 = vadd.f32 %v252, %v365
    %v367 = vpop.f32.mrf.mxu0
    %368 = vmatprep.mubr.f32.mxu0 %v193
    %369 = vmatmul.mubr.f32.gmra.mxu0 %v161
    %v370 = vpop.f32.mrf.mxu0
    %v371 = vadd.f32 %v252, %v370
    %v372 = vpop.f32.mrf.mxu0
    %373 = vmatprep.mubr.f32.mxu0 %v194
    %374 = vmatmul.mubr.f32.gmra.mxu0 %v162
    %v375 = vpop.f32.mrf.mxu0
    %v376 = vadd.f32 %v252, %v375
    %v377 = vpop.f32.mrf.mxu0
    %378 = vmatprep.mubr.f32.mxu0 %v195
    %379 = vmatmul.mubr.f32.gmra.mxu0 %v163
    %v380 = vpop.f32.mrf.mxu0
    %v381 = vadd.f32 %v252, %v380
    %v382 = vpop.f32.mrf.mxu0
    %383 = vmatprep.mubr.f32.mxu0 %v196
    %384 = vmatmul.mubr.f32.gmra.mxu0 %v164
    %v385 = vpop.f32.mrf.mxu0
    %v386 = vadd.f32 %v252, %v385
    %v387 = vpop.f32.mrf.mxu0
    %388 = vmatprep.mubr.f32.mxu0 %v197
    %389 = vmatmul.mubr.f32.gmra.mxu0 %v165
    %v390 = vpop.f32.mrf.mxu0
    %v391 = vadd.f32 %v252, %v390
    %v392 = vpop.f32.mrf.mxu0
    %393 = vmatprep.mubr.f32.mxu0 %v198
    %394 = vmatmul.mubr.f32.gmra.mxu0 %v166
    %v395 = vpop.f32.mrf.mxu0
    %v396 = vadd.f32 %v252, %v395
    %v397 = vpop.f32.mrf.mxu0
    %398 = vmatprep.mubr.f32.mxu0 %v199
    %399 = vmatmul.mubr.f32.gmra.mxu0 %v167
    %v400 = vpop.f32.mrf.mxu0
    %v401 = vadd.f32 %v252, %v400
    %v402 = vpop.f32.mrf.mxu0
    %403 = vmatprep.mubr.f32.mxu0 %v200
    %404 = vmatmul.mubr.f32.gmra.mxu0 %v168
    %v405 = vpop.f32.mrf.mxu0
    %v406 = vadd.f32 %v252, %v405
    %v407 = vpop.f32.mrf.mxu0
    %408 = vmatprep.mubr.f32.mxu0 %v201
    %409 = vmatmul.mubr.f32.gmra.mxu0 %v169
    %v410 = vpop.f32.mrf.mxu0
    %v411 = vadd.f32 %v252, %v410
    %v412 = vpop.f32.mrf.mxu0
    %413 = vmatprep.mubr.f32.mxu0 %v202
    %414 = vmatmul.mubr.f32.gmra.mxu0 %v170
    %v415 = vpop.f32.mrf.mxu0
    %v416 = vadd.f32 %v252, %v415
    %v417 = vpop.f32.mrf.mxu0
    %418 = vmatprep.mubr.f32.mxu0 %v203
    %419 = vmatmul.mubr.f32.gmra.mxu0 %v171
    %v420 = vpop.f32.mrf.mxu0
    %v421 = vadd.f32 %v252, %v420
    %v422 = vpop.f32.mrf.mxu0
    %423 = vmatprep.mubr.f32.mxu0 %v204
    %424 = vmatmul.mubr.f32.gmra.mxu0 %v172
    %v425 = vpop.f32.mrf.mxu0
    %v426 = vadd.f32 %v252, %v425
    %v427 = vpop.f32.mrf.mxu0
    %428 = vmatprep.mubr.f32.mxu0 %v205
    %429 = vmatmul.mubr.f32.gmra.mxu0 %v173
    %v430 = vpop.f32.mrf.mxu0
    %v431 = vadd.f32 %v252, %v430
    %v432 = vpop.f32.mrf.mxu0
    %433 = vmatprep.mubr.f32.mxu0 %v206
    %434 = vmatmul.mubr.f32.gmra.mxu0 %v174
    %v435 = vpop.f32.mrf.mxu0
    %v436 = vadd.f32 %v252, %v435
    %v437 = vpop.f32.mrf.mxu0
    %438 = vmatprep.mubr.f32.mxu0 %v207
    %439 = vmatmul.mubr.f32.gmra.mxu0 %v175
    %v440 = vpop.f32.mrf.mxu0
    %v441 = vadd.f32 %v252, %v440
    %v442 = vpop.f32.mrf.mxu0
    %443 = vmatprep.mubr.f32.mxu0 %v208
    %444 = vmatmul.mubr.f32.gmra.mxu0 %v176
    %v445 = vpop.f32.mrf.mxu0
    %v446 = vadd.f32 %v252, %v445
    %v447 = vpop.f32.mrf.mxu0
    %448 = vmatprep.mubr.f32.mxu0 %v209
    %449 = vmatmul.mubr.f32.gmra.mxu0 %v177
    %v450 = vpop.f32.mrf.mxu0
    %v451 = vadd.f32 %v252, %v450
    %v452 = vpop.f32.mrf.mxu0
    %453 = vmatprep.mubr.f32.mxu0 %v210
    %454 = vmatmul.mubr.f32.gmra.mxu0 %v178
    %v455 = vpop.f32.mrf.mxu0
    %v456 = vadd.f32 %v252, %v455
    %v457 = vpop.f32.mrf.mxu0
    %458 = vmatprep.mubr.f32.mxu0 %v211
    %459 = vmatmul.mubr.f32.gmra.mxu0 %v179
    %v460 = vpop.f32.mrf.mxu0
    %v461 = vadd.f32 %v252, %v460
    %v462 = vpop.f32.mrf.mxu0
    %463 = vmatprep.mubr.f32.mxu0 %v212
    %464 = vmatmul.mubr.f32.gmra.mxu0 %v180
    %v465 = vpop.f32.mrf.mxu0
    %v466 = vadd.f32 %v252, %v465
    %v467 = vpop.f32.mrf.mxu0
    %468 = vmatprep.mubr.f32.mxu0 %v213
    %469 = vmatmul.mubr.f32.gmra.mxu0 %v181
    %v470 = vpop.f32.mrf.mxu0
    %v471 = vadd.f32 %v252, %v470
    %v472 = vpop.f32.mrf.mxu0
    %473 = vmatprep.mubr.f32.mxu0 %v214
    %474 = vmatmul.mubr.f32.gmra.mxu0 %v182
    %v475 = vpop.f32.mrf.mxu0
    %v476 = vadd.f32 %v252, %v475
    %v477 = vpop.f32.mrf.mxu0
    %478 = vdwg.mxu0
    %v479 = vmax.f32 %v321, 0.0
    %v480 = vmax.f32 %v326, 0.0
    %v481 = vmax.f32 %v331, 0.0
    %v482 = vmax.f32 %v336, 0.0
    %v483 = vmax.f32 %v341, 0.0
    %v484 = vmax.f32 %v346, 0.0
    %v485 = vmax.f32 %v351, 0.0
    %v486 = vmax.f32 %v356, 0.0
    %v487 = vmax.f32 %v361, 0.0
    %v488 = vmax.f32 %v366, 0.0
    %v489 = vmax.f32 %v371, 0.0
    %v490 = vmax.f32 %v376, 0.0
    %v491 = vmax.f32 %v381, 0.0
    %v492 = vmax.f32 %v386, 0.0
    %v493 = vmax.f32 %v391, 0.0
    %v494 = vmax.f32 %v396, 0.0
    %v495 = vmax.f32 %v401, 0.0
    %v496 = vmax.f32 %v406, 0.0
    %v497 = vmax.f32 %v411, 0.0
    %v498 = vmax.f32 %v416, 0.0
    %v499 = vmax.f32 %v421, 0.0
    %v500 = vmax.f32 %v426, 0.0
    %v501 = vmax.f32 %v431, 0.0
    %v502 = vmax.f32 %v436, 0.0
    %v503 = vmax.f32 %v441, 0.0
    %v504 = vmax.f32 %v446, 0.0
    %v505 = vmax.f32 %v451, 0.0
    %v506 = vmax.f32 %v456, 0.0
    %v507 = vmax.f32 %v461, 0.0
    %v508 = vmax.f32 %v466, 0.0
    %v509 = vmax.f32 %v471, 0.0
    %v510 = vmax.f32 %v476, 0.0
    %v511 = vld [vmem:[#allocation7] sm:$0xff]
    %v512 = vld [vmem:[#allocation7 + $0x8] sm:$0xff]
    %v513 = vld [vmem:[#allocation7 + $0x10] sm:$0xff]
    %v514 = vld [vmem:[#allocation7 + $0x18] sm:$0xff]
    %v515 = vld [vmem:[#allocation7 + $0x20] sm:$0xff]
    %v516 = vld [vmem:[#allocation7 + $0x28] sm:$0xff]
    %v517 = vld [vmem:[#allocation7 + $0x30] sm:$0xff]
    %v518 = vld [vmem:[#allocation7 + $0x38] sm:$0xff]
    %v519 = vld [vmem:[#allocation7 + $0x40] sm:$0xff]
    %v520 = vld [vmem:[#allocation7 + $0x48] sm:$0xff]
    %v521 = vld [vmem:[#allocation7 + $0x50] sm:$0xff]
    %v522 = vld [vmem:[#allocation7 + $0x58] sm:$0xff]
    %v523 = vld [vmem:[#allocation7 + $0x60] sm:$0xff]
    %v524 = vld [vmem:[#allocation7 + $0x68] sm:$0xff]
    %v525 = vld [vmem:[#allocation7 + $0x70] sm:$0xff]
    %v526 = vld [vmem:[#allocation7 + $0x78] sm:$0xff]
    %v527 = vld [vmem:[#allocation7 + $0x80] sm:$0xff]
    %v528 = vld [vmem:[#allocation7 + $0x88] sm:$0xff]
    %v529 = vld [vmem:[#allocation7 + $0x90] sm:$0xff]
    %v530 = vld [vmem:[#allocation7 + $0x98] sm:$0xff]
    %v531 = vld [vmem:[#allocation7 + $0xa0] sm:$0xff]
    %v532 = vld [vmem:[#allocation7 + $0xa8] sm:$0xff]
    %v533 = vld [vmem:[#allocation7 + $0xb0] sm:$0xff]
    %v534 = vld [vmem:[#allocation7 + $0xb8] sm:$0xff]
    %v535 = vld [vmem:[#allocation7 + $0xc0] sm:$0xff]
    %v536 = vld [vmem:[#allocation7 + $0xc8] sm:$0xff]
    %v537 = vld [vmem:[#allocation7 + $0xd0] sm:$0xff]
    %v538 = vld [vmem:[#allocation7 + $0xd8] sm:$0xff]
    %v539 = vld [vmem:[#allocation7 + $0xe0] sm:$0xff]
    %v540 = vld [vmem:[#allocation7 + $0xe8] sm:$0xff]
    %v541 = vld [vmem:[#allocation7 + $0xf0] sm:$0xff]
    %v542 = vld [vmem:[#allocation7 + $0xf8] sm:$0xff]
    %v543 = vld [vmem:[#allocation8] sm:$0xff]
    %v544 = vld [vmem:[#allocation8 + $0x8] sm:$0xff]
    %v545 = vld [vmem:[#allocation8 + $0x10] sm:$0xff]
    %v546 = vld [vmem:[#allocation8 + $0x18] sm:$0xff]
    %v547 = vld [vmem:[#allocation8 + $0x20] sm:$0xff]
    %v548 = vld [vmem:[#allocation8 + $0x28] sm:$0xff]
    %v549 = vld [vmem:[#allocation8 + $0x30] sm:$0xff]
    %v550 = vld [vmem:[#allocation8 + $0x38] sm:$0xff]
    %v551 = vld [vmem:[#allocation8 + $0x40] sm:$0xff]
    %v552 = vld [vmem:[#allocation8 + $0x48] sm:$0xff]
    %v553 = vld [vmem:[#allocation8 + $0x50] sm:$0xff]
    %v554 = vld [vmem:[#allocation8 + $0x58] sm:$0xff]
    %v555 = vld [vmem:[#allocation8 + $0x60] sm:$0xff]
    %v556 = vld [vmem:[#allocation8 + $0x68] sm:$0xff]
    %v557 = vld [vmem:[#allocation8 + $0x70] sm:$0xff]
    %v558 = vld [vmem:[#allocation8 + $0x78] sm:$0xff]
    %v559 = vld [vmem:[#allocation8 + $0x80] sm:$0xff]
    %v560 = vld [vmem:[#allocation8 + $0x88] sm:$0xff]
    %v561 = vld [vmem:[#allocation8 + $0x90] sm:$0xff]
    %v562 = vld [vmem:[#allocation8 + $0x98] sm:$0xff]
    %v563 = vld [vmem:[#allocation8 + $0xa0] sm:$0xff]
    %v564 = vld [vmem:[#allocation8 + $0xa8] sm:$0xff]
    %v565 = vld [vmem:[#allocation8 + $0xb0] sm:$0xff]
    %v566 = vld [vmem:[#allocation8 + $0xb8] sm:$0xff]
    %v567 = vld [vmem:[#allocation8 + $0xc0] sm:$0xff]
    %v568 = vld [vmem:[#allocation8 + $0xc8] sm:$0xff]
    %v569 = vld [vmem:[#allocation8 + $0xd0] sm:$0xff]
    %v570 = vld [vmem:[#allocation8 + $0xd8] sm:$0xff]
    %v571 = vld [vmem:[#allocation8 + $0xe0] sm:$0xff]
    %v572 = vld [vmem:[#allocation8 + $0xe8] sm:$0xff]
    %v573 = vld [vmem:[#allocation8 + $0xf0] sm:$0xff]
    %v574 = vld [vmem:[#allocation8 + $0xf8] sm:$0xff]
    %v575 = vld [vmem:[#allocation13] sm:$0xff]
    %v576 = vld [vmem:[#allocation13 + $0x8] sm:$0xff]
    %v577 = vld [vmem:[#allocation13 + $0x10] sm:$0xff]
    %v578 = vld [vmem:[#allocation13 + $0x18] sm:$0xff]
    %v579 = vld [vmem:[#allocation13 + $0x20] sm:$0xff]
    %v580 = vld [vmem:[#allocation13 + $0x28] sm:$0xff]
    %v581 = vld [vmem:[#allocation13 + $0x30] sm:$0xff]
    %v582 = vld [vmem:[#allocation13 + $0x38] sm:$0xff]
    %v583 = vld [vmem:[#allocation13 + $0x40] sm:$0xff]
    %v584 = vld [vmem:[#allocation13 + $0x48] sm:$0xff]
    %v585 = vld [vmem:[#allocation13 + $0x50] sm:$0xff]
    %v586 = vld [vmem:[#allocation13 + $0x58] sm:$0xff]
    %v587 = vld [vmem:[#allocation13 + $0x60] sm:$0xff]
    %v588 = vld [vmem:[#allocation13 + $0x68] sm:$0xff]
    %v589 = vld [vmem:[#allocation13 + $0x70] sm:$0xff]
    %v590 = vld [vmem:[#allocation13 + $0x78] sm:$0xff]
    %v591 = vld [vmem:[#allocation13 + $0x80] sm:$0xff]
    %v592 = vld [vmem:[#allocation13 + $0x88] sm:$0xff]
    %v593 = vld [vmem:[#allocation13 + $0x90] sm:$0xff]
    %v594 = vld [vmem:[#allocation13 + $0x98] sm:$0xff]
    %v595 = vld [vmem:[#allocation13 + $0xa0] sm:$0xff]
    %v596 = vld [vmem:[#allocation13 + $0xa8] sm:$0xff]
    %v597 = vld [vmem:[#allocation13 + $0xb0] sm:$0xff]
    %v598 = vld [vmem:[#allocation13 + $0xb8] sm:$0xff]
    %v599 = vld [vmem:[#allocation13 + $0xc0] sm:$0xff]
    %v600 = vld [vmem:[#allocation13 + $0xc8] sm:$0xff]
    %v601 = vld [vmem:[#allocation13 + $0xd0] sm:$0xff]
    %v602 = vld [vmem:[#allocation13 + $0xd8] sm:$0xff]
    %v603 = vld [vmem:[#allocation13 + $0xe0] sm:$0xff]
    %v604 = vld [vmem:[#allocation13 + $0xe8] sm:$0xff]
    %v605 = vld [vmem:[#allocation13 + $0xf0] sm:$0xff]
    %v606 = vld [vmem:[#allocation13 + $0xf8] sm:$0xff]
    %v607 = vld [vmem:[%s8] sm:$0x1]
    %v609 = vlaneseq
    %v610 = vshrl.u32 %v609, 7
    %v611 = vsub.s32 0, %v610
    %v612 = vrot.slane %v607, %v611
    %614 = vmatprep.subr.mxu0 0.0
    %615 = vmatpush1.msra.mxu0 %v590
    %616 = vmatprep.subr.mxu0 0.0
    %617 = vmatpush1.msra.mxu0 %v589
    %618 = vmatprep.subr.mxu0 0.0
    %619 = vmatpush1.msra.mxu0 %v588
    %620 = vmatprep.subr.mxu0 0.0
    %621 = vmatpush1.msra.mxu0 %v587
    %622 = vmatprep.subr.mxu0 0.0
    %623 = vmatpush1.msra.mxu0 %v586
    %624 = vmatprep.subr.mxu0 0.0
    %625 = vmatpush1.msra.mxu0 %v585
    %626 = vmatprep.subr.mxu0 0.0
    %627 = vmatpush1.msra.mxu0 %v584
    %628 = vmatprep.subr.mxu0 0.0
    %629 = vmatpush1.msra.mxu0 %v583
    %630 = vmatprep.subr.mxu0 0.0
    %631 = vmatpush1.msra.mxu0 %v582
    %632 = vmatprep.subr.mxu0 0.0
    %633 = vmatpush1.msra.mxu0 %v581
    %634 = vmatprep.subr.mxu0 0.0
    %635 = vmatpush1.msra.mxu0 %v580
    %636 = vmatprep.subr.mxu0 0.0
    %637 = vmatpush1.msra.mxu0 %v579
    %638 = vmatprep.subr.mxu0 0.0
    %639 = vmatpush1.msra.mxu0 %v578
    %640 = vmatprep.subr.mxu0 0.0
    %641 = vmatpush1.msra.mxu0 %v577
    %642 = vmatprep.subr.mxu0 0.0
    %643 = vmatpush1.msra.mxu0 %v576
    %644 = vmatprep.subr.mxu0 0.0
    %645 = vmatpush1.msra.mxu0 %v575
    %646 = vmatprep.subr.mxu0 0.0
    %647 = vmatpush2.msra.mxu0 %v606
    %648 = vmatprep.subr.mxu0 0.0
    %649 = vmatpush2.msra.mxu0 %v605
    %650 = vmatprep.subr.mxu0 0.0
    %651 = vmatpush2.msra.mxu0 %v604
    %652 = vmatprep.subr.mxu0 0.0
    %653 = vmatpush2.msra.mxu0 %v603
    %654 = vmatprep.subr.mxu0 0.0
    %655 = vmatpush2.msra.mxu0 %v602
    %656 = vmatprep.subr.mxu0 0.0
    %657 = vmatpush2.msra.mxu0 %v601
    %658 = vmatprep.subr.mxu0 0.0
    %659 = vmatpush2.msra.mxu0 %v600
    %660 = vmatprep.subr.mxu0 0.0
    %661 = vmatpush2.msra.mxu0 %v599
    %662 = vmatprep.subr.mxu0 0.0
    %663 = vmatpush2.msra.mxu0 %v598
    %664 = vmatprep.subr.mxu0 0.0
    %665 = vmatpush2.msra.mxu0 %v597
    %666 = vmatprep.subr.mxu0 0.0
    %667 = vmatpush2.msra.mxu0 %v596
    %668 = vmatprep.subr.mxu0 0.0
    %669 = vmatpush2.msra.mxu0 %v595
    %670 = vmatprep.subr.mxu0 0.0
    %671 = vmatpush2.msra.mxu0 %v594
    %672 = vmatprep.subr.mxu0 0.0
    %673 = vmatpush2.msra.mxu0 %v593
    %674 = vmatprep.subr.mxu0 0.0
    %675 = vmatpush2.msra.mxu0 %v592
    %676 = vmatprep.subr.mxu0 0.0
    %677 = vmatpush2.msra.mxu0 %v591
    %678 = vmatprep.mubr.f32.mxu0 %v543
    %679 = vmatmul.mubr.f32.gmra.mxu0 %v511
    %v680 = vpop.f32.mrf.mxu0
    %v681 = vadd.f32 %v612, %v680
    %v682 = vpop.f32.mrf.mxu0
    %683 = vmatprep.mubr.f32.mxu0 %v544
    %684 = vmatmul.mubr.f32.gmra.mxu0 %v512
    %v685 = vpop.f32.mrf.mxu0
    %v686 = vadd.f32 %v612, %v685
    %v687 = vpop.f32.mrf.mxu0
    %688 = vmatprep.mubr.f32.mxu0 %v545
    %689 = vmatmul.mubr.f32.gmra.mxu0 %v513
    %v690 = vpop.f32.mrf.mxu0
    %v691 = vadd.f32 %v612, %v690
    %v692 = vpop.f32.mrf.mxu0
    %693 = vmatprep.mubr.f32.mxu0 %v546
    %694 = vmatmul.mubr.f32.gmra.mxu0 %v514
    %v695 = vpop.f32.mrf.mxu0
    %v696 = vadd.f32 %v612, %v695
    %v697 = vpop.f32.mrf.mxu0
    %698 = vmatprep.mubr.f32.mxu0 %v547
    %699 = vmatmul.mubr.f32.gmra.mxu0 %v515
    %v700 = vpop.f32.mrf.mxu0
    %v701 = vadd.f32 %v612, %v700
    %v702 = vpop.f32.mrf.mxu0
    %703 = vmatprep.mubr.f32.mxu0 %v548
    %704 = vmatmul.mubr.f32.gmra.mxu0 %v516
    %v705 = vpop.f32.mrf.mxu0
    %v706 = vadd.f32 %v612, %v705
    %v707 = vpop.f32.mrf.mxu0
    %708 = vmatprep.mubr.f32.mxu0 %v549
    %709 = vmatmul.mubr.f32.gmra.mxu0 %v517
    %v710 = vpop.f32.mrf.mxu0
    %v711 = vadd.f32 %v612, %v710
    %v712 = vpop.f32.mrf.mxu0
    %713 = vmatprep.mubr.f32.mxu0 %v550
    %714 = vmatmul.mubr.f32.gmra.mxu0 %v518
    %v715 = vpop.f32.mrf.mxu0
    %v716 = vadd.f32 %v612, %v715
    %v717 = vpop.f32.mrf.mxu0
    %718 = vmatprep.mubr.f32.mxu0 %v551
    %719 = vmatmul.mubr.f32.gmra.mxu0 %v519
    %v720 = vpop.f32.mrf.mxu0
    %v721 = vadd.f32 %v612, %v720
    %v722 = vpop.f32.mrf.mxu0
    %723 = vmatprep.mubr.f32.mxu0 %v552
    %724 = vmatmul.mubr.f32.gmra.mxu0 %v520
    %v725 = vpop.f32.mrf.mxu0
    %v726 = vadd.f32 %v612, %v725
    %v727 = vpop.f32.mrf.mxu0
    %728 = vmatprep.mubr.f32.mxu0 %v553
    %729 = vmatmul.mubr.f32.gmra.mxu0 %v521
    %v730 = vpop.f32.mrf.mxu0
    %v731 = vadd.f32 %v612, %v730
    %v732 = vpop.f32.mrf.mxu0
    %733 = vmatprep.mubr.f32.mxu0 %v554
    %734 = vmatmul.mubr.f32.gmra.mxu0 %v522
    %v735 = vpop.f32.mrf.mxu0
    %v736 = vadd.f32 %v612, %v735
    %v737 = vpop.f32.mrf.mxu0
    %738 = vmatprep.mubr.f32.mxu0 %v555
    %739 = vmatmul.mubr.f32.gmra.mxu0 %v523
    %v740 = vpop.f32.mrf.mxu0
    %v741 = vadd.f32 %v612, %v740
    %v742 = vpop.f32.mrf.mxu0
    %743 = vmatprep.mubr.f32.mxu0 %v556
    %744 = vmatmul.mubr.f32.gmra.mxu0 %v524
    %v745 = vpop.f32.mrf.mxu0
    %v746 = vadd.f32 %v612, %v745
    %v747 = vpop.f32.mrf.mxu0
    %748 = vmatprep.mubr.f32.mxu0 %v557
    %749 = vmatmul.mubr.f32.gmra.mxu0 %v525
    %v750 = vpop.f32.mrf.mxu0
    %v751 = vadd.f32 %v612, %v750
    %v752 = vpop.f32.mrf.mxu0
    %753 = vmatprep.mubr.f32.mxu0 %v558
    %754 = vmatmul.mubr.f32.gmra.mxu0 %v526
    %v755 = vpop.f32.mrf.mxu0
    %v756 = vadd.f32 %v612, %v755
    %v757 = vpop.f32.mrf.mxu0
    %758 = vmatprep.mubr.f32.mxu0 %v559
    %759 = vmatmul.mubr.f32.gmra.mxu0 %v527
    %v760 = vpop.f32.mrf.mxu0
    %v761 = vadd.f32 %v612, %v760
    %v762 = vpop.f32.mrf.mxu0
    %763 = vmatprep.mubr.f32.mxu0 %v560
    %764 = vmatmul.mubr.f32.gmra.mxu0 %v528
    %v765 = vpop.f32.mrf.mxu0
    %v766 = vadd.f32 %v612, %v765
    %v767 = vpop.f32.mrf.mxu0
    %768 = vmatprep.mubr.f32.mxu0 %v561
    %769 = vmatmul.mubr.f32.gmra.mxu0 %v529
    %v770 = vpop.f32.mrf.mxu0
    %v771 = vadd.f32 %v612, %v770
    %v772 = vpop.f32.mrf.mxu0
    %773 = vmatprep.mubr.f32.mxu0 %v562
    %774 = vmatmul.mubr.f32.gmra.mxu0 %v530
    %v775 = vpop.f32.mrf.mxu0
    %v776 = vadd.f32 %v612, %v775
    %v777 = vpop.f32.mrf.mxu0
    %778 = vmatprep.mubr.f32.mxu0 %v563
    %779 = vmatmul.mubr.f32.gmra.mxu0 %v531
    %v780 = vpop.f32.mrf.mxu0
    %v781 = vadd.f32 %v612, %v780
    %v782 = vpop.f32.mrf.mxu0
    %783 = vmatprep.mubr.f32.mxu0 %v564
    %784 = vmatmul.mubr.f32.gmra.mxu0 %v532
    %v785 = vpop.f32.mrf.mxu0
    %v786 = vadd.f32 %v612, %v785
    %v787 = vpop.f32.mrf.mxu0
    %788 = vmatprep.mubr.f32.mxu0 %v565
    %789 = vmatmul.mubr.f32.gmra.mxu0 %v533
    %v790 = vpop.f32.mrf.mxu0
    %v791 = vadd.f32 %v612, %v790
    %v792 = vpop.f32.mrf.mxu0
    %793 = vmatprep.mubr.f32.mxu0 %v566
    %794 = vmatmul.mubr.f32.gmra.mxu0 %v534
    %v795 = vpop.f32.mrf.mxu0
    %v796 = vadd.f32 %v612, %v795
    %v797 = vpop.f32.mrf.mxu0
    %798 = vmatprep.mubr.f32.mxu0 %v567
    %799 = vmatmul.mubr.f32.gmra.mxu0 %v535
    %v800 = vpop.f32.mrf.mxu0
    %v801 = vadd.f32 %v612, %v800
    %v802 = vpop.f32.mrf.mxu0
    %803 = vmatprep.mubr.f32.mxu0 %v568
    %804 = vmatmul.mubr.f32.gmra.mxu0 %v536
    %v805 = vpop.f32.mrf.mxu0
    %v806 = vadd.f32 %v612, %v805
    %v807 = vpop.f32.mrf.mxu0
    %808 = vmatprep.mubr.f32.mxu0 %v569
    %809 = vmatmul.mubr.f32.gmra.mxu0 %v537
    %v810 = vpop.f32.mrf.mxu0
    %v811 = vadd.f32 %v612, %v810
    %v812 = vpop.f32.mrf.mxu0
    %813 = vmatprep.mubr.f32.mxu0 %v570
    %814 = vmatmul.mubr.f32.gmra.mxu0 %v538
    %v815 = vpop.f32.mrf.mxu0
    %v816 = vadd.f32 %v612, %v815
    %v817 = vpop.f32.mrf.mxu0
    %818 = vmatprep.mubr.f32.mxu0 %v571
    %819 = vmatmul.mubr.f32.gmra.mxu0 %v539
    %v820 = vpop.f32.mrf.mxu0
    %v821 = vadd.f32 %v612, %v820
    %v822 = vpop.f32.mrf.mxu0
    %823 = vmatprep.mubr.f32.mxu0 %v572
    %824 = vmatmul.mubr.f32.gmra.mxu0 %v540
    %v825 = vpop.f32.mrf.mxu0
    %v826 = vadd.f32 %v612, %v825
    %v827 = vpop.f32.mrf.mxu0
    %828 = vmatprep.mubr.f32.mxu0 %v573
    %829 = vmatmul.mubr.f32.gmra.mxu0 %v541
    %v830 = vpop.f32.mrf.mxu0
    %v831 = vadd.f32 %v612, %v830
    %v832 = vpop.f32.mrf.mxu0
    %833 = vmatprep.mubr.f32.mxu0 %v574
    %834 = vmatmul.mubr.f32.gmra.mxu0 %v542
    %v835 = vpop.f32.mrf.mxu0
    %v836 = vadd.f32 %v612, %v835
    %v837 = vpop.f32.mrf.mxu0
    %838 = vdwg.mxu0
    %v839 = vmax.f32 %v681, 0.0
    %v840 = vmax.f32 %v686, 0.0
    %v841 = vmax.f32 %v691, 0.0
    %v842 = vmax.f32 %v696, 0.0
    %v843 = vmax.f32 %v701, 0.0
    %v844 = vmax.f32 %v706, 0.0
    %v845 = vmax.f32 %v711, 0.0
    %v846 = vmax.f32 %v716, 0.0
    %v847 = vmax.f32 %v721, 0.0
    %v848 = vmax.f32 %v726, 0.0
    %v849 = vmax.f32 %v731, 0.0
    %v850 = vmax.f32 %v736, 0.0
    %v851 = vmax.f32 %v741, 0.0
    %v852 = vmax.f32 %v746, 0.0
    %v853 = vmax.f32 %v751, 0.0
    %v854 = vmax.f32 %v756, 0.0
    %v855 = vmax.f32 %v761, 0.0
    %v856 = vmax.f32 %v766, 0.0
    %v857 = vmax.f32 %v771, 0.0
    %v858 = vmax.f32 %v776, 0.0
    %v859 = vmax.f32 %v781, 0.0
    %v860 = vmax.f32 %v786, 0.0
    %v861 = vmax.f32 %v791, 0.0
    %v862 = vmax.f32 %v796, 0.0
    %v863 = vmax.f32 %v801, 0.0
    %v864 = vmax.f32 %v806, 0.0
    %v865 = vmax.f32 %v811, 0.0
    %v866 = vmax.f32 %v816, 0.0
    %v867 = vmax.f32 %v821, 0.0
    %v868 = vmax.f32 %v826, 0.0
    %v869 = vmax.f32 %v831, 0.0
    %v870 = vmax.f32 %v836, 0.0
    %v871 = vld [vmem:[#allocation10] sm:$0x1]
    %v872 = vld [vmem:[#allocation10 + $0x1] sm:$0x1]
    %v873 = vld [vmem:[#allocation10 + $0x2] sm:$0x1]
    %v874 = vld [vmem:[#allocation10 + $0x3] sm:$0x1]
    %v875 = vld [vmem:[#allocation10 + $0x4] sm:$0x1]
    %v876 = vld [vmem:[#allocation10 + $0x5] sm:$0x1]
    %v877 = vld [vmem:[#allocation10 + $0x6] sm:$0x1]
    %v878 = vld [vmem:[#allocation10 + $0x7] sm:$0x1]
    %v879 = vld [vmem:[#allocation10 + $0x8] sm:$0x1]
    %v880 = vld [vmem:[#allocation10 + $0x9] sm:$0x1]
    %v881 = vld [vmem:[#allocation10 + $0xa] sm:$0x1]
    %v882 = vld [vmem:[#allocation10 + $0xb] sm:$0x1]
    %v883 = vld [vmem:[#allocation10 + $0xc] sm:$0x1]
    %v884 = vld [vmem:[#allocation10 + $0xd] sm:$0x1]
    %v885 = vld [vmem:[#allocation10 + $0xe] sm:$0x1]
    %v886 = vld [vmem:[#allocation10 + $0xf] sm:$0x1]
    %v887 = vld [vmem:[#allocation10 + $0x10] sm:$0x1]
    %v888 = vld [vmem:[#allocation10 + $0x11] sm:$0x1]
    %v889 = vld [vmem:[#allocation10 + $0x12] sm:$0x1]
    %v890 = vld [vmem:[#allocation10 + $0x13] sm:$0x1]
    %v891 = vld [vmem:[#allocation10 + $0x14] sm:$0x1]
    %v892 = vld [vmem:[#allocation10 + $0x15] sm:$0x1]
    %v893 = vld [vmem:[#allocation10 + $0x16] sm:$0x1]
    %v894 = vld [vmem:[#allocation10 + $0x17] sm:$0x1]
    %v895 = vld [vmem:[#allocation10 + $0x18] sm:$0x1]
    %v896 = vld [vmem:[#allocation10 + $0x19] sm:$0x1]
    %v897 = vld [vmem:[#allocation10 + $0x1a] sm:$0x1]
    %v898 = vld [vmem:[#allocation10 + $0x1b] sm:$0x1]
    %v899 = vld [vmem:[#allocation10 + $0x1c] sm:$0x1]
    %v900 = vld [vmem:[#allocation10 + $0x1d] sm:$0x1]
    %v901 = vld [vmem:[#allocation10 + $0x1e] sm:$0x1]
    %v902 = vld [vmem:[#allocation10 + $0x1f] sm:$0x1]
    %v903 = vld [vmem:[#allocation10 + $0x20] sm:$0x1]
    %v904 = vld [vmem:[#allocation10 + $0x21] sm:$0x1]
    %v905 = vld [vmem:[#allocation10 + $0x22] sm:$0x1]
    %v906 = vld [vmem:[#allocation10 + $0x23] sm:$0x1]
    %v907 = vld [vmem:[#allocation10 + $0x24] sm:$0x1]
    %v908 = vld [vmem:[#allocation10 + $0x25] sm:$0x1]
    %v909 = vld [vmem:[#allocation10 + $0x26] sm:$0x1]
    %v910 = vld [vmem:[#allocation10 + $0x27] sm:$0x1]
    %v911 = vld [vmem:[#allocation10 + $0x28] sm:$0x1]
    %v912 = vld [vmem:[#allocation10 + $0x29] sm:$0x1]
    %v913 = vld [vmem:[#allocation10 + $0x2a] sm:$0x1]
    %v914 = vld [vmem:[#allocation10 + $0x2b] sm:$0x1]
    %v915 = vld [vmem:[#allocation10 + $0x2c] sm:$0x1]
    %v916 = vld [vmem:[#allocation10 + $0x2d] sm:$0x1]
    %v917 = vld [vmem:[#allocation10 + $0x2e] sm:$0x1]
    %v918 = vld [vmem:[#allocation10 + $0x2f] sm:$0x1]
    %v919 = vld [vmem:[#allocation10 + $0x30] sm:$0x1]
    %v920 = vld [vmem:[#allocation10 + $0x31] sm:$0x1]
    %v921 = vld [vmem:[#allocation10 + $0x32] sm:$0x1]
    %v922 = vld [vmem:[#allocation10 + $0x33] sm:$0x1]
    %v923 = vld [vmem:[#allocation10 + $0x34] sm:$0x1]
    %v924 = vld [vmem:[#allocation10 + $0x35] sm:$0x1]
    %v925 = vld [vmem:[#allocation10 + $0x36] sm:$0x1]
    %v926 = vld [vmem:[#allocation10 + $0x37] sm:$0x1]
    %v927 = vld [vmem:[#allocation10 + $0x38] sm:$0x1]
    %v928 = vld [vmem:[#allocation10 + $0x39] sm:$0x1]
    %v929 = vld [vmem:[#allocation10 + $0x3a] sm:$0x1]
    %v930 = vld [vmem:[#allocation10 + $0x3b] sm:$0x1]
    %v931 = vld [vmem:[#allocation10 + $0x3c] sm:$0x1]
    %v932 = vld [vmem:[#allocation10 + $0x3d] sm:$0x1]
    %v933 = vld [vmem:[#allocation10 + $0x3e] sm:$0x1]
    %v934 = vld [vmem:[#allocation10 + $0x3f] sm:$0x1]
    %v935 = vld [vmem:[#allocation10 + $0x40] sm:$0x1]
    %v936 = vld [vmem:[#allocation10 + $0x41] sm:$0x1]
    %v937 = vld [vmem:[#allocation10 + $0x42] sm:$0x1]
    %v938 = vld [vmem:[#allocation10 + $0x43] sm:$0x1]
    %v939 = vld [vmem:[#allocation10 + $0x44] sm:$0x1]
    %v940 = vld [vmem:[#allocation10 + $0x45] sm:$0x1]
    %v941 = vld [vmem:[#allocation10 + $0x46] sm:$0x1]
    %v942 = vld [vmem:[#allocation10 + $0x47] sm:$0x1]
    %v943 = vld [vmem:[#allocation10 + $0x48] sm:$0x1]
    %v944 = vld [vmem:[#allocation10 + $0x49] sm:$0x1]
    %v945 = vld [vmem:[#allocation10 + $0x4a] sm:$0x1]
    %v946 = vld [vmem:[#allocation10 + $0x4b] sm:$0x1]
    %v947 = vld [vmem:[#allocation10 + $0x4c] sm:$0x1]
    %v948 = vld [vmem:[#allocation10 + $0x4d] sm:$0x1]
    %v949 = vld [vmem:[#allocation10 + $0x4e] sm:$0x1]
    %v950 = vld [vmem:[#allocation10 + $0x4f] sm:$0x1]
    %v951 = vld [vmem:[#allocation10 + $0x50] sm:$0x1]
    %v952 = vld [vmem:[#allocation10 + $0x51] sm:$0x1]
    %v953 = vld [vmem:[#allocation10 + $0x52] sm:$0x1]
    %v954 = vld [vmem:[#allocation10 + $0x53] sm:$0x1]
    %v955 = vld [vmem:[#allocation10 + $0x54] sm:$0x1]
    %v956 = vld [vmem:[#allocation10 + $0x55] sm:$0x1]
    %v957 = vld [vmem:[#allocation10 + $0x56] sm:$0x1]
    %v958 = vld [vmem:[#allocation10 + $0x57] sm:$0x1]
    %v959 = vld [vmem:[#allocation10 + $0x58] sm:$0x1]
    %v960 = vld [vmem:[#allocation10 + $0x59] sm:$0x1]
    %v961 = vld [vmem:[#allocation10 + $0x5a] sm:$0x1]
    %v962 = vld [vmem:[#allocation10 + $0x5b] sm:$0x1]
    %v963 = vld [vmem:[#allocation10 + $0x5c] sm:$0x1]
    %v964 = vld [vmem:[#allocation10 + $0x5d] sm:$0x1]
    %v965 = vld [vmem:[#allocation10 + $0x5e] sm:$0x1]
    %v966 = vld [vmem:[#allocation10 + $0x5f] sm:$0x1]
    %v967 = vld [vmem:[#allocation10 + $0x60] sm:$0x1]
    %v968 = vld [vmem:[#allocation10 + $0x61] sm:$0x1]
    %v969 = vld [vmem:[#allocation10 + $0x62] sm:$0x1]
    %v970 = vld [vmem:[#allocation10 + $0x63] sm:$0x1]
    %v971 = vld [vmem:[#allocation10 + $0x64] sm:$0x1]
    %v972 = vld [vmem:[#allocation10 + $0x65] sm:$0x1]
    %v973 = vld [vmem:[#allocation10 + $0x66] sm:$0x1]
    %v974 = vld [vmem:[#allocation10 + $0x67] sm:$0x1]
    %v975 = vld [vmem:[#allocation10 + $0x68] sm:$0x1]
    %v976 = vld [vmem:[#allocation10 + $0x69] sm:$0x1]
    %v977 = vld [vmem:[#allocation10 + $0x6a] sm:$0x1]
    %v978 = vld [vmem:[#allocation10 + $0x6b] sm:$0x1]
    %v979 = vld [vmem:[#allocation10 + $0x6c] sm:$0x1]
    %v980 = vld [vmem:[#allocation10 + $0x6d] sm:$0x1]
    %v981 = vld [vmem:[#allocation10 + $0x6e] sm:$0x1]
    %v982 = vld [vmem:[#allocation10 + $0x6f] sm:$0x1]
    %v983 = vld [vmem:[#allocation10 + $0x70] sm:$0x1]
    %v984 = vld [vmem:[#allocation10 + $0x71] sm:$0x1]
    %v985 = vld [vmem:[#allocation10 + $0x72] sm:$0x1]
    %v986 = vld [vmem:[#allocation10 + $0x73] sm:$0x1]
    %v987 = vld [vmem:[#allocation10 + $0x74] sm:$0x1]
    %v988 = vld [vmem:[#allocation10 + $0x75] sm:$0x1]
    %v989 = vld [vmem:[#allocation10 + $0x76] sm:$0x1]
    %v990 = vld [vmem:[#allocation10 + $0x77] sm:$0x1]
    %v991 = vld [vmem:[#allocation10 + $0x78] sm:$0x1]
    %v992 = vld [vmem:[#allocation10 + $0x79] sm:$0x1]
    %v993 = vld [vmem:[#allocation10 + $0x7a] sm:$0x1]
    %v994 = vld [vmem:[#allocation10 + $0x7b] sm:$0x1]
    %v995 = vld [vmem:[#allocation10 + $0x7c] sm:$0x1]
    %v996 = vld [vmem:[#allocation10 + $0x7d] sm:$0x1]
    %v997 = vld [vmem:[#allocation10 + $0x7e] sm:$0x1]
    %v998 = vld [vmem:[#allocation10 + $0x7f] sm:$0x1]
    %v999 = vld [vmem:[#allocation10 + $0x80] sm:$0x1]
    %v1000 = vld [vmem:[#allocation10 + $0x81] sm:$0x1]
    %v1001 = vld [vmem:[#allocation10 + $0x82] sm:$0x1]
    %v1002 = vld [vmem:[#allocation10 + $0x83] sm:$0x1]
    %v1003 = vld [vmem:[#allocation10 + $0x84] sm:$0x1]
    %v1004 = vld [vmem:[#allocation10 + $0x85] sm:$0x1]
    %v1005 = vld [vmem:[#allocation10 + $0x86] sm:$0x1]
    %v1006 = vld [vmem:[#allocation10 + $0x87] sm:$0x1]
    %v1007 = vld [vmem:[#allocation10 + $0x88] sm:$0x1]
    %v1008 = vld [vmem:[#allocation10 + $0x89] sm:$0x1]
    %v1009 = vld [vmem:[#allocation10 + $0x8a] sm:$0x1]
    %v1010 = vld [vmem:[#allocation10 + $0x8b] sm:$0x1]
    %v1011 = vld [vmem:[#allocation10 + $0x8c] sm:$0x1]
    %v1012 = vld [vmem:[#allocation10 + $0x8d] sm:$0x1]
    %v1013 = vld [vmem:[#allocation10 + $0x8e] sm:$0x1]
    %v1014 = vld [vmem:[#allocation10 + $0x8f] sm:$0x1]
    %v1015 = vld [vmem:[#allocation10 + $0x90] sm:$0x1]
    %v1016 = vld [vmem:[#allocation10 + $0x91] sm:$0x1]
    %v1017 = vld [vmem:[#allocation10 + $0x92] sm:$0x1]
    %v1018 = vld [vmem:[#allocation10 + $0x93] sm:$0x1]
    %v1019 = vld [vmem:[#allocation10 + $0x94] sm:$0x1]
    %v1020 = vld [vmem:[#allocation10 + $0x95] sm:$0x1]
    %v1021 = vld [vmem:[#allocation10 + $0x96] sm:$0x1]
    %v1022 = vld [vmem:[#allocation10 + $0x97] sm:$0x1]
    %v1023 = vld [vmem:[#allocation10 + $0x98] sm:$0x1]
    %v1024 = vld [vmem:[#allocation10 + $0x99] sm:$0x1]
    %v1025 = vld [vmem:[#allocation10 + $0x9a] sm:$0x1]
    %v1026 = vld [vmem:[#allocation10 + $0x9b] sm:$0x1]
    %v1027 = vld [vmem:[#allocation10 + $0x9c] sm:$0x1]
    %v1028 = vld [vmem:[#allocation10 + $0x9d] sm:$0x1]
    %v1029 = vld [vmem:[#allocation10 + $0x9e] sm:$0x1]
    %v1030 = vld [vmem:[#allocation10 + $0x9f] sm:$0x1]
    %v1031 = vld [vmem:[#allocation10 + $0xa0] sm:$0x1]
    %v1032 = vld [vmem:[#allocation10 + $0xa1] sm:$0x1]
    %v1033 = vld [vmem:[#allocation10 + $0xa2] sm:$0x1]
    %v1034 = vld [vmem:[#allocation10 + $0xa3] sm:$0x1]
    %v1035 = vld [vmem:[#allocation10 + $0xa4] sm:$0x1]
    %v1036 = vld [vmem:[#allocation10 + $0xa5] sm:$0x1]
    %v1037 = vld [vmem:[#allocation10 + $0xa6] sm:$0x1]
    %v1038 = vld [vmem:[#allocation10 + $0xa7] sm:$0x1]
    %v1039 = vld [vmem:[#allocation10 + $0xa8] sm:$0x1]
    %v1040 = vld [vmem:[#allocation10 + $0xa9] sm:$0x1]
    %v1041 = vld [vmem:[#allocation10 + $0xaa] sm:$0x1]
    %v1042 = vld [vmem:[#allocation10 + $0xab] sm:$0x1]
    %v1043 = vld [vmem:[#allocation10 + $0xac] sm:$0x1]
    %v1044 = vld [vmem:[#allocation10 + $0xad] sm:$0x1]
    %v1045 = vld [vmem:[#allocation10 + $0xae] sm:$0x1]
    %v1046 = vld [vmem:[#allocation10 + $0xaf] sm:$0x1]
    %v1047 = vld [vmem:[#allocation10 + $0xb0] sm:$0x1]
    %v1048 = vld [vmem:[#allocation10 + $0xb1] sm:$0x1]
    %v1049 = vld [vmem:[#allocation10 + $0xb2] sm:$0x1]
    %v1050 = vld [vmem:[#allocation10 + $0xb3] sm:$0x1]
    %v1051 = vld [vmem:[#allocation10 + $0xb4] sm:$0x1]
    %v1052 = vld [vmem:[#allocation10 + $0xb5] sm:$0x1]
    %v1053 = vld [vmem:[#allocation10 + $0xb6] sm:$0x1]
    %v1054 = vld [vmem:[#allocation10 + $0xb7] sm:$0x1]
    %v1055 = vld [vmem:[#allocation10 + $0xb8] sm:$0x1]
    %v1056 = vld [vmem:[#allocation10 + $0xb9] sm:$0x1]
    %v1057 = vld [vmem:[#allocation10 + $0xba] sm:$0x1]
    %v1058 = vld [vmem:[#allocation10 + $0xbb] sm:$0x1]
    %v1059 = vld [vmem:[#allocation10 + $0xbc] sm:$0x1]
    %v1060 = vld [vmem:[#allocation10 + $0xbd] sm:$0x1]
    %v1061 = vld [vmem:[#allocation10 + $0xbe] sm:$0x1]
    %v1062 = vld [vmem:[#allocation10 + $0xbf] sm:$0x1]
    %v1063 = vld [vmem:[#allocation10 + $0xc0] sm:$0x1]
    %v1064 = vld [vmem:[#allocation10 + $0xc1] sm:$0x1]
    %v1065 = vld [vmem:[#allocation10 + $0xc2] sm:$0x1]
    %v1066 = vld [vmem:[#allocation10 + $0xc3] sm:$0x1]
    %v1067 = vld [vmem:[#allocation10 + $0xc4] sm:$0x1]
    %v1068 = vld [vmem:[#allocation10 + $0xc5] sm:$0x1]
    %v1069 = vld [vmem:[#allocation10 + $0xc6] sm:$0x1]
    %v1070 = vld [vmem:[#allocation10 + $0xc7] sm:$0x1]
    %v1071 = vld [vmem:[#allocation10 + $0xc8] sm:$0x1]
    %v1072 = vld [vmem:[#allocation10 + $0xc9] sm:$0x1]
    %v1073 = vld [vmem:[#allocation10 + $0xca] sm:$0x1]
    %v1074 = vld [vmem:[#allocation10 + $0xcb] sm:$0x1]
    %v1075 = vld [vmem:[#allocation10 + $0xcc] sm:$0x1]
    %v1076 = vld [vmem:[#allocation10 + $0xcd] sm:$0x1]
    %v1077 = vld [vmem:[#allocation10 + $0xce] sm:$0x1]
    %v1078 = vld [vmem:[#allocation10 + $0xcf] sm:$0x1]
    %v1079 = vld [vmem:[#allocation10 + $0xd0] sm:$0x1]
    %v1080 = vld [vmem:[#allocation10 + $0xd1] sm:$0x1]
    %v1081 = vld [vmem:[#allocation10 + $0xd2] sm:$0x1]
    %v1082 = vld [vmem:[#allocation10 + $0xd3] sm:$0x1]
    %v1083 = vld [vmem:[#allocation10 + $0xd4] sm:$0x1]
    %v1084 = vld [vmem:[#allocation10 + $0xd5] sm:$0x1]
    %v1085 = vld [vmem:[#allocation10 + $0xd6] sm:$0x1]
    %v1086 = vld [vmem:[#allocation10 + $0xd7] sm:$0x1]
    %v1087 = vld [vmem:[#allocation10 + $0xd8] sm:$0x1]
    %v1088 = vld [vmem:[#allocation10 + $0xd9] sm:$0x1]
    %v1089 = vld [vmem:[#allocation10 + $0xda] sm:$0x1]
    %v1090 = vld [vmem:[#allocation10 + $0xdb] sm:$0x1]
    %v1091 = vld [vmem:[#allocation10 + $0xdc] sm:$0x1]
    %v1092 = vld [vmem:[#allocation10 + $0xdd] sm:$0x1]
    %v1093 = vld [vmem:[#allocation10 + $0xde] sm:$0x1]
    %v1094 = vld [vmem:[#allocation10 + $0xdf] sm:$0x1]
    %v1095 = vld [vmem:[#allocation10 + $0xe0] sm:$0x1]
    %v1096 = vld [vmem:[#allocation10 + $0xe1] sm:$0x1]
    %v1097 = vld [vmem:[#allocation10 + $0xe2] sm:$0x1]
    %v1098 = vld [vmem:[#allocation10 + $0xe3] sm:$0x1]
    %v1099 = vld [vmem:[#allocation10 + $0xe4] sm:$0x1]
    %v1100 = vld [vmem:[#allocation10 + $0xe5] sm:$0x1]
    %v1101 = vld [vmem:[#allocation10 + $0xe6] sm:$0x1]
    %v1102 = vld [vmem:[#allocation10 + $0xe7] sm:$0x1]
    %v1103 = vld [vmem:[#allocation10 + $0xe8] sm:$0x1]
    %v1104 = vld [vmem:[#allocation10 + $0xe9] sm:$0x1]
    %v1105 = vld [vmem:[#allocation10 + $0xea] sm:$0x1]
    %v1106 = vld [vmem:[#allocation10 + $0xeb] sm:$0x1]
    %v1107 = vld [vmem:[#allocation10 + $0xec] sm:$0x1]
    %v1108 = vld [vmem:[#allocation10 + $0xed] sm:$0x1]
    %v1109 = vld [vmem:[#allocation10 + $0xee] sm:$0x1]
    %v1110 = vld [vmem:[#allocation10 + $0xef] sm:$0x1]
    %v1111 = vld [vmem:[#allocation10 + $0xf0] sm:$0x1]
    %v1112 = vld [vmem:[#allocation10 + $0xf1] sm:$0x1]
    %v1113 = vld [vmem:[#allocation10 + $0xf2] sm:$0x1]
    %v1114 = vld [vmem:[#allocation10 + $0xf3] sm:$0x1]
    %v1115 = vld [vmem:[#allocation10 + $0xf4] sm:$0x1]
    %v1116 = vld [vmem:[#allocation10 + $0xf5] sm:$0x1]
    %v1117 = vld [vmem:[#allocation10 + $0xf6] sm:$0x1]
    %v1118 = vld [vmem:[#allocation10 + $0xf7] sm:$0x1]
    %v1119 = vld [vmem:[#allocation10 + $0xf8] sm:$0x1]
    %v1120 = vld [vmem:[#allocation10 + $0xf9] sm:$0x1]
    %v1121 = vld [vmem:[#allocation10 + $0xfa] sm:$0x1]
    %v1122 = vld [vmem:[#allocation10 + $0xfb] sm:$0x1]
    %v1123 = vld [vmem:[#allocation10 + $0xfc] sm:$0x1]
    %v1124 = vld [vmem:[#allocation10 + $0xfd] sm:$0x1]
    %v1125 = vld [vmem:[#allocation10 + $0xfe] sm:$0x1]
    %v1126 = vld [vmem:[#allocation10 + $0xff] sm:$0x1]
    %v1383 = vcombine.low %v871, %v872
    %v1384 = vcombine.low %v873, %v874
    %v1385 = vcombine.low %v875, %v876
    %v1386 = vcombine.low %v877, %v878
    %v1388 = vunpack.c.l.s4 1966171168
    %v1389 = vunpack.c.0.s8 %v1388
    %v1390 = vlaneseq
    %v1391 = vshrl.u32 %v1390, 7
    %v1392 = vsub.s32 %v1389, %v1391
    %v1393 = vrot.slane %v1383, %v1392
    %v1395 = vunpack.c.l.s4 1966171168
    %v1396 = vunpack.c.0.s8 %v1395
    %v1397 = vlaneseq
    %v1398 = vshrl.u32 %v1397, 7
    %v1399 = vsub.s32 %v1396, %v1398
    %v1400 = vrot.slane %v1384, %v1399
    %v1402 = vunpack.c.l.s4 1966171168
    %v1403 = vunpack.c.0.s8 %v1402
    %v1404 = vlaneseq
    %v1405 = vshrl.u32 %v1404, 7
    %v1406 = vsub.s32 %v1403, %v1405
    %v1407 = vrot.slane %v1385, %v1406
    %v1409 = vunpack.c.l.s4 1966171168
    %v1410 = vunpack.c.0.s8 %v1409
    %v1411 = vlaneseq
    %v1412 = vshrl.u32 %v1411, 7
    %v1413 = vsub.s32 %v1410, %v1412
    %v1414 = vrot.slane %v1386, %v1413
    %v1415 = vcombine.low %v1393, %v1400
    %v1416 = vcombine.low %v1407, %v1414
    %v1418 = vunpack.c.l.s4 1966171168
    %v1419 = vunpack.c.0.s8 %v1418
    %v1420 = vlaneseq
    %v1421 = vshrl.u32 %v1420, 7
    %v1422 = vsub.s32 %v1419, %v1421
    %v1423 = vrot.slane %v1415, %v1422
    %v1425 = vunpack.c.l.s4 1966171168
    %v1426 = vunpack.c.0.s8 %v1425
    %v1427 = vlaneseq
    %v1428 = vshrl.u32 %v1427, 7
    %v1429 = vsub.s32 %v1426, %v1428
    %v1430 = vrot.slane %v1416, %v1429
    %v1431 = vcombine.low %v1423, %v1430
    %v1432 = vcombine.low %v879, %v880
    %v1433 = vcombine.low %v881, %v882
    %v1434 = vcombine.low %v883, %v884
    %v1435 = vcombine.low %v885, %v886
    %v1437 = vunpack.c.l.s4 1966171168
    %v1438 = vunpack.c.0.s8 %v1437
    %v1439 = vlaneseq
    %v1440 = vshrl.u32 %v1439, 7
    %v1441 = vsub.s32 %v1438, %v1440
    %v1442 = vrot.slane %v1432, %v1441
    %v1444 = vunpack.c.l.s4 1966171168
    %v1445 = vunpack.c.0.s8 %v1444
    %v1446 = vlaneseq
    %v1447 = vshrl.u32 %v1446, 7
    %v1448 = vsub.s32 %v1445, %v1447
    %v1449 = vrot.slane %v1433, %v1448
    %v1451 = vunpack.c.l.s4 1966171168
    %v1452 = vunpack.c.0.s8 %v1451
    %v1453 = vlaneseq
    %v1454 = vshrl.u32 %v1453, 7
    %v1455 = vsub.s32 %v1452, %v1454
    %v1456 = vrot.slane %v1434, %v1455
    %v1458 = vunpack.c.l.s4 1966171168
    %v1459 = vunpack.c.0.s8 %v1458
    %v1460 = vlaneseq
    %v1461 = vshrl.u32 %v1460, 7
    %v1462 = vsub.s32 %v1459, %v1461
    %v1463 = vrot.slane %v1435, %v1462
    %v1464 = vcombine.low %v1442, %v1449
    %v1465 = vcombine.low %v1456, %v1463
    %v1467 = vunpack.c.l.s4 1966171168
    %v1468 = vunpack.c.0.s8 %v1467
    %v1469 = vlaneseq
    %v1470 = vshrl.u32 %v1469, 7
    %v1471 = vsub.s32 %v1468, %v1470
    %v1472 = vrot.slane %v1464, %v1471
    %v1474 = vunpack.c.l.s4 1966171168
    %v1475 = vunpack.c.0.s8 %v1474
    %v1476 = vlaneseq
    %v1477 = vshrl.u32 %v1476, 7
    %v1478 = vsub.s32 %v1475, %v1477
    %v1479 = vrot.slane %v1465, %v1478
    %v1480 = vcombine.low %v1472, %v1479
    %v1481 = vcombine.low %v887, %v888
    %v1482 = vcombine.low %v889, %v890
    %v1483 = vcombine.low %v891, %v892
    %v1484 = vcombine.low %v893, %v894
    %v1486 = vunpack.c.l.s4 1966171168
    %v1487 = vunpack.c.0.s8 %v1486
    %v1488 = vlaneseq
    %v1489 = vshrl.u32 %v1488, 7
    %v1490 = vsub.s32 %v1487, %v1489
    %v1491 = vrot.slane %v1481, %v1490
    %v1493 = vunpack.c.l.s4 1966171168
    %v1494 = vunpack.c.0.s8 %v1493
    %v1495 = vlaneseq
    %v1496 = vshrl.u32 %v1495, 7
    %v1497 = vsub.s32 %v1494, %v1496
    %v1498 = vrot.slane %v1482, %v1497
    %v1500 = vunpack.c.l.s4 1966171168
    %v1501 = vunpack.c.0.s8 %v1500
    %v1502 = vlaneseq
    %v1503 = vshrl.u32 %v1502, 7
    %v1504 = vsub.s32 %v1501, %v1503
    %v1505 = vrot.slane %v1483, %v1504
    %v1507 = vunpack.c.l.s4 1966171168
    %v1508 = vunpack.c.0.s8 %v1507
    %v1509 = vlaneseq
    %v1510 = vshrl.u32 %v1509, 7
    %v1511 = vsub.s32 %v1508, %v1510
    %v1512 = vrot.slane %v1484, %v1511
    %v1513 = vcombine.low %v1491, %v1498
    %v1514 = vcombine.low %v1505, %v1512
    %v1516 = vunpack.c.l.s4 1966171168
    %v1517 = vunpack.c.0.s8 %v1516
    %v1518 = vlaneseq
    %v1519 = vshrl.u32 %v1518, 7
    %v1520 = vsub.s32 %v1517, %v1519
    %v1521 = vrot.slane %v1513, %v1520
    %v1523 = vunpack.c.l.s4 1966171168
    %v1524 = vunpack.c.0.s8 %v1523
    %v1525 = vlaneseq
    %v1526 = vshrl.u32 %v1525, 7
    %v1527 = vsub.s32 %v1524, %v1526
    %v1528 = vrot.slane %v1514, %v1527
    %v1529 = vcombine.low %v1521, %v1528
    %v1530 = vcombine.low %v895, %v896
    %v1531 = vcombine.low %v897, %v898
    %v1532 = vcombine.low %v899, %v900
    %v1533 = vcombine.low %v901, %v902
    %v1535 = vunpack.c.l.s4 1966171168
    %v1536 = vunpack.c.0.s8 %v1535
    %v1537 = vlaneseq
    %v1538 = vshrl.u32 %v1537, 7
    %v1539 = vsub.s32 %v1536, %v1538
    %v1540 = vrot.slane %v1530, %v1539
    %v1542 = vunpack.c.l.s4 1966171168
    %v1543 = vunpack.c.0.s8 %v1542
    %v1544 = vlaneseq
    %v1545 = vshrl.u32 %v1544, 7
    %v1546 = vsub.s32 %v1543, %v1545
    %v1547 = vrot.slane %v1531, %v1546
    %v1549 = vunpack.c.l.s4 1966171168
    %v1550 = vunpack.c.0.s8 %v1549
    %v1551 = vlaneseq
    %v1552 = vshrl.u32 %v1551, 7
    %v1553 = vsub.s32 %v1550, %v1552
    %v1554 = vrot.slane %v1532, %v1553
    %v1556 = vunpack.c.l.s4 1966171168
    %v1557 = vunpack.c.0.s8 %v1556
    %v1558 = vlaneseq
    %v1559 = vshrl.u32 %v1558, 7
    %v1560 = vsub.s32 %v1557, %v1559
    %v1561 = vrot.slane %v1533, %v1560
    %v1562 = vcombine.low %v1540, %v1547
    %v1563 = vcombine.low %v1554, %v1561
    %v1565 = vunpack.c.l.s4 1966171168
    %v1566 = vunpack.c.0.s8 %v1565
    %v1567 = vlaneseq
    %v1568 = vshrl.u32 %v1567, 7
    %v1569 = vsub.s32 %v1566, %v1568
    %v1570 = vrot.slane %v1562, %v1569
    %v1572 = vunpack.c.l.s4 1966171168
    %v1573 = vunpack.c.0.s8 %v1572
    %v1574 = vlaneseq
    %v1575 = vshrl.u32 %v1574, 7
    %v1576 = vsub.s32 %v1573, %v1575
    %v1577 = vrot.slane %v1563, %v1576
    %v1578 = vcombine.low %v1570, %v1577
    %v1579 = vcombine.low %v903, %v904
    %v1580 = vcombine.low %v905, %v906
    %v1581 = vcombine.low %v907, %v908
    %v1582 = vcombine.low %v909, %v910
    %v1584 = vunpack.c.l.s4 1966171168
    %v1585 = vunpack.c.0.s8 %v1584
    %v1586 = vlaneseq
    %v1587 = vshrl.u32 %v1586, 7
    %v1588 = vsub.s32 %v1585, %v1587
    %v1589 = vrot.slane %v1579, %v1588
    %v1591 = vunpack.c.l.s4 1966171168
    %v1592 = vunpack.c.0.s8 %v1591
    %v1593 = vlaneseq
    %v1594 = vshrl.u32 %v1593, 7
    %v1595 = vsub.s32 %v1592, %v1594
    %v1596 = vrot.slane %v1580, %v1595
    %v1598 = vunpack.c.l.s4 1966171168
    %v1599 = vunpack.c.0.s8 %v1598
    %v1600 = vlaneseq
    %v1601 = vshrl.u32 %v1600, 7
    %v1602 = vsub.s32 %v1599, %v1601
    %v1603 = vrot.slane %v1581, %v1602
    %v1605 = vunpack.c.l.s4 1966171168
    %v1606 = vunpack.c.0.s8 %v1605
    %v1607 = vlaneseq
    %v1608 = vshrl.u32 %v1607, 7
    %v1609 = vsub.s32 %v1606, %v1608
    %v1610 = vrot.slane %v1582, %v1609
    %v1611 = vcombine.low %v1589, %v1596
    %v1612 = vcombine.low %v1603, %v1610
    %v1614 = vunpack.c.l.s4 1966171168
    %v1615 = vunpack.c.0.s8 %v1614
    %v1616 = vlaneseq
    %v1617 = vshrl.u32 %v1616, 7
    %v1618 = vsub.s32 %v1615, %v1617
    %v1619 = vrot.slane %v1611, %v1618
    %v1621 = vunpack.c.l.s4 1966171168
    %v1622 = vunpack.c.0.s8 %v1621
    %v1623 = vlaneseq
    %v1624 = vshrl.u32 %v1623, 7
    %v1625 = vsub.s32 %v1622, %v1624
    %v1626 = vrot.slane %v1612, %v1625
    %v1627 = vcombine.low %v1619, %v1626
    %v1628 = vcombine.low %v911, %v912
    %v1629 = vcombine.low %v913, %v914
    %v1630 = vcombine.low %v915, %v916
    %v1631 = vcombine.low %v917, %v918
    %v1633 = vunpack.c.l.s4 1966171168
    %v1634 = vunpack.c.0.s8 %v1633
    %v1635 = vlaneseq
    %v1636 = vshrl.u32 %v1635, 7
    %v1637 = vsub.s32 %v1634, %v1636
    %v1638 = vrot.slane %v1628, %v1637
    %v1640 = vunpack.c.l.s4 1966171168
    %v1641 = vunpack.c.0.s8 %v1640
    %v1642 = vlaneseq
    %v1643 = vshrl.u32 %v1642, 7
    %v1644 = vsub.s32 %v1641, %v1643
    %v1645 = vrot.slane %v1629, %v1644
    %v1647 = vunpack.c.l.s4 1966171168
    %v1648 = vunpack.c.0.s8 %v1647
    %v1649 = vlaneseq
    %v1650 = vshrl.u32 %v1649, 7
    %v1651 = vsub.s32 %v1648, %v1650
    %v1652 = vrot.slane %v1630, %v1651
    %v1654 = vunpack.c.l.s4 1966171168
    %v1655 = vunpack.c.0.s8 %v1654
    %v1656 = vlaneseq
    %v1657 = vshrl.u32 %v1656, 7
    %v1658 = vsub.s32 %v1655, %v1657
    %v1659 = vrot.slane %v1631, %v1658
    %v1660 = vcombine.low %v1638, %v1645
    %v1661 = vcombine.low %v1652, %v1659
    %v1663 = vunpack.c.l.s4 1966171168
    %v1664 = vunpack.c.0.s8 %v1663
    %v1665 = vlaneseq
    %v1666 = vshrl.u32 %v1665, 7
    %v1667 = vsub.s32 %v1664, %v1666
    %v1668 = vrot.slane %v1660, %v1667
    %v1670 = vunpack.c.l.s4 1966171168
    %v1671 = vunpack.c.0.s8 %v1670
    %v1672 = vlaneseq
    %v1673 = vshrl.u32 %v1672, 7
    %v1674 = vsub.s32 %v1671, %v1673
    %v1675 = vrot.slane %v1661, %v1674
    %v1676 = vcombine.low %v1668, %v1675
    %v1677 = vcombine.low %v919, %v920
    %v1678 = vcombine.low %v921, %v922
    %v1679 = vcombine.low %v923, %v924
    %v1680 = vcombine.low %v925, %v926
    %v1682 = vunpack.c.l.s4 1966171168
    %v1683 = vunpack.c.0.s8 %v1682
    %v1684 = vlaneseq
    %v1685 = vshrl.u32 %v1684, 7
    %v1686 = vsub.s32 %v1683, %v1685
    %v1687 = vrot.slane %v1677, %v1686
    %v1689 = vunpack.c.l.s4 1966171168
    %v1690 = vunpack.c.0.s8 %v1689
    %v1691 = vlaneseq
    %v1692 = vshrl.u32 %v1691, 7
    %v1693 = vsub.s32 %v1690, %v1692
    %v1694 = vrot.slane %v1678, %v1693
    %v1696 = vunpack.c.l.s4 1966171168
    %v1697 = vunpack.c.0.s8 %v1696
    %v1698 = vlaneseq
    %v1699 = vshrl.u32 %v1698, 7
    %v1700 = vsub.s32 %v1697, %v1699
    %v1701 = vrot.slane %v1679, %v1700
    %v1703 = vunpack.c.l.s4 1966171168
    %v1704 = vunpack.c.0.s8 %v1703
    %v1705 = vlaneseq
    %v1706 = vshrl.u32 %v1705, 7
    %v1707 = vsub.s32 %v1704, %v1706
    %v1708 = vrot.slane %v1680, %v1707
    %v1709 = vcombine.low %v1687, %v1694
    %v1710 = vcombine.low %v1701, %v1708
    %v1712 = vunpack.c.l.s4 1966171168
    %v1713 = vunpack.c.0.s8 %v1712
    %v1714 = vlaneseq
    %v1715 = vshrl.u32 %v1714, 7
    %v1716 = vsub.s32 %v1713, %v1715
    %v1717 = vrot.slane %v1709, %v1716
    %v1719 = vunpack.c.l.s4 1966171168
    %v1720 = vunpack.c.0.s8 %v1719
    %v1721 = vlaneseq
    %v1722 = vshrl.u32 %v1721, 7
    %v1723 = vsub.s32 %v1720, %v1722
    %v1724 = vrot.slane %v1710, %v1723
    %v1725 = vcombine.low %v1717, %v1724
    %v1726 = vcombine.low %v927, %v928
    %v1727 = vcombine.low %v929, %v930
    %v1728 = vcombine.low %v931, %v932
    %v1729 = vcombine.low %v933, %v934
    %v1731 = vunpack.c.l.s4 1966171168
    %v1732 = vunpack.c.0.s8 %v1731
    %v1733 = vlaneseq
    %v1734 = vshrl.u32 %v1733, 7
    %v1735 = vsub.s32 %v1732, %v1734
    %v1736 = vrot.slane %v1726, %v1735
    %v1738 = vunpack.c.l.s4 1966171168
    %v1739 = vunpack.c.0.s8 %v1738
    %v1740 = vlaneseq
    %v1741 = vshrl.u32 %v1740, 7
    %v1742 = vsub.s32 %v1739, %v1741
    %v1743 = vrot.slane %v1727, %v1742
    %v1745 = vunpack.c.l.s4 1966171168
    %v1746 = vunpack.c.0.s8 %v1745
    %v1747 = vlaneseq
    %v1748 = vshrl.u32 %v1747, 7
    %v1749 = vsub.s32 %v1746, %v1748
    %v1750 = vrot.slane %v1728, %v1749
    %v1752 = vunpack.c.l.s4 1966171168
    %v1753 = vunpack.c.0.s8 %v1752
    %v1754 = vlaneseq
    %v1755 = vshrl.u32 %v1754, 7
    %v1756 = vsub.s32 %v1753, %v1755
    %v1757 = vrot.slane %v1729, %v1756
    %v1758 = vcombine.low %v1736, %v1743
    %v1759 = vcombine.low %v1750, %v1757
    %v1761 = vunpack.c.l.s4 1966171168
    %v1762 = vunpack.c.0.s8 %v1761
    %v1763 = vlaneseq
    %v1764 = vshrl.u32 %v1763, 7
    %v1765 = vsub.s32 %v1762, %v1764
    %v1766 = vrot.slane %v1758, %v1765
    %v1768 = vunpack.c.l.s4 1966171168
    %v1769 = vunpack.c.0.s8 %v1768
    %v1770 = vlaneseq
    %v1771 = vshrl.u32 %v1770, 7
    %v1772 = vsub.s32 %v1769, %v1771
    %v1773 = vrot.slane %v1759, %v1772
    %v1774 = vcombine.low %v1766, %v1773
    %v1775 = vcombine.low %v935, %v936
    %v1776 = vcombine.low %v937, %v938
    %v1777 = vcombine.low %v939, %v940
    %v1778 = vcombine.low %v941, %v942
    %v1780 = vunpack.c.l.s4 1966171168
    %v1781 = vunpack.c.0.s8 %v1780
    %v1782 = vlaneseq
    %v1783 = vshrl.u32 %v1782, 7
    %v1784 = vsub.s32 %v1781, %v1783
    %v1785 = vrot.slane %v1775, %v1784
    %v1787 = vunpack.c.l.s4 1966171168
    %v1788 = vunpack.c.0.s8 %v1787
    %v1789 = vlaneseq
    %v1790 = vshrl.u32 %v1789, 7
    %v1791 = vsub.s32 %v1788, %v1790
    %v1792 = vrot.slane %v1776, %v1791
    %v1794 = vunpack.c.l.s4 1966171168
    %v1795 = vunpack.c.0.s8 %v1794
    %v1796 = vlaneseq
    %v1797 = vshrl.u32 %v1796, 7
    %v1798 = vsub.s32 %v1795, %v1797
    %v1799 = vrot.slane %v1777, %v1798
    %v1801 = vunpack.c.l.s4 1966171168
    %v1802 = vunpack.c.0.s8 %v1801
    %v1803 = vlaneseq
    %v1804 = vshrl.u32 %v1803, 7
    %v1805 = vsub.s32 %v1802, %v1804
    %v1806 = vrot.slane %v1778, %v1805
    %v1807 = vcombine.low %v1785, %v1792
    %v1808 = vcombine.low %v1799, %v1806
    %v1810 = vunpack.c.l.s4 1966171168
    %v1811 = vunpack.c.0.s8 %v1810
    %v1812 = vlaneseq
    %v1813 = vshrl.u32 %v1812, 7
    %v1814 = vsub.s32 %v1811, %v1813
    %v1815 = vrot.slane %v1807, %v1814
    %v1817 = vunpack.c.l.s4 1966171168
    %v1818 = vunpack.c.0.s8 %v1817
    %v1819 = vlaneseq
    %v1820 = vshrl.u32 %v1819, 7
    %v1821 = vsub.s32 %v1818, %v1820
    %v1822 = vrot.slane %v1808, %v1821
    %v1823 = vcombine.low %v1815, %v1822
    %v1824 = vcombine.low %v943, %v944
    %v1825 = vcombine.low %v945, %v946
    %v1826 = vcombine.low %v947, %v948
    %v1827 = vcombine.low %v949, %v950
    %v1829 = vunpack.c.l.s4 1966171168
    %v1830 = vunpack.c.0.s8 %v1829
    %v1831 = vlaneseq
    %v1832 = vshrl.u32 %v1831, 7
    %v1833 = vsub.s32 %v1830, %v1832
    %v1834 = vrot.slane %v1824, %v1833
    %v1836 = vunpack.c.l.s4 1966171168
    %v1837 = vunpack.c.0.s8 %v1836
    %v1838 = vlaneseq
    %v1839 = vshrl.u32 %v1838, 7
    %v1840 = vsub.s32 %v1837, %v1839
    %v1841 = vrot.slane %v1825, %v1840
    %v1843 = vunpack.c.l.s4 1966171168
    %v1844 = vunpack.c.0.s8 %v1843
    %v1845 = vlaneseq
    %v1846 = vshrl.u32 %v1845, 7
    %v1847 = vsub.s32 %v1844, %v1846
    %v1848 = vrot.slane %v1826, %v1847
    %v1850 = vunpack.c.l.s4 1966171168
    %v1851 = vunpack.c.0.s8 %v1850
    %v1852 = vlaneseq
    %v1853 = vshrl.u32 %v1852, 7
    %v1854 = vsub.s32 %v1851, %v1853
    %v1855 = vrot.slane %v1827, %v1854
    %v1856 = vcombine.low %v1834, %v1841
    %v1857 = vcombine.low %v1848, %v1855
    %v1859 = vunpack.c.l.s4 1966171168
    %v1860 = vunpack.c.0.s8 %v1859
    %v1861 = vlaneseq
    %v1862 = vshrl.u32 %v1861, 7
    %v1863 = vsub.s32 %v1860, %v1862
    %v1864 = vrot.slane %v1856, %v1863
    %v1866 = vunpack.c.l.s4 1966171168
    %v1867 = vunpack.c.0.s8 %v1866
    %v1868 = vlaneseq
    %v1869 = vshrl.u32 %v1868, 7
    %v1870 = vsub.s32 %v1867, %v1869
    %v1871 = vrot.slane %v1857, %v1870
    %v1872 = vcombine.low %v1864, %v1871
    %v1873 = vcombine.low %v951, %v952
    %v1874 = vcombine.low %v953, %v954
    %v1875 = vcombine.low %v955, %v956
    %v1876 = vcombine.low %v957, %v958
    %v1878 = vunpack.c.l.s4 1966171168
    %v1879 = vunpack.c.0.s8 %v1878
    %v1880 = vlaneseq
    %v1881 = vshrl.u32 %v1880, 7
    %v1882 = vsub.s32 %v1879, %v1881
    %v1883 = vrot.slane %v1873, %v1882
    %v1885 = vunpack.c.l.s4 1966171168
    %v1886 = vunpack.c.0.s8 %v1885
    %v1887 = vlaneseq
    %v1888 = vshrl.u32 %v1887, 7
    %v1889 = vsub.s32 %v1886, %v1888
    %v1890 = vrot.slane %v1874, %v1889
    %v1892 = vunpack.c.l.s4 1966171168
    %v1893 = vunpack.c.0.s8 %v1892
    %v1894 = vlaneseq
    %v1895 = vshrl.u32 %v1894, 7
    %v1896 = vsub.s32 %v1893, %v1895
    %v1897 = vrot.slane %v1875, %v1896
    %v1899 = vunpack.c.l.s4 1966171168
    %v1900 = vunpack.c.0.s8 %v1899
    %v1901 = vlaneseq
    %v1902 = vshrl.u32 %v1901, 7
    %v1903 = vsub.s32 %v1900, %v1902
    %v1904 = vrot.slane %v1876, %v1903
    %v1905 = vcombine.low %v1883, %v1890
    %v1906 = vcombine.low %v1897, %v1904
    %v1908 = vunpack.c.l.s4 1966171168
    %v1909 = vunpack.c.0.s8 %v1908
    %v1910 = vlaneseq
    %v1911 = vshrl.u32 %v1910, 7
    %v1912 = vsub.s32 %v1909, %v1911
    %v1913 = vrot.slane %v1905, %v1912
    %v1915 = vunpack.c.l.s4 1966171168
    %v1916 = vunpack.c.0.s8 %v1915
    %v1917 = vlaneseq
    %v1918 = vshrl.u32 %v1917, 7
    %v1919 = vsub.s32 %v1916, %v1918
    %v1920 = vrot.slane %v1906, %v1919
    %v1921 = vcombine.low %v1913, %v1920
    %v1922 = vcombine.low %v959, %v960
    %v1923 = vcombine.low %v961, %v962
    %v1924 = vcombine.low %v963, %v964
    %v1925 = vcombine.low %v965, %v966
    %v1927 = vunpack.c.l.s4 1966171168
    %v1928 = vunpack.c.0.s8 %v1927
    %v1929 = vlaneseq
    %v1930 = vshrl.u32 %v1929, 7
    %v1931 = vsub.s32 %v1928, %v1930
    %v1932 = vrot.slane %v1922, %v1931
    %v1934 = vunpack.c.l.s4 1966171168
    %v1935 = vunpack.c.0.s8 %v1934
    %v1936 = vlaneseq
    %v1937 = vshrl.u32 %v1936, 7
    %v1938 = vsub.s32 %v1935, %v1937
    %v1939 = vrot.slane %v1923, %v1938
    %v1941 = vunpack.c.l.s4 1966171168
    %v1942 = vunpack.c.0.s8 %v1941
    %v1943 = vlaneseq
    %v1944 = vshrl.u32 %v1943, 7
    %v1945 = vsub.s32 %v1942, %v1944
    %v1946 = vrot.slane %v1924, %v1945
    %v1948 = vunpack.c.l.s4 1966171168
    %v1949 = vunpack.c.0.s8 %v1948
    %v1950 = vlaneseq
    %v1951 = vshrl.u32 %v1950, 7
    %v1952 = vsub.s32 %v1949, %v1951
    %v1953 = vrot.slane %v1925, %v1952
    %v1954 = vcombine.low %v1932, %v1939
    %v1955 = vcombine.low %v1946, %v1953
    %v1957 = vunpack.c.l.s4 1966171168
    %v1958 = vunpack.c.0.s8 %v1957
    %v1959 = vlaneseq
    %v1960 = vshrl.u32 %v1959, 7
    %v1961 = vsub.s32 %v1958, %v1960
    %v1962 = vrot.slane %v1954, %v1961
    %v1964 = vunpack.c.l.s4 1966171168
    %v1965 = vunpack.c.0.s8 %v1964
    %v1966 = vlaneseq
    %v1967 = vshrl.u32 %v1966, 7
    %v1968 = vsub.s32 %v1965, %v1967
    %v1969 = vrot.slane %v1955, %v1968
    %v1970 = vcombine.low %v1962, %v1969
    %v1971 = vcombine.low %v967, %v968
    %v1972 = vcombine.low %v969, %v970
    %v1973 = vcombine.low %v971, %v972
    %v1974 = vcombine.low %v973, %v974
    %v1976 = vunpack.c.l.s4 1966171168
    %v1977 = vunpack.c.0.s8 %v1976
    %v1978 = vlaneseq
    %v1979 = vshrl.u32 %v1978, 7
    %v1980 = vsub.s32 %v1977, %v1979
    %v1981 = vrot.slane %v1971, %v1980
    %v1983 = vunpack.c.l.s4 1966171168
    %v1984 = vunpack.c.0.s8 %v1983
    %v1985 = vlaneseq
    %v1986 = vshrl.u32 %v1985, 7
    %v1987 = vsub.s32 %v1984, %v1986
    %v1988 = vrot.slane %v1972, %v1987
    %v1990 = vunpack.c.l.s4 1966171168
    %v1991 = vunpack.c.0.s8 %v1990
    %v1992 = vlaneseq
    %v1993 = vshrl.u32 %v1992, 7
    %v1994 = vsub.s32 %v1991, %v1993
    %v1995 = vrot.slane %v1973, %v1994
    %v1997 = vunpack.c.l.s4 1966171168
    %v1998 = vunpack.c.0.s8 %v1997
    %v1999 = vlaneseq
    %v2000 = vshrl.u32 %v1999, 7
    %v2001 = vsub.s32 %v1998, %v2000
    %v2002 = vrot.slane %v1974, %v2001
    %v2003 = vcombine.low %v1981, %v1988
    %v2004 = vcombine.low %v1995, %v2002
    %v2006 = vunpack.c.l.s4 1966171168
    %v2007 = vunpack.c.0.s8 %v2006
    %v2008 = vlaneseq
    %v2009 = vshrl.u32 %v2008, 7
    %v2010 = vsub.s32 %v2007, %v2009
    %v2011 = vrot.slane %v2003, %v2010
    %v2013 = vunpack.c.l.s4 1966171168
    %v2014 = vunpack.c.0.s8 %v2013
    %v2015 = vlaneseq
    %v2016 = vshrl.u32 %v2015, 7
    %v2017 = vsub.s32 %v2014, %v2016
    %v2018 = vrot.slane %v2004, %v2017
    %v2019 = vcombine.low %v2011, %v2018
    %v2020 = vcombine.low %v975, %v976
    %v2021 = vcombine.low %v977, %v978
    %v2022 = vcombine.low %v979, %v980
    %v2023 = vcombine.low %v981, %v982
    %v2025 = vunpack.c.l.s4 1966171168
    %v2026 = vunpack.c.0.s8 %v2025
    %v2027 = vlaneseq
    %v2028 = vshrl.u32 %v2027, 7
    %v2029 = vsub.s32 %v2026, %v2028
    %v2030 = vrot.slane %v2020, %v2029
    %v2032 = vunpack.c.l.s4 1966171168
    %v2033 = vunpack.c.0.s8 %v2032
    %v2034 = vlaneseq
    %v2035 = vshrl.u32 %v2034, 7
    %v2036 = vsub.s32 %v2033, %v2035
    %v2037 = vrot.slane %v2021, %v2036
    %v2039 = vunpack.c.l.s4 1966171168
    %v2040 = vunpack.c.0.s8 %v2039
    %v2041 = vlaneseq
    %v2042 = vshrl.u32 %v2041, 7
    %v2043 = vsub.s32 %v2040, %v2042
    %v2044 = vrot.slane %v2022, %v2043
    %v2046 = vunpack.c.l.s4 1966171168
    %v2047 = vunpack.c.0.s8 %v2046
    %v2048 = vlaneseq
    %v2049 = vshrl.u32 %v2048, 7
    %v2050 = vsub.s32 %v2047, %v2049
    %v2051 = vrot.slane %v2023, %v2050
    %v2052 = vcombine.low %v2030, %v2037
    %v2053 = vcombine.low %v2044, %v2051
    %v2055 = vunpack.c.l.s4 1966171168
    %v2056 = vunpack.c.0.s8 %v2055
    %v2057 = vlaneseq
    %v2058 = vshrl.u32 %v2057, 7
    %v2059 = vsub.s32 %v2056, %v2058
    %v2060 = vrot.slane %v2052, %v2059
    %v2062 = vunpack.c.l.s4 1966171168
    %v2063 = vunpack.c.0.s8 %v2062
    %v2064 = vlaneseq
    %v2065 = vshrl.u32 %v2064, 7
    %v2066 = vsub.s32 %v2063, %v2065
    %v2067 = vrot.slane %v2053, %v2066
    %v2068 = vcombine.low %v2060, %v2067
    %v2069 = vcombine.low %v983, %v984
    %v2070 = vcombine.low %v985, %v986
    %v2071 = vcombine.low %v987, %v988
    %v2072 = vcombine.low %v989, %v990
    %v2074 = vunpack.c.l.s4 1966171168
    %v2075 = vunpack.c.0.s8 %v2074
    %v2076 = vlaneseq
    %v2077 = vshrl.u32 %v2076, 7
    %v2078 = vsub.s32 %v2075, %v2077
    %v2079 = vrot.slane %v2069, %v2078
    %v2081 = vunpack.c.l.s4 1966171168
    %v2082 = vunpack.c.0.s8 %v2081
    %v2083 = vlaneseq
    %v2084 = vshrl.u32 %v2083, 7
    %v2085 = vsub.s32 %v2082, %v2084
    %v2086 = vrot.slane %v2070, %v2085
    %v2088 = vunpack.c.l.s4 1966171168
    %v2089 = vunpack.c.0.s8 %v2088
    %v2090 = vlaneseq
    %v2091 = vshrl.u32 %v2090, 7
    %v2092 = vsub.s32 %v2089, %v2091
    %v2093 = vrot.slane %v2071, %v2092
    %v2095 = vunpack.c.l.s4 1966171168
    %v2096 = vunpack.c.0.s8 %v2095
    %v2097 = vlaneseq
    %v2098 = vshrl.u32 %v2097, 7
    %v2099 = vsub.s32 %v2096, %v2098
    %v2100 = vrot.slane %v2072, %v2099
    %v2101 = vcombine.low %v2079, %v2086
    %v2102 = vcombine.low %v2093, %v2100
    %v2104 = vunpack.c.l.s4 1966171168
    %v2105 = vunpack.c.0.s8 %v2104
    %v2106 = vlaneseq
    %v2107 = vshrl.u32 %v2106, 7
    %v2108 = vsub.s32 %v2105, %v2107
    %v2109 = vrot.slane %v2101, %v2108
    %v2111 = vunpack.c.l.s4 1966171168
    %v2112 = vunpack.c.0.s8 %v2111
    %v2113 = vlaneseq
    %v2114 = vshrl.u32 %v2113, 7
    %v2115 = vsub.s32 %v2112, %v2114
    %v2116 = vrot.slane %v2102, %v2115
    %v2117 = vcombine.low %v2109, %v2116
    %v2118 = vcombine.low %v991, %v992
    %v2119 = vcombine.low %v993, %v994
    %v2120 = vcombine.low %v995, %v996
    %v2121 = vcombine.low %v997, %v998
    %v2123 = vunpack.c.l.s4 1966171168
    %v2124 = vunpack.c.0.s8 %v2123
    %v2125 = vlaneseq
    %v2126 = vshrl.u32 %v2125, 7
    %v2127 = vsub.s32 %v2124, %v2126
    %v2128 = vrot.slane %v2118, %v2127
    %v2130 = vunpack.c.l.s4 1966171168
    %v2131 = vunpack.c.0.s8 %v2130
    %v2132 = vlaneseq
    %v2133 = vshrl.u32 %v2132, 7
    %v2134 = vsub.s32 %v2131, %v2133
    %v2135 = vrot.slane %v2119, %v2134
    %v2137 = vunpack.c.l.s4 1966171168
    %v2138 = vunpack.c.0.s8 %v2137
    %v2139 = vlaneseq
    %v2140 = vshrl.u32 %v2139, 7
    %v2141 = vsub.s32 %v2138, %v2140
    %v2142 = vrot.slane %v2120, %v2141
    %v2144 = vunpack.c.l.s4 1966171168
    %v2145 = vunpack.c.0.s8 %v2144
    %v2146 = vlaneseq
    %v2147 = vshrl.u32 %v2146, 7
    %v2148 = vsub.s32 %v2145, %v2147
    %v2149 = vrot.slane %v2121, %v2148
    %v2150 = vcombine.low %v2128, %v2135
    %v2151 = vcombine.low %v2142, %v2149
    %v2153 = vunpack.c.l.s4 1966171168
    %v2154 = vunpack.c.0.s8 %v2153
    %v2155 = vlaneseq
    %v2156 = vshrl.u32 %v2155, 7
    %v2157 = vsub.s32 %v2154, %v2156
    %v2158 = vrot.slane %v2150, %v2157
    %v2160 = vunpack.c.l.s4 1966171168
    %v2161 = vunpack.c.0.s8 %v2160
    %v2162 = vlaneseq
    %v2163 = vshrl.u32 %v2162, 7
    %v2164 = vsub.s32 %v2161, %v2163
    %v2165 = vrot.slane %v2151, %v2164
    %v2166 = vcombine.low %v2158, %v2165
    %v2167 = vcombine.low %v999, %v1000
    %v2168 = vcombine.low %v1001, %v1002
    %v2169 = vcombine.low %v1003, %v1004
    %v2170 = vcombine.low %v1005, %v1006
    %v2172 = vunpack.c.l.s4 1966171168
    %v2173 = vunpack.c.0.s8 %v2172
    %v2174 = vlaneseq
    %v2175 = vshrl.u32 %v2174, 7
    %v2176 = vsub.s32 %v2173, %v2175
    %v2177 = vrot.slane %v2167, %v2176
    %v2179 = vunpack.c.l.s4 1966171168
    %v2180 = vunpack.c.0.s8 %v2179
    %v2181 = vlaneseq
    %v2182 = vshrl.u32 %v2181, 7
    %v2183 = vsub.s32 %v2180, %v2182
    %v2184 = vrot.slane %v2168, %v2183
    %v2186 = vunpack.c.l.s4 1966171168
    %v2187 = vunpack.c.0.s8 %v2186
    %v2188 = vlaneseq
    %v2189 = vshrl.u32 %v2188, 7
    %v2190 = vsub.s32 %v2187, %v2189
    %v2191 = vrot.slane %v2169, %v2190
    %v2193 = vunpack.c.l.s4 1966171168
    %v2194 = vunpack.c.0.s8 %v2193
    %v2195 = vlaneseq
    %v2196 = vshrl.u32 %v2195, 7
    %v2197 = vsub.s32 %v2194, %v2196
    %v2198 = vrot.slane %v2170, %v2197
    %v2199 = vcombine.low %v2177, %v2184
    %v2200 = vcombine.low %v2191, %v2198
    %v2202 = vunpack.c.l.s4 1966171168
    %v2203 = vunpack.c.0.s8 %v2202
    %v2204 = vlaneseq
    %v2205 = vshrl.u32 %v2204, 7
    %v2206 = vsub.s32 %v2203, %v2205
    %v2207 = vrot.slane %v2199, %v2206
    %v2209 = vunpack.c.l.s4 1966171168
    %v2210 = vunpack.c.0.s8 %v2209
    %v2211 = vlaneseq
    %v2212 = vshrl.u32 %v2211, 7
    %v2213 = vsub.s32 %v2210, %v2212
    %v2214 = vrot.slane %v2200, %v2213
    %v2215 = vcombine.low %v2207, %v2214
    %v2216 = vcombine.low %v1007, %v1008
    %v2217 = vcombine.low %v1009, %v1010
    %v2218 = vcombine.low %v1011, %v1012
    %v2219 = vcombine.low %v1013, %v1014
    %v2221 = vunpack.c.l.s4 1966171168
    %v2222 = vunpack.c.0.s8 %v2221
    %v2223 = vlaneseq
    %v2224 = vshrl.u32 %v2223, 7
    %v2225 = vsub.s32 %v2222, %v2224
    %v2226 = vrot.slane %v2216, %v2225
    %v2228 = vunpack.c.l.s4 1966171168
    %v2229 = vunpack.c.0.s8 %v2228
    %v2230 = vlaneseq
    %v2231 = vshrl.u32 %v2230, 7
    %v2232 = vsub.s32 %v2229, %v2231
    %v2233 = vrot.slane %v2217, %v2232
    %v2235 = vunpack.c.l.s4 1966171168
    %v2236 = vunpack.c.0.s8 %v2235
    %v2237 = vlaneseq
    %v2238 = vshrl.u32 %v2237, 7
    %v2239 = vsub.s32 %v2236, %v2238
    %v2240 = vrot.slane %v2218, %v2239
    %v2242 = vunpack.c.l.s4 1966171168
    %v2243 = vunpack.c.0.s8 %v2242
    %v2244 = vlaneseq
    %v2245 = vshrl.u32 %v2244, 7
    %v2246 = vsub.s32 %v2243, %v2245
    %v2247 = vrot.slane %v2219, %v2246
    %v2248 = vcombine.low %v2226, %v2233
    %v2249 = vcombine.low %v2240, %v2247
    %v2251 = vunpack.c.l.s4 1966171168
    %v2252 = vunpack.c.0.s8 %v2251
    %v2253 = vlaneseq
    %v2254 = vshrl.u32 %v2253, 7
    %v2255 = vsub.s32 %v2252, %v2254
    %v2256 = vrot.slane %v2248, %v2255
    %v2258 = vunpack.c.l.s4 1966171168
    %v2259 = vunpack.c.0.s8 %v2258
    %v2260 = vlaneseq
    %v2261 = vshrl.u32 %v2260, 7
    %v2262 = vsub.s32 %v2259, %v2261
    %v2263 = vrot.slane %v2249, %v2262
    %v2264 = vcombine.low %v2256, %v2263
    %v2265 = vcombine.low %v1015, %v1016
    %v2266 = vcombine.low %v1017, %v1018
    %v2267 = vcombine.low %v1019, %v1020
    %v2268 = vcombine.low %v1021, %v1022
    %v2270 = vunpack.c.l.s4 1966171168
    %v2271 = vunpack.c.0.s8 %v2270
    %v2272 = vlaneseq
    %v2273 = vshrl.u32 %v2272, 7
    %v2274 = vsub.s32 %v2271, %v2273
    %v2275 = vrot.slane %v2265, %v2274
    %v2277 = vunpack.c.l.s4 1966171168
    %v2278 = vunpack.c.0.s8 %v2277
    %v2279 = vlaneseq
    %v2280 = vshrl.u32 %v2279, 7
    %v2281 = vsub.s32 %v2278, %v2280
    %v2282 = vrot.slane %v2266, %v2281
    %v2284 = vunpack.c.l.s4 1966171168
    %v2285 = vunpack.c.0.s8 %v2284
    %v2286 = vlaneseq
    %v2287 = vshrl.u32 %v2286, 7
    %v2288 = vsub.s32 %v2285, %v2287
    %v2289 = vrot.slane %v2267, %v2288
    %v2291 = vunpack.c.l.s4 1966171168
    %v2292 = vunpack.c.0.s8 %v2291
    %v2293 = vlaneseq
    %v2294 = vshrl.u32 %v2293, 7
    %v2295 = vsub.s32 %v2292, %v2294
    %v2296 = vrot.slane %v2268, %v2295
    %v2297 = vcombine.low %v2275, %v2282
    %v2298 = vcombine.low %v2289, %v2296
    %v2300 = vunpack.c.l.s4 1966171168
    %v2301 = vunpack.c.0.s8 %v2300
    %v2302 = vlaneseq
    %v2303 = vshrl.u32 %v2302, 7
    %v2304 = vsub.s32 %v2301, %v2303
    %v2305 = vrot.slane %v2297, %v2304
    %v2307 = vunpack.c.l.s4 1966171168
    %v2308 = vunpack.c.0.s8 %v2307
    %v2309 = vlaneseq
    %v2310 = vshrl.u32 %v2309, 7
    %v2311 = vsub.s32 %v2308, %v2310
    %v2312 = vrot.slane %v2298, %v2311
    %v2313 = vcombine.low %v2305, %v2312
    %v2314 = vcombine.low %v1023, %v1024
    %v2315 = vcombine.low %v1025, %v1026
    %v2316 = vcombine.low %v1027, %v1028
    %v2317 = vcombine.low %v1029, %v1030
    %v2319 = vunpack.c.l.s4 1966171168
    %v2320 = vunpack.c.0.s8 %v2319
    %v2321 = vlaneseq
    %v2322 = vshrl.u32 %v2321, 7
    %v2323 = vsub.s32 %v2320, %v2322
    %v2324 = vrot.slane %v2314, %v2323
    %v2326 = vunpack.c.l.s4 1966171168
    %v2327 = vunpack.c.0.s8 %v2326
    %v2328 = vlaneseq
    %v2329 = vshrl.u32 %v2328, 7
    %v2330 = vsub.s32 %v2327, %v2329
    %v2331 = vrot.slane %v2315, %v2330
    %v2333 = vunpack.c.l.s4 1966171168
    %v2334 = vunpack.c.0.s8 %v2333
    %v2335 = vlaneseq
    %v2336 = vshrl.u32 %v2335, 7
    %v2337 = vsub.s32 %v2334, %v2336
    %v2338 = vrot.slane %v2316, %v2337
    %v2340 = vunpack.c.l.s4 1966171168
    %v2341 = vunpack.c.0.s8 %v2340
    %v2342 = vlaneseq
    %v2343 = vshrl.u32 %v2342, 7
    %v2344 = vsub.s32 %v2341, %v2343
    %v2345 = vrot.slane %v2317, %v2344
    %v2346 = vcombine.low %v2324, %v2331
    %v2347 = vcombine.low %v2338, %v2345
    %v2349 = vunpack.c.l.s4 1966171168
    %v2350 = vunpack.c.0.s8 %v2349
    %v2351 = vlaneseq
    %v2352 = vshrl.u32 %v2351, 7
    %v2353 = vsub.s32 %v2350, %v2352
    %v2354 = vrot.slane %v2346, %v2353
    %v2356 = vunpack.c.l.s4 1966171168
    %v2357 = vunpack.c.0.s8 %v2356
    %v2358 = vlaneseq
    %v2359 = vshrl.u32 %v2358, 7
    %v2360 = vsub.s32 %v2357, %v2359
    %v2361 = vrot.slane %v2347, %v2360
    %v2362 = vcombine.low %v2354, %v2361
    %v2363 = vcombine.low %v1031, %v1032
    %v2364 = vcombine.low %v1033, %v1034
    %v2365 = vcombine.low %v1035, %v1036
    %v2366 = vcombine.low %v1037, %v1038
    %v2368 = vunpack.c.l.s4 1966171168
    %v2369 = vunpack.c.0.s8 %v2368
    %v2370 = vlaneseq
    %v2371 = vshrl.u32 %v2370, 7
    %v2372 = vsub.s32 %v2369, %v2371
    %v2373 = vrot.slane %v2363, %v2372
    %v2375 = vunpack.c.l.s4 1966171168
    %v2376 = vunpack.c.0.s8 %v2375
    %v2377 = vlaneseq
    %v2378 = vshrl.u32 %v2377, 7
    %v2379 = vsub.s32 %v2376, %v2378
    %v2380 = vrot.slane %v2364, %v2379
    %v2382 = vunpack.c.l.s4 1966171168
    %v2383 = vunpack.c.0.s8 %v2382
    %v2384 = vlaneseq
    %v2385 = vshrl.u32 %v2384, 7
    %v2386 = vsub.s32 %v2383, %v2385
    %v2387 = vrot.slane %v2365, %v2386
    %v2389 = vunpack.c.l.s4 1966171168
    %v2390 = vunpack.c.0.s8 %v2389
    %v2391 = vlaneseq
    %v2392 = vshrl.u32 %v2391, 7
    %v2393 = vsub.s32 %v2390, %v2392
    %v2394 = vrot.slane %v2366, %v2393
    %v2395 = vcombine.low %v2373, %v2380
    %v2396 = vcombine.low %v2387, %v2394
    %v2398 = vunpack.c.l.s4 1966171168
    %v2399 = vunpack.c.0.s8 %v2398
    %v2400 = vlaneseq
    %v2401 = vshrl.u32 %v2400, 7
    %v2402 = vsub.s32 %v2399, %v2401
    %v2403 = vrot.slane %v2395, %v2402
    %v2405 = vunpack.c.l.s4 1966171168
    %v2406 = vunpack.c.0.s8 %v2405
    %v2407 = vlaneseq
    %v2408 = vshrl.u32 %v2407, 7
    %v2409 = vsub.s32 %v2406, %v2408
    %v2410 = vrot.slane %v2396, %v2409
    %v2411 = vcombine.low %v2403, %v2410
    %v2412 = vcombine.low %v1039, %v1040
    %v2413 = vcombine.low %v1041, %v1042
    %v2414 = vcombine.low %v1043, %v1044
    %v2415 = vcombine.low %v1045, %v1046
    %v2417 = vunpack.c.l.s4 1966171168
    %v2418 = vunpack.c.0.s8 %v2417
    %v2419 = vlaneseq
    %v2420 = vshrl.u32 %v2419, 7
    %v2421 = vsub.s32 %v2418, %v2420
    %v2422 = vrot.slane %v2412, %v2421
    %v2424 = vunpack.c.l.s4 1966171168
    %v2425 = vunpack.c.0.s8 %v2424
    %v2426 = vlaneseq
    %v2427 = vshrl.u32 %v2426, 7
    %v2428 = vsub.s32 %v2425, %v2427
    %v2429 = vrot.slane %v2413, %v2428
    %v2431 = vunpack.c.l.s4 1966171168
    %v2432 = vunpack.c.0.s8 %v2431
    %v2433 = vlaneseq
    %v2434 = vshrl.u32 %v2433, 7
    %v2435 = vsub.s32 %v2432, %v2434
    %v2436 = vrot.slane %v2414, %v2435
    %v2438 = vunpack.c.l.s4 1966171168
    %v2439 = vunpack.c.0.s8 %v2438
    %v2440 = vlaneseq
    %v2441 = vshrl.u32 %v2440, 7
    %v2442 = vsub.s32 %v2439, %v2441
    %v2443 = vrot.slane %v2415, %v2442
    %v2444 = vcombine.low %v2422, %v2429
    %v2445 = vcombine.low %v2436, %v2443
    %v2447 = vunpack.c.l.s4 1966171168
    %v2448 = vunpack.c.0.s8 %v2447
    %v2449 = vlaneseq
    %v2450 = vshrl.u32 %v2449, 7
    %v2451 = vsub.s32 %v2448, %v2450
    %v2452 = vrot.slane %v2444, %v2451
    %v2454 = vunpack.c.l.s4 1966171168
    %v2455 = vunpack.c.0.s8 %v2454
    %v2456 = vlaneseq
    %v2457 = vshrl.u32 %v2456, 7
    %v2458 = vsub.s32 %v2455, %v2457
    %v2459 = vrot.slane %v2445, %v2458
    %v2460 = vcombine.low %v2452, %v2459
    %v2461 = vcombine.low %v1047, %v1048
    %v2462 = vcombine.low %v1049, %v1050
    %v2463 = vcombine.low %v1051, %v1052
    %v2464 = vcombine.low %v1053, %v1054
    %v2466 = vunpack.c.l.s4 1966171168
    %v2467 = vunpack.c.0.s8 %v2466
    %v2468 = vlaneseq
    %v2469 = vshrl.u32 %v2468, 7
    %v2470 = vsub.s32 %v2467, %v2469
    %v2471 = vrot.slane %v2461, %v2470
    %v2473 = vunpack.c.l.s4 1966171168
    %v2474 = vunpack.c.0.s8 %v2473
    %v2475 = vlaneseq
    %v2476 = vshrl.u32 %v2475, 7
    %v2477 = vsub.s32 %v2474, %v2476
    %v2478 = vrot.slane %v2462, %v2477
    %v2480 = vunpack.c.l.s4 1966171168
    %v2481 = vunpack.c.0.s8 %v2480
    %v2482 = vlaneseq
    %v2483 = vshrl.u32 %v2482, 7
    %v2484 = vsub.s32 %v2481, %v2483
    %v2485 = vrot.slane %v2463, %v2484
    %v2487 = vunpack.c.l.s4 1966171168
    %v2488 = vunpack.c.0.s8 %v2487
    %v2489 = vlaneseq
    %v2490 = vshrl.u32 %v2489, 7
    %v2491 = vsub.s32 %v2488, %v2490
    %v2492 = vrot.slane %v2464, %v2491
    %v2493 = vcombine.low %v2471, %v2478
    %v2494 = vcombine.low %v2485, %v2492
    %v2496 = vunpack.c.l.s4 1966171168
    %v2497 = vunpack.c.0.s8 %v2496
    %v2498 = vlaneseq
    %v2499 = vshrl.u32 %v2498, 7
    %v2500 = vsub.s32 %v2497, %v2499
    %v2501 = vrot.slane %v2493, %v2500
    %v2503 = vunpack.c.l.s4 1966171168
    %v2504 = vunpack.c.0.s8 %v2503
    %v2505 = vlaneseq
    %v2506 = vshrl.u32 %v2505, 7
    %v2507 = vsub.s32 %v2504, %v2506
    %v2508 = vrot.slane %v2494, %v2507
    %v2509 = vcombine.low %v2501, %v2508
    %v2510 = vcombine.low %v1055, %v1056
    %v2511 = vcombine.low %v1057, %v1058
    %v2512 = vcombine.low %v1059, %v1060
    %v2513 = vcombine.low %v1061, %v1062
    %v2515 = vunpack.c.l.s4 1966171168
    %v2516 = vunpack.c.0.s8 %v2515
    %v2517 = vlaneseq
    %v2518 = vshrl.u32 %v2517, 7
    %v2519 = vsub.s32 %v2516, %v2518
    %v2520 = vrot.slane %v2510, %v2519
    %v2522 = vunpack.c.l.s4 1966171168
    %v2523 = vunpack.c.0.s8 %v2522
    %v2524 = vlaneseq
    %v2525 = vshrl.u32 %v2524, 7
    %v2526 = vsub.s32 %v2523, %v2525
    %v2527 = vrot.slane %v2511, %v2526
    %v2529 = vunpack.c.l.s4 1966171168
    %v2530 = vunpack.c.0.s8 %v2529
    %v2531 = vlaneseq
    %v2532 = vshrl.u32 %v2531, 7
    %v2533 = vsub.s32 %v2530, %v2532
    %v2534 = vrot.slane %v2512, %v2533
    %v2536 = vunpack.c.l.s4 1966171168
    %v2537 = vunpack.c.0.s8 %v2536
    %v2538 = vlaneseq
    %v2539 = vshrl.u32 %v2538, 7
    %v2540 = vsub.s32 %v2537, %v2539
    %v2541 = vrot.slane %v2513, %v2540
    %v2542 = vcombine.low %v2520, %v2527
    %v2543 = vcombine.low %v2534, %v2541
    %v2545 = vunpack.c.l.s4 1966171168
    %v2546 = vunpack.c.0.s8 %v2545
    %v2547 = vlaneseq
    %v2548 = vshrl.u32 %v2547, 7
    %v2549 = vsub.s32 %v2546, %v2548
    %v2550 = vrot.slane %v2542, %v2549
    %v2552 = vunpack.c.l.s4 1966171168
    %v2553 = vunpack.c.0.s8 %v2552
    %v2554 = vlaneseq
    %v2555 = vshrl.u32 %v2554, 7
    %v2556 = vsub.s32 %v2553, %v2555
    %v2557 = vrot.slane %v2543, %v2556
    %v2558 = vcombine.low %v2550, %v2557
    %v2559 = vcombine.low %v1063, %v1064
    %v2560 = vcombine.low %v1065, %v1066
    %v2561 = vcombine.low %v1067, %v1068
    %v2562 = vcombine.low %v1069, %v1070
    %v2564 = vunpack.c.l.s4 1966171168
    %v2565 = vunpack.c.0.s8 %v2564
    %v2566 = vlaneseq
    %v2567 = vshrl.u32 %v2566, 7
    %v2568 = vsub.s32 %v2565, %v2567
    %v2569 = vrot.slane %v2559, %v2568
    %v2571 = vunpack.c.l.s4 1966171168
    %v2572 = vunpack.c.0.s8 %v2571
    %v2573 = vlaneseq
    %v2574 = vshrl.u32 %v2573, 7
    %v2575 = vsub.s32 %v2572, %v2574
    %v2576 = vrot.slane %v2560, %v2575
    %v2578 = vunpack.c.l.s4 1966171168
    %v2579 = vunpack.c.0.s8 %v2578
    %v2580 = vlaneseq
    %v2581 = vshrl.u32 %v2580, 7
    %v2582 = vsub.s32 %v2579, %v2581
    %v2583 = vrot.slane %v2561, %v2582
    %v2585 = vunpack.c.l.s4 1966171168
    %v2586 = vunpack.c.0.s8 %v2585
    %v2587 = vlaneseq
    %v2588 = vshrl.u32 %v2587, 7
    %v2589 = vsub.s32 %v2586, %v2588
    %v2590 = vrot.slane %v2562, %v2589
    %v2591 = vcombine.low %v2569, %v2576
    %v2592 = vcombine.low %v2583, %v2590
    %v2594 = vunpack.c.l.s4 1966171168
    %v2595 = vunpack.c.0.s8 %v2594
    %v2596 = vlaneseq
    %v2597 = vshrl.u32 %v2596, 7
    %v2598 = vsub.s32 %v2595, %v2597
    %v2599 = vrot.slane %v2591, %v2598
    %v2601 = vunpack.c.l.s4 1966171168
    %v2602 = vunpack.c.0.s8 %v2601
    %v2603 = vlaneseq
    %v2604 = vshrl.u32 %v2603, 7
    %v2605 = vsub.s32 %v2602, %v2604
    %v2606 = vrot.slane %v2592, %v2605
    %v2607 = vcombine.low %v2599, %v2606
    %v2608 = vcombine.low %v1071, %v1072
    %v2609 = vcombine.low %v1073, %v1074
    %v2610 = vcombine.low %v1075, %v1076
    %v2611 = vcombine.low %v1077, %v1078
    %v2613 = vunpack.c.l.s4 1966171168
    %v2614 = vunpack.c.0.s8 %v2613
    %v2615 = vlaneseq
    %v2616 = vshrl.u32 %v2615, 7
    %v2617 = vsub.s32 %v2614, %v2616
    %v2618 = vrot.slane %v2608, %v2617
    %v2620 = vunpack.c.l.s4 1966171168
    %v2621 = vunpack.c.0.s8 %v2620
    %v2622 = vlaneseq
    %v2623 = vshrl.u32 %v2622, 7
    %v2624 = vsub.s32 %v2621, %v2623
    %v2625 = vrot.slane %v2609, %v2624
    %v2627 = vunpack.c.l.s4 1966171168
    %v2628 = vunpack.c.0.s8 %v2627
    %v2629 = vlaneseq
    %v2630 = vshrl.u32 %v2629, 7
    %v2631 = vsub.s32 %v2628, %v2630
    %v2632 = vrot.slane %v2610, %v2631
    %v2634 = vunpack.c.l.s4 1966171168
    %v2635 = vunpack.c.0.s8 %v2634
    %v2636 = vlaneseq
    %v2637 = vshrl.u32 %v2636, 7
    %v2638 = vsub.s32 %v2635, %v2637
    %v2639 = vrot.slane %v2611, %v2638
    %v2640 = vcombine.low %v2618, %v2625
    %v2641 = vcombine.low %v2632, %v2639
    %v2643 = vunpack.c.l.s4 1966171168
    %v2644 = vunpack.c.0.s8 %v2643
    %v2645 = vlaneseq
    %v2646 = vshrl.u32 %v2645, 7
    %v2647 = vsub.s32 %v2644, %v2646
    %v2648 = vrot.slane %v2640, %v2647
    %v2650 = vunpack.c.l.s4 1966171168
    %v2651 = vunpack.c.0.s8 %v2650
    %v2652 = vlaneseq
    %v2653 = vshrl.u32 %v2652, 7
    %v2654 = vsub.s32 %v2651, %v2653
    %v2655 = vrot.slane %v2641, %v2654
    %v2656 = vcombine.low %v2648, %v2655
    %v2657 = vcombine.low %v1079, %v1080
    %v2658 = vcombine.low %v1081, %v1082
    %v2659 = vcombine.low %v1083, %v1084
    %v2660 = vcombine.low %v1085, %v1086
    %v2662 = vunpack.c.l.s4 1966171168
    %v2663 = vunpack.c.0.s8 %v2662
    %v2664 = vlaneseq
    %v2665 = vshrl.u32 %v2664, 7
    %v2666 = vsub.s32 %v2663, %v2665
    %v2667 = vrot.slane %v2657, %v2666
    %v2669 = vunpack.c.l.s4 1966171168
    %v2670 = vunpack.c.0.s8 %v2669
    %v2671 = vlaneseq
    %v2672 = vshrl.u32 %v2671, 7
    %v2673 = vsub.s32 %v2670, %v2672
    %v2674 = vrot.slane %v2658, %v2673
    %v2676 = vunpack.c.l.s4 1966171168
    %v2677 = vunpack.c.0.s8 %v2676
    %v2678 = vlaneseq
    %v2679 = vshrl.u32 %v2678, 7
    %v2680 = vsub.s32 %v2677, %v2679
    %v2681 = vrot.slane %v2659, %v2680
    %v2683 = vunpack.c.l.s4 1966171168
    %v2684 = vunpack.c.0.s8 %v2683
    %v2685 = vlaneseq
    %v2686 = vshrl.u32 %v2685, 7
    %v2687 = vsub.s32 %v2684, %v2686
    %v2688 = vrot.slane %v2660, %v2687
    %v2689 = vcombine.low %v2667, %v2674
    %v2690 = vcombine.low %v2681, %v2688
    %v2692 = vunpack.c.l.s4 1966171168
    %v2693 = vunpack.c.0.s8 %v2692
    %v2694 = vlaneseq
    %v2695 = vshrl.u32 %v2694, 7
    %v2696 = vsub.s32 %v2693, %v2695
    %v2697 = vrot.slane %v2689, %v2696
    %v2699 = vunpack.c.l.s4 1966171168
    %v2700 = vunpack.c.0.s8 %v2699
    %v2701 = vlaneseq
    %v2702 = vshrl.u32 %v2701, 7
    %v2703 = vsub.s32 %v2700, %v2702
    %v2704 = vrot.slane %v2690, %v2703
    %v2705 = vcombine.low %v2697, %v2704
    %v2706 = vcombine.low %v1087, %v1088
    %v2707 = vcombine.low %v1089, %v1090
    %v2708 = vcombine.low %v1091, %v1092
    %v2709 = vcombine.low %v1093, %v1094
    %v2711 = vunpack.c.l.s4 1966171168
    %v2712 = vunpack.c.0.s8 %v2711
    %v2713 = vlaneseq
    %v2714 = vshrl.u32 %v2713, 7
    %v2715 = vsub.s32 %v2712, %v2714
    %v2716 = vrot.slane %v2706, %v2715
    %v2718 = vunpack.c.l.s4 1966171168
    %v2719 = vunpack.c.0.s8 %v2718
    %v2720 = vlaneseq
    %v2721 = vshrl.u32 %v2720, 7
    %v2722 = vsub.s32 %v2719, %v2721
    %v2723 = vrot.slane %v2707, %v2722
    %v2725 = vunpack.c.l.s4 1966171168
    %v2726 = vunpack.c.0.s8 %v2725
    %v2727 = vlaneseq
    %v2728 = vshrl.u32 %v2727, 7
    %v2729 = vsub.s32 %v2726, %v2728
    %v2730 = vrot.slane %v2708, %v2729
    %v2732 = vunpack.c.l.s4 1966171168
    %v2733 = vunpack.c.0.s8 %v2732
    %v2734 = vlaneseq
    %v2735 = vshrl.u32 %v2734, 7
    %v2736 = vsub.s32 %v2733, %v2735
    %v2737 = vrot.slane %v2709, %v2736
    %v2738 = vcombine.low %v2716, %v2723
    %v2739 = vcombine.low %v2730, %v2737
    %v2741 = vunpack.c.l.s4 1966171168
    %v2742 = vunpack.c.0.s8 %v2741
    %v2743 = vlaneseq
    %v2744 = vshrl.u32 %v2743, 7
    %v2745 = vsub.s32 %v2742, %v2744
    %v2746 = vrot.slane %v2738, %v2745
    %v2748 = vunpack.c.l.s4 1966171168
    %v2749 = vunpack.c.0.s8 %v2748
    %v2750 = vlaneseq
    %v2751 = vshrl.u32 %v2750, 7
    %v2752 = vsub.s32 %v2749, %v2751
    %v2753 = vrot.slane %v2739, %v2752
    %v2754 = vcombine.low %v2746, %v2753
    %v2755 = vcombine.low %v1095, %v1096
    %v2756 = vcombine.low %v1097, %v1098
    %v2757 = vcombine.low %v1099, %v1100
    %v2758 = vcombine.low %v1101, %v1102
    %v2760 = vunpack.c.l.s4 1966171168
    %v2761 = vunpack.c.0.s8 %v2760
    %v2762 = vlaneseq
    %v2763 = vshrl.u32 %v2762, 7
    %v2764 = vsub.s32 %v2761, %v2763
    %v2765 = vrot.slane %v2755, %v2764
    %v2767 = vunpack.c.l.s4 1966171168
    %v2768 = vunpack.c.0.s8 %v2767
    %v2769 = vlaneseq
    %v2770 = vshrl.u32 %v2769, 7
    %v2771 = vsub.s32 %v2768, %v2770
    %v2772 = vrot.slane %v2756, %v2771
    %v2774 = vunpack.c.l.s4 1966171168
    %v2775 = vunpack.c.0.s8 %v2774
    %v2776 = vlaneseq
    %v2777 = vshrl.u32 %v2776, 7
    %v2778 = vsub.s32 %v2775, %v2777
    %v2779 = vrot.slane %v2757, %v2778
    %v2781 = vunpack.c.l.s4 1966171168
    %v2782 = vunpack.c.0.s8 %v2781
    %v2783 = vlaneseq
    %v2784 = vshrl.u32 %v2783, 7
    %v2785 = vsub.s32 %v2782, %v2784
    %v2786 = vrot.slane %v2758, %v2785
    %v2787 = vcombine.low %v2765, %v2772
    %v2788 = vcombine.low %v2779, %v2786
    %v2790 = vunpack.c.l.s4 1966171168
    %v2791 = vunpack.c.0.s8 %v2790
    %v2792 = vlaneseq
    %v2793 = vshrl.u32 %v2792, 7
    %v2794 = vsub.s32 %v2791, %v2793
    %v2795 = vrot.slane %v2787, %v2794
    %v2797 = vunpack.c.l.s4 1966171168
    %v2798 = vunpack.c.0.s8 %v2797
    %v2799 = vlaneseq
    %v2800 = vshrl.u32 %v2799, 7
    %v2801 = vsub.s32 %v2798, %v2800
    %v2802 = vrot.slane %v2788, %v2801
    %v2803 = vcombine.low %v2795, %v2802
    %v2804 = vcombine.low %v1103, %v1104
    %v2805 = vcombine.low %v1105, %v1106
    %v2806 = vcombine.low %v1107, %v1108
    %v2807 = vcombine.low %v1109, %v1110
    %v2809 = vunpack.c.l.s4 1966171168
    %v2810 = vunpack.c.0.s8 %v2809
    %v2811 = vlaneseq
    %v2812 = vshrl.u32 %v2811, 7
    %v2813 = vsub.s32 %v2810, %v2812
    %v2814 = vrot.slane %v2804, %v2813
    %v2816 = vunpack.c.l.s4 1966171168
    %v2817 = vunpack.c.0.s8 %v2816
    %v2818 = vlaneseq
    %v2819 = vshrl.u32 %v2818, 7
    %v2820 = vsub.s32 %v2817, %v2819
    %v2821 = vrot.slane %v2805, %v2820
    %v2823 = vunpack.c.l.s4 1966171168
    %v2824 = vunpack.c.0.s8 %v2823
    %v2825 = vlaneseq
    %v2826 = vshrl.u32 %v2825, 7
    %v2827 = vsub.s32 %v2824, %v2826
    %v2828 = vrot.slane %v2806, %v2827
    %v2830 = vunpack.c.l.s4 1966171168
    %v2831 = vunpack.c.0.s8 %v2830
    %v2832 = vlaneseq
    %v2833 = vshrl.u32 %v2832, 7
    %v2834 = vsub.s32 %v2831, %v2833
    %v2835 = vrot.slane %v2807, %v2834
    %v2836 = vcombine.low %v2814, %v2821
    %v2837 = vcombine.low %v2828, %v2835
    %v2839 = vunpack.c.l.s4 1966171168
    %v2840 = vunpack.c.0.s8 %v2839
    %v2841 = vlaneseq
    %v2842 = vshrl.u32 %v2841, 7
    %v2843 = vsub.s32 %v2840, %v2842
    %v2844 = vrot.slane %v2836, %v2843
    %v2846 = vunpack.c.l.s4 1966171168
    %v2847 = vunpack.c.0.s8 %v2846
    %v2848 = vlaneseq
    %v2849 = vshrl.u32 %v2848, 7
    %v2850 = vsub.s32 %v2847, %v2849
    %v2851 = vrot.slane %v2837, %v2850
    %v2852 = vcombine.low %v2844, %v2851
    %v2853 = vcombine.low %v1111, %v1112
    %v2854 = vcombine.low %v1113, %v1114
    %v2855 = vcombine.low %v1115, %v1116
    %v2856 = vcombine.low %v1117, %v1118
    %v2858 = vunpack.c.l.s4 1966171168
    %v2859 = vunpack.c.0.s8 %v2858
    %v2860 = vlaneseq
    %v2861 = vshrl.u32 %v2860, 7
    %v2862 = vsub.s32 %v2859, %v2861
    %v2863 = vrot.slane %v2853, %v2862
    %v2865 = vunpack.c.l.s4 1966171168
    %v2866 = vunpack.c.0.s8 %v2865
    %v2867 = vlaneseq
    %v2868 = vshrl.u32 %v2867, 7
    %v2869 = vsub.s32 %v2866, %v2868
    %v2870 = vrot.slane %v2854, %v2869
    %v2872 = vunpack.c.l.s4 1966171168
    %v2873 = vunpack.c.0.s8 %v2872
    %v2874 = vlaneseq
    %v2875 = vshrl.u32 %v2874, 7
    %v2876 = vsub.s32 %v2873, %v2875
    %v2877 = vrot.slane %v2855, %v2876
    %v2879 = vunpack.c.l.s4 1966171168
    %v2880 = vunpack.c.0.s8 %v2879
    %v2881 = vlaneseq
    %v2882 = vshrl.u32 %v2881, 7
    %v2883 = vsub.s32 %v2880, %v2882
    %v2884 = vrot.slane %v2856, %v2883
    %v2885 = vcombine.low %v2863, %v2870
    %v2886 = vcombine.low %v2877, %v2884
    %v2888 = vunpack.c.l.s4 1966171168
    %v2889 = vunpack.c.0.s8 %v2888
    %v2890 = vlaneseq
    %v2891 = vshrl.u32 %v2890, 7
    %v2892 = vsub.s32 %v2889, %v2891
    %v2893 = vrot.slane %v2885, %v2892
    %v2895 = vunpack.c.l.s4 1966171168
    %v2896 = vunpack.c.0.s8 %v2895
    %v2897 = vlaneseq
    %v2898 = vshrl.u32 %v2897, 7
    %v2899 = vsub.s32 %v2896, %v2898
    %v2900 = vrot.slane %v2886, %v2899
    %v2901 = vcombine.low %v2893, %v2900
    %v2902 = vcombine.low %v1119, %v1120
    %v2903 = vcombine.low %v1121, %v1122
    %v2904 = vcombine.low %v1123, %v1124
    %v2905 = vcombine.low %v1125, %v1126
    %v2907 = vunpack.c.l.s4 1966171168
    %v2908 = vunpack.c.0.s8 %v2907
    %v2909 = vlaneseq
    %v2910 = vshrl.u32 %v2909, 7
    %v2911 = vsub.s32 %v2908, %v2910
    %v2912 = vrot.slane %v2902, %v2911
    %v2914 = vunpack.c.l.s4 1966171168
    %v2915 = vunpack.c.0.s8 %v2914
    %v2916 = vlaneseq
    %v2917 = vshrl.u32 %v2916, 7
    %v2918 = vsub.s32 %v2915, %v2917
    %v2919 = vrot.slane %v2903, %v2918
    %v2921 = vunpack.c.l.s4 1966171168
    %v2922 = vunpack.c.0.s8 %v2921
    %v2923 = vlaneseq
    %v2924 = vshrl.u32 %v2923, 7
    %v2925 = vsub.s32 %v2922, %v2924
    %v2926 = vrot.slane %v2904, %v2925
    %v2928 = vunpack.c.l.s4 1966171168
    %v2929 = vunpack.c.0.s8 %v2928
    %v2930 = vlaneseq
    %v2931 = vshrl.u32 %v2930, 7
    %v2932 = vsub.s32 %v2929, %v2931
    %v2933 = vrot.slane %v2905, %v2932
    %v2934 = vcombine.low %v2912, %v2919
    %v2935 = vcombine.low %v2926, %v2933
    %v2937 = vunpack.c.l.s4 1966171168
    %v2938 = vunpack.c.0.s8 %v2937
    %v2939 = vlaneseq
    %v2940 = vshrl.u32 %v2939, 7
    %v2941 = vsub.s32 %v2938, %v2940
    %v2942 = vrot.slane %v2934, %v2941
    %v2944 = vunpack.c.l.s4 1966171168
    %v2945 = vunpack.c.0.s8 %v2944
    %v2946 = vlaneseq
    %v2947 = vshrl.u32 %v2946, 7
    %v2948 = vsub.s32 %v2945, %v2947
    %v2949 = vrot.slane %v2935, %v2948
    %v2950 = vcombine.low %v2942, %v2949
    %v2983 = vld [vmem:[#allocation14] sm:$0xff]
    %v2984 = vld [vmem:[#allocation14 + $0x8] sm:$0xff]
    %v2985 = vld [vmem:[#allocation14 + $0x10] sm:$0xff]
    %v2986 = vld [vmem:[#allocation14 + $0x18] sm:$0xff]
    %v2987 = vld [vmem:[#allocation14 + $0x20] sm:$0xff]
    %v2988 = vld [vmem:[#allocation14 + $0x28] sm:$0xff]
    %v2989 = vld [vmem:[#allocation14 + $0x30] sm:$0xff]
    %v2990 = vld [vmem:[#allocation14 + $0x38] sm:$0xff]
    %v2991 = vld [vmem:[#allocation14 + $0x40] sm:$0xff]
    %v2992 = vld [vmem:[#allocation14 + $0x48] sm:$0xff]
    %v2993 = vld [vmem:[#allocation14 + $0x50] sm:$0xff]
    %v2994 = vld [vmem:[#allocation14 + $0x58] sm:$0xff]
    %v2995 = vld [vmem:[#allocation14 + $0x60] sm:$0xff]
    %v2996 = vld [vmem:[#allocation14 + $0x68] sm:$0xff]
    %v2997 = vld [vmem:[#allocation14 + $0x70] sm:$0xff]
    %v2998 = vld [vmem:[#allocation14 + $0x78] sm:$0xff]
    %v2999 = vld [vmem:[#allocation14 + $0x80] sm:$0xff]
    %v3000 = vld [vmem:[#allocation14 + $0x88] sm:$0xff]
    %v3001 = vld [vmem:[#allocation14 + $0x90] sm:$0xff]
    %v3002 = vld [vmem:[#allocation14 + $0x98] sm:$0xff]
    %v3003 = vld [vmem:[#allocation14 + $0xa0] sm:$0xff]
    %v3004 = vld [vmem:[#allocation14 + $0xa8] sm:$0xff]
    %v3005 = vld [vmem:[#allocation14 + $0xb0] sm:$0xff]
    %v3006 = vld [vmem:[#allocation14 + $0xb8] sm:$0xff]
    %v3007 = vld [vmem:[#allocation14 + $0xc0] sm:$0xff]
    %v3008 = vld [vmem:[#allocation14 + $0xc8] sm:$0xff]
    %v3009 = vld [vmem:[#allocation14 + $0xd0] sm:$0xff]
    %v3010 = vld [vmem:[#allocation14 + $0xd8] sm:$0xff]
    %v3011 = vld [vmem:[#allocation14 + $0xe0] sm:$0xff]
    %v3012 = vld [vmem:[#allocation14 + $0xe8] sm:$0xff]
    %v3013 = vld [vmem:[#allocation14 + $0xf0] sm:$0xff]
    %v3014 = vld [vmem:[#allocation14 + $0xf8] sm:$0xff]
    %v3015 = vld [vmem:[#allocation14 + $0x100] sm:$0xff]
    %v3016 = vld [vmem:[#allocation14 + $0x108] sm:$0xff]
    %v3017 = vld [vmem:[#allocation14 + $0x110] sm:$0xff]
    %v3018 = vld [vmem:[#allocation14 + $0x118] sm:$0xff]
    %v3019 = vld [vmem:[#allocation14 + $0x120] sm:$0xff]
    %v3020 = vld [vmem:[#allocation14 + $0x128] sm:$0xff]
    %v3021 = vld [vmem:[#allocation14 + $0x130] sm:$0xff]
    %v3022 = vld [vmem:[#allocation14 + $0x138] sm:$0xff]
    %v3023 = vld [vmem:[#allocation14 + $0x140] sm:$0xff]
    %v3024 = vld [vmem:[#allocation14 + $0x148] sm:$0xff]
    %v3025 = vld [vmem:[#allocation14 + $0x150] sm:$0xff]
    %v3026 = vld [vmem:[#allocation14 + $0x158] sm:$0xff]
    %v3027 = vld [vmem:[#allocation14 + $0x160] sm:$0xff]
    %v3028 = vld [vmem:[#allocation14 + $0x168] sm:$0xff]
    %v3029 = vld [vmem:[#allocation14 + $0x170] sm:$0xff]
    %v3030 = vld [vmem:[#allocation14 + $0x178] sm:$0xff]
    %v3031 = vld [vmem:[#allocation14 + $0x180] sm:$0xff]
    %v3032 = vld [vmem:[#allocation14 + $0x188] sm:$0xff]
    %v3033 = vld [vmem:[#allocation14 + $0x190] sm:$0xff]
    %v3034 = vld [vmem:[#allocation14 + $0x198] sm:$0xff]
    %v3035 = vld [vmem:[#allocation14 + $0x1a0] sm:$0xff]
    %v3036 = vld [vmem:[#allocation14 + $0x1a8] sm:$0xff]
    %v3037 = vld [vmem:[#allocation14 + $0x1b0] sm:$0xff]
    %v3038 = vld [vmem:[#allocation14 + $0x1b8] sm:$0xff]
    %v3039 = vld [vmem:[#allocation14 + $0x1c0] sm:$0xff]
    %v3040 = vld [vmem:[#allocation14 + $0x1c8] sm:$0xff]
    %v3041 = vld [vmem:[#allocation14 + $0x1d0] sm:$0xff]
    %v3042 = vld [vmem:[#allocation14 + $0x1d8] sm:$0xff]
    %v3043 = vld [vmem:[#allocation14 + $0x1e0] sm:$0xff]
    %v3044 = vld [vmem:[#allocation14 + $0x1e8] sm:$0xff]
    %v3045 = vld [vmem:[#allocation14 + $0x1f0] sm:$0xff]
    %v3046 = vld [vmem:[#allocation14 + $0x1f8] sm:$0xff]
    %v3047 = vld [vmem:[#allocation14 + $0x200] sm:$0xff]
    %v3048 = vld [vmem:[#allocation14 + $0x208] sm:$0xff]
    %v3049 = vld [vmem:[#allocation14 + $0x210] sm:$0xff]
    %v3050 = vld [vmem:[#allocation14 + $0x218] sm:$0xff]
    %v3051 = vld [vmem:[#allocation14 + $0x220] sm:$0xff]
    %v3052 = vld [vmem:[#allocation14 + $0x228] sm:$0xff]
    %v3053 = vld [vmem:[#allocation14 + $0x230] sm:$0xff]
    %v3054 = vld [vmem:[#allocation14 + $0x238] sm:$0xff]
    %v3055 = vld [vmem:[#allocation14 + $0x240] sm:$0xff]
    %v3056 = vld [vmem:[#allocation14 + $0x248] sm:$0xff]
    %v3057 = vld [vmem:[#allocation14 + $0x250] sm:$0xff]
    %v3058 = vld [vmem:[#allocation14 + $0x258] sm:$0xff]
    %v3059 = vld [vmem:[#allocation14 + $0x260] sm:$0xff]
    %v3060 = vld [vmem:[#allocation14 + $0x268] sm:$0xff]
    %v3061 = vld [vmem:[#allocation14 + $0x270] sm:$0xff]
    %v3062 = vld [vmem:[#allocation14 + $0x278] sm:$0xff]
    %v3063 = vld [vmem:[#allocation14 + $0x280] sm:$0xff]
    %v3064 = vld [vmem:[#allocation14 + $0x288] sm:$0xff]
    %v3065 = vld [vmem:[#allocation14 + $0x290] sm:$0xff]
    %v3066 = vld [vmem:[#allocation14 + $0x298] sm:$0xff]
    %v3067 = vld [vmem:[#allocation14 + $0x2a0] sm:$0xff]
    %v3068 = vld [vmem:[#allocation14 + $0x2a8] sm:$0xff]
    %v3069 = vld [vmem:[#allocation14 + $0x2b0] sm:$0xff]
    %v3070 = vld [vmem:[#allocation14 + $0x2b8] sm:$0xff]
    %v3071 = vld [vmem:[#allocation14 + $0x2c0] sm:$0xff]
    %v3072 = vld [vmem:[#allocation14 + $0x2c8] sm:$0xff]
    %v3073 = vld [vmem:[#allocation14 + $0x2d0] sm:$0xff]
    %v3074 = vld [vmem:[#allocation14 + $0x2d8] sm:$0xff]
    %v3075 = vld [vmem:[#allocation14 + $0x2e0] sm:$0xff]
    %v3076 = vld [vmem:[#allocation14 + $0x2e8] sm:$0xff]
    %v3077 = vld [vmem:[#allocation14 + $0x2f0] sm:$0xff]
    %v3078 = vld [vmem:[#allocation14 + $0x2f8] sm:$0xff]
    %v3079 = vld [vmem:[#allocation14 + $0x300] sm:$0xff]
    %v3080 = vld [vmem:[#allocation14 + $0x308] sm:$0xff]
    %v3081 = vld [vmem:[#allocation14 + $0x310] sm:$0xff]
    %v3082 = vld [vmem:[#allocation14 + $0x318] sm:$0xff]
    %v3083 = vld [vmem:[#allocation14 + $0x320] sm:$0xff]
    %v3084 = vld [vmem:[#allocation14 + $0x328] sm:$0xff]
    %v3085 = vld [vmem:[#allocation14 + $0x330] sm:$0xff]
    %v3086 = vld [vmem:[#allocation14 + $0x338] sm:$0xff]
    %v3087 = vld [vmem:[#allocation14 + $0x340] sm:$0xff]
    %v3088 = vld [vmem:[#allocation14 + $0x348] sm:$0xff]
    %v3089 = vld [vmem:[#allocation14 + $0x350] sm:$0xff]
    %v3090 = vld [vmem:[#allocation14 + $0x358] sm:$0xff]
    %v3091 = vld [vmem:[#allocation14 + $0x360] sm:$0xff]
    %v3092 = vld [vmem:[#allocation14 + $0x368] sm:$0xff]
    %v3093 = vld [vmem:[#allocation14 + $0x370] sm:$0xff]
    %v3094 = vld [vmem:[#allocation14 + $0x378] sm:$0xff]
    %v3095 = vld [vmem:[#allocation14 + $0x380] sm:$0xff]
    %v3096 = vld [vmem:[#allocation14 + $0x388] sm:$0xff]
    %v3097 = vld [vmem:[#allocation14 + $0x390] sm:$0xff]
    %v3098 = vld [vmem:[#allocation14 + $0x398] sm:$0xff]
    %v3099 = vld [vmem:[#allocation14 + $0x3a0] sm:$0xff]
    %v3100 = vld [vmem:[#allocation14 + $0x3a8] sm:$0xff]
    %v3101 = vld [vmem:[#allocation14 + $0x3b0] sm:$0xff]
    %v3102 = vld [vmem:[#allocation14 + $0x3b8] sm:$0xff]
    %v3103 = vld [vmem:[#allocation14 + $0x3c0] sm:$0xff]
    %v3104 = vld [vmem:[#allocation14 + $0x3c8] sm:$0xff]
    %v3105 = vld [vmem:[#allocation14 + $0x3d0] sm:$0xff]
    %v3106 = vld [vmem:[#allocation14 + $0x3d8] sm:$0xff]
    %v3107 = vld [vmem:[#allocation14 + $0x3e0] sm:$0xff]
    %v3108 = vld [vmem:[#allocation14 + $0x3e8] sm:$0xff]
    %v3109 = vld [vmem:[#allocation14 + $0x3f0] sm:$0xff]
    %v3110 = vld [vmem:[#allocation14 + $0x3f8] sm:$0xff]
    %v3111 = vld [vmem:[%s10] sm:$0xf]
    %v3113 = vlaneseq
    %v3114 = vshrl.u32 %v3113, 7
    %v3115 = vsub.s32 0, %v3114
    %v3116 = vrot.slane %v3111, %v3115
    %v3117 = vlaneseq
    %v3118 = vshrl.u32 %v3117, 7
    %v3119 = vsub.s32 1, %v3118
    %v3120 = vrot.slane %v3111, %v3119
    %v3121 = vlaneseq
    %v3122 = vshrl.u32 %v3121, 7
    %v3123 = vsub.s32 2, %v3122
    %v3124 = vrot.slane %v3111, %v3123
    %v3125 = vlaneseq
    %v3126 = vshrl.u32 %v3125, 7
    %v3127 = vsub.s32 3, %v3126
    %v3128 = vrot.slane %v3111, %v3127
    %3133 = vmatprep.subr.mxu0 %v3044
    %3134 = vmatpush1.msra.mxu0 %v3043
    %3135 = vmatprep.subr.mxu0 %v3040
    %3136 = vmatpush1.msra.mxu0 %v3039
    %3137 = vmatprep.subr.mxu0 %v3036
    %3138 = vmatpush1.msra.mxu0 %v3035
    %3139 = vmatprep.subr.mxu0 %v3032
    %3140 = vmatpush1.msra.mxu0 %v3031
    %3141 = vmatprep.subr.mxu0 %v3028
    %3142 = vmatpush1.msra.mxu0 %v3027
    %3143 = vmatprep.subr.mxu0 %v3024
    %3144 = vmatpush1.msra.mxu0 %v3023
    %3145 = vmatprep.subr.mxu0 %v3020
    %3146 = vmatpush1.msra.mxu0 %v3019
    %3147 = vmatprep.subr.mxu0 %v3016
    %3148 = vmatpush1.msra.mxu0 %v3015
    %3149 = vmatprep.subr.mxu0 %v3012
    %3150 = vmatpush1.msra.mxu0 %v3011
    %3151 = vmatprep.subr.mxu0 %v3008
    %3152 = vmatpush1.msra.mxu0 %v3007
    %3153 = vmatprep.subr.mxu0 %v3004
    %3154 = vmatpush1.msra.mxu0 %v3003
    %3155 = vmatprep.subr.mxu0 %v3000
    %3156 = vmatpush1.msra.mxu0 %v2999
    %3157 = vmatprep.subr.mxu0 %v2996
    %3158 = vmatpush1.msra.mxu0 %v2995
    %3159 = vmatprep.subr.mxu0 %v2992
    %3160 = vmatpush1.msra.mxu0 %v2991
    %3161 = vmatprep.subr.mxu0 %v2988
    %3162 = vmatpush1.msra.mxu0 %v2987
    %3163 = vmatprep.subr.mxu0 %v2984
    %3164 = vmatpush1.msra.mxu0 %v2983
    %3165 = vmatprep.subr.mxu0 %v3108
    %3166 = vmatpush2.msra.mxu0 %v3107
    %3167 = vmatprep.subr.mxu0 %v3104
    %3168 = vmatpush2.msra.mxu0 %v3103
    %3169 = vmatprep.subr.mxu0 %v3100
    %3170 = vmatpush2.msra.mxu0 %v3099
    %3171 = vmatprep.subr.mxu0 %v3096
    %3172 = vmatpush2.msra.mxu0 %v3095
    %3173 = vmatprep.subr.mxu0 %v3092
    %3174 = vmatpush2.msra.mxu0 %v3091
    %3175 = vmatprep.subr.mxu0 %v3088
    %3176 = vmatpush2.msra.mxu0 %v3087
    %3177 = vmatprep.subr.mxu0 %v3084
    %3178 = vmatpush2.msra.mxu0 %v3083
    %3179 = vmatprep.subr.mxu0 %v3080
    %3180 = vmatpush2.msra.mxu0 %v3079
    %3181 = vmatprep.subr.mxu0 %v3076
    %3182 = vmatpush2.msra.mxu0 %v3075
    %3183 = vmatprep.subr.mxu0 %v3072
    %3184 = vmatpush2.msra.mxu0 %v3071
    %3185 = vmatprep.subr.mxu0 %v3068
    %3186 = vmatpush2.msra.mxu0 %v3067
    %3187 = vmatprep.subr.mxu0 %v3064
    %3188 = vmatpush2.msra.mxu0 %v3063
    %3189 = vmatprep.subr.mxu0 %v3060
    %3190 = vmatpush2.msra.mxu0 %v3059
    %3191 = vmatprep.subr.mxu0 %v3056
    %3192 = vmatpush2.msra.mxu0 %v3055
    %3193 = vmatprep.subr.mxu0 %v3052
    %3194 = vmatpush2.msra.mxu0 %v3051
    %3195 = vmatprep.subr.mxu0 %v3048
    %3196 = vmatpush2.msra.mxu0 %v3047
    %3197 = vmatprep.mubr.f32.mxu0 %v479
    %3198 = vmatmul.mubr.f32.gmra.mxu0 %v1431
    %v3199 = vpop.f32.mrf.mxu0
    %v3200 = vadd.f32 %v3116, %v3199
    %v3201 = vpop.f32.mrf.mxu0
    %v3202 = vadd.f32 %v3120, %v3201
    %3203 = vmatprep.mubr.f32.mxu0 %v480
    %3204 = vmatmul.mubr.f32.gmra.mxu0 %v1480
    %v3205 = vpop.f32.mrf.mxu0
    %v3206 = vadd.f32 %v3116, %v3205
    %v3207 = vpop.f32.mrf.mxu0
    %v3208 = vadd.f32 %v3120, %v3207
    %3209 = vmatprep.mubr.f32.mxu0 %v481
    %3210 = vmatmul.mubr.f32.gmra.mxu0 %v1529
    %v3211 = vpop.f32.mrf.mxu0
    %v3212 = vadd.f32 %v3116, %v3211
    %v3213 = vpop.f32.mrf.mxu0
    %v3214 = vadd.f32 %v3120, %v3213
    %3215 = vmatprep.mubr.f32.mxu0 %v482
    %3216 = vmatmul.mubr.f32.gmra.mxu0 %v1578
    %v3217 = vpop.f32.mrf.mxu0
    %v3218 = vadd.f32 %v3116, %v3217
    %v3219 = vpop.f32.mrf.mxu0
    %v3220 = vadd.f32 %v3120, %v3219
    %3221 = vmatprep.mubr.f32.mxu0 %v483
    %3222 = vmatmul.mubr.f32.gmra.mxu0 %v1627
    %v3223 = vpop.f32.mrf.mxu0
    %v3224 = vadd.f32 %v3116, %v3223
    %v3225 = vpop.f32.mrf.mxu0
    %v3226 = vadd.f32 %v3120, %v3225
    %3227 = vmatprep.mubr.f32.mxu0 %v484
    %3228 = vmatmul.mubr.f32.gmra.mxu0 %v1676
    %v3229 = vpop.f32.mrf.mxu0
    %v3230 = vadd.f32 %v3116, %v3229
    %v3231 = vpop.f32.mrf.mxu0
    %v3232 = vadd.f32 %v3120, %v3231
    %3233 = vmatprep.mubr.f32.mxu0 %v485
    %3234 = vmatmul.mubr.f32.gmra.mxu0 %v1725
    %v3235 = vpop.f32.mrf.mxu0
    %v3236 = vadd.f32 %v3116, %v3235
    %v3237 = vpop.f32.mrf.mxu0
    %v3238 = vadd.f32 %v3120, %v3237
    %3239 = vmatprep.mubr.f32.mxu0 %v486
    %3240 = vmatmul.mubr.f32.gmra.mxu0 %v1774
    %v3241 = vpop.f32.mrf.mxu0
    %v3242 = vadd.f32 %v3116, %v3241
    %v3243 = vpop.f32.mrf.mxu0
    %v3244 = vadd.f32 %v3120, %v3243
    %3245 = vmatprep.mubr.f32.mxu0 %v487
    %3246 = vmatmul.mubr.f32.gmra.mxu0 %v1823
    %v3247 = vpop.f32.mrf.mxu0
    %v3248 = vadd.f32 %v3116, %v3247
    %v3249 = vpop.f32.mrf.mxu0
    %v3250 = vadd.f32 %v3120, %v3249
    %3251 = vmatprep.mubr.f32.mxu0 %v488
    %3252 = vmatmul.mubr.f32.gmra.mxu0 %v1872
    %v3253 = vpop.f32.mrf.mxu0
    %v3254 = vadd.f32 %v3116, %v3253
    %v3255 = vpop.f32.mrf.mxu0
    %v3256 = vadd.f32 %v3120, %v3255
    %3257 = vmatprep.mubr.f32.mxu0 %v489
    %3258 = vmatmul.mubr.f32.gmra.mxu0 %v1921
    %v3259 = vpop.f32.mrf.mxu0
    %v3260 = vadd.f32 %v3116, %v3259
    %v3261 = vpop.f32.mrf.mxu0
    %v3262 = vadd.f32 %v3120, %v3261
    %3263 = vmatprep.mubr.f32.mxu0 %v490
    %3264 = vmatmul.mubr.f32.gmra.mxu0 %v1970
    %v3265 = vpop.f32.mrf.mxu0
    %v3266 = vadd.f32 %v3116, %v3265
    %v3267 = vpop.f32.mrf.mxu0
    %v3268 = vadd.f32 %v3120, %v3267
    %3269 = vmatprep.mubr.f32.mxu0 %v491
    %3270 = vmatmul.mubr.f32.gmra.mxu0 %v2019
    %v3271 = vpop.f32.mrf.mxu0
    %v3272 = vadd.f32 %v3116, %v3271
    %v3273 = vpop.f32.mrf.mxu0
    %v3274 = vadd.f32 %v3120, %v3273
    %3275 = vmatprep.mubr.f32.mxu0 %v492
    %3276 = vmatmul.mubr.f32.gmra.mxu0 %v2068
    %v3277 = vpop.f32.mrf.mxu0
    %v3278 = vadd.f32 %v3116, %v3277
    %v3279 = vpop.f32.mrf.mxu0
    %v3280 = vadd.f32 %v3120, %v3279
    %3281 = vmatprep.mubr.f32.mxu0 %v493
    %3282 = vmatmul.mubr.f32.gmra.mxu0 %v2117
    %v3283 = vpop.f32.mrf.mxu0
    %v3284 = vadd.f32 %v3116, %v3283
    %v3285 = vpop.f32.mrf.mxu0
    %v3286 = vadd.f32 %v3120, %v3285
    %3287 = vmatprep.mubr.f32.mxu0 %v494
    %3288 = vmatmul.mubr.f32.gmra.mxu0 %v2166
    %v3289 = vpop.f32.mrf.mxu0
    %v3290 = vadd.f32 %v3116, %v3289
    %v3291 = vpop.f32.mrf.mxu0
    %v3292 = vadd.f32 %v3120, %v3291
    %3293 = vmatprep.mubr.f32.mxu0 %v495
    %3294 = vmatmul.mubr.f32.gmra.mxu0 %v2215
    %v3295 = vpop.f32.mrf.mxu0
    %v3296 = vadd.f32 %v3116, %v3295
    %v3297 = vpop.f32.mrf.mxu0
    %v3298 = vadd.f32 %v3120, %v3297
    %3299 = vmatprep.mubr.f32.mxu0 %v496
    %3300 = vmatmul.mubr.f32.gmra.mxu0 %v2264
    %v3301 = vpop.f32.mrf.mxu0
    %v3302 = vadd.f32 %v3116, %v3301
    %v3303 = vpop.f32.mrf.mxu0
    %v3304 = vadd.f32 %v3120, %v3303
    %3305 = vmatprep.mubr.f32.mxu0 %v497
    %3306 = vmatmul.mubr.f32.gmra.mxu0 %v2313
    %v3307 = vpop.f32.mrf.mxu0
    %v3308 = vadd.f32 %v3116, %v3307
    %v3309 = vpop.f32.mrf.mxu0
    %v3310 = vadd.f32 %v3120, %v3309
    %3311 = vmatprep.mubr.f32.mxu0 %v498
    %3312 = vmatmul.mubr.f32.gmra.mxu0 %v2362
    %v3313 = vpop.f32.mrf.mxu0
    %v3314 = vadd.f32 %v3116, %v3313
    %v3315 = vpop.f32.mrf.mxu0
    %v3316 = vadd.f32 %v3120, %v3315
    %3317 = vmatprep.mubr.f32.mxu0 %v499
    %3318 = vmatmul.mubr.f32.gmra.mxu0 %v2411
    %v3319 = vpop.f32.mrf.mxu0
    %v3320 = vadd.f32 %v3116, %v3319
    %v3321 = vpop.f32.mrf.mxu0
    %v3322 = vadd.f32 %v3120, %v3321
    %3323 = vmatprep.mubr.f32.mxu0 %v500
    %3324 = vmatmul.mubr.f32.gmra.mxu0 %v2460
    %v3325 = vpop.f32.mrf.mxu0
    %v3326 = vadd.f32 %v3116, %v3325
    %v3327 = vpop.f32.mrf.mxu0
    %v3328 = vadd.f32 %v3120, %v3327
    %3329 = vmatprep.mubr.f32.mxu0 %v501
    %3330 = vmatmul.mubr.f32.gmra.mxu0 %v2509
    %v3331 = vpop.f32.mrf.mxu0
    %v3332 = vadd.f32 %v3116, %v3331
    %v3333 = vpop.f32.mrf.mxu0
    %v3334 = vadd.f32 %v3120, %v3333
    %3335 = vmatprep.mubr.f32.mxu0 %v502
    %3336 = vmatmul.mubr.f32.gmra.mxu0 %v2558
    %v3337 = vpop.f32.mrf.mxu0
    %v3338 = vadd.f32 %v3116, %v3337
    %v3339 = vpop.f32.mrf.mxu0
    %v3340 = vadd.f32 %v3120, %v3339
    %3341 = vmatprep.mubr.f32.mxu0 %v503
    %3342 = vmatmul.mubr.f32.gmra.mxu0 %v2607
    %v3343 = vpop.f32.mrf.mxu0
    %v3344 = vadd.f32 %v3116, %v3343
    %v3345 = vpop.f32.mrf.mxu0
    %v3346 = vadd.f32 %v3120, %v3345
    %3347 = vmatprep.mubr.f32.mxu0 %v504
    %3348 = vmatmul.mubr.f32.gmra.mxu0 %v2656
    %v3349 = vpop.f32.mrf.mxu0
    %v3350 = vadd.f32 %v3116, %v3349
    %v3351 = vpop.f32.mrf.mxu0
    %v3352 = vadd.f32 %v3120, %v3351
    %3353 = vmatprep.mubr.f32.mxu0 %v505
    %3354 = vmatmul.mubr.f32.gmra.mxu0 %v2705
    %v3355 = vpop.f32.mrf.mxu0
    %v3356 = vadd.f32 %v3116, %v3355
    %v3357 = vpop.f32.mrf.mxu0
    %v3358 = vadd.f32 %v3120, %v3357
    %3359 = vmatprep.mubr.f32.mxu0 %v506
    %3360 = vmatmul.mubr.f32.gmra.mxu0 %v2754
    %v3361 = vpop.f32.mrf.mxu0
    %v3362 = vadd.f32 %v3116, %v3361
    %v3363 = vpop.f32.mrf.mxu0
    %v3364 = vadd.f32 %v3120, %v3363
    %3365 = vmatprep.mubr.f32.mxu0 %v507
    %3366 = vmatmul.mubr.f32.gmra.mxu0 %v2803
    %v3367 = vpop.f32.mrf.mxu0
    %v3368 = vadd.f32 %v3116, %v3367
    %v3369 = vpop.f32.mrf.mxu0
    %v3370 = vadd.f32 %v3120, %v3369
    %3371 = vmatprep.mubr.f32.mxu0 %v508
    %3372 = vmatmul.mubr.f32.gmra.mxu0 %v2852
    %v3373 = vpop.f32.mrf.mxu0
    %v3374 = vadd.f32 %v3116, %v3373
    %v3375 = vpop.f32.mrf.mxu0
    %v3376 = vadd.f32 %v3120, %v3375
    %3377 = vmatprep.mubr.f32.mxu0 %v509
    %3378 = vmatmul.mubr.f32.gmra.mxu0 %v2901
    %v3379 = vpop.f32.mrf.mxu0
    %v3380 = vadd.f32 %v3116, %v3379
    %v3381 = vpop.f32.mrf.mxu0
    %v3382 = vadd.f32 %v3120, %v3381
    %3383 = vmatprep.mubr.f32.mxu0 %v510
    %3384 = vmatmul.mubr.f32.gmra.mxu0 %v2950
    %v3385 = vpop.f32.mrf.mxu0
    %v3386 = vadd.f32 %v3116, %v3385
    %v3387 = vpop.f32.mrf.mxu0
    %v3388 = vadd.f32 %v3120, %v3387
    %3389 = vdwg.mxu0
    %3390 = vmatprep.subr.mxu0 %v3046
    %3391 = vmatpush1.msra.mxu0 %v3045
    %3392 = vmatprep.subr.mxu0 %v3042
    %3393 = vmatpush1.msra.mxu0 %v3041
    %3394 = vmatprep.subr.mxu0 %v3038
    %3395 = vmatpush1.msra.mxu0 %v3037
    %3396 = vmatprep.subr.mxu0 %v3034
    %3397 = vmatpush1.msra.mxu0 %v3033
    %3398 = vmatprep.subr.mxu0 %v3030
    %3399 = vmatpush1.msra.mxu0 %v3029
    %3400 = vmatprep.subr.mxu0 %v3026
    %3401 = vmatpush1.msra.mxu0 %v3025
    %3402 = vmatprep.subr.mxu0 %v3022
    %3403 = vmatpush1.msra.mxu0 %v3021
    %3404 = vmatprep.subr.mxu0 %v3018
    %3405 = vmatpush1.msra.mxu0 %v3017
    %3406 = vmatprep.subr.mxu0 %v3014
    %3407 = vmatpush1.msra.mxu0 %v3013
    %3408 = vmatprep.subr.mxu0 %v3010
    %3409 = vmatpush1.msra.mxu0 %v3009
    %3410 = vmatprep.subr.mxu0 %v3006
    %3411 = vmatpush1.msra.mxu0 %v3005
    %3412 = vmatprep.subr.mxu0 %v3002
    %3413 = vmatpush1.msra.mxu0 %v3001
    %3414 = vmatprep.subr.mxu0 %v2998
    %3415 = vmatpush1.msra.mxu0 %v2997
    %3416 = vmatprep.subr.mxu0 %v2994
    %3417 = vmatpush1.msra.mxu0 %v2993
    %3418 = vmatprep.subr.mxu0 %v2990
    %3419 = vmatpush1.msra.mxu0 %v2989
    %3420 = vmatprep.subr.mxu0 %v2986
    %3421 = vmatpush1.msra.mxu0 %v2985
    %3422 = vmatprep.subr.mxu0 %v3110
    %3423 = vmatpush2.msra.mxu0 %v3109
    %3424 = vmatprep.subr.mxu0 %v3106
    %3425 = vmatpush2.msra.mxu0 %v3105
    %3426 = vmatprep.subr.mxu0 %v3102
    %3427 = vmatpush2.msra.mxu0 %v3101
    %3428 = vmatprep.subr.mxu0 %v3098
    %3429 = vmatpush2.msra.mxu0 %v3097
    %3430 = vmatprep.subr.mxu0 %v3094
    %3431 = vmatpush2.msra.mxu0 %v3093
    %3432 = vmatprep.subr.mxu0 %v3090
    %3433 = vmatpush2.msra.mxu0 %v3089
    %3434 = vmatprep.subr.mxu0 %v3086
    %3435 = vmatpush2.msra.mxu0 %v3085
    %3436 = vmatprep.subr.mxu0 %v3082
    %3437 = vmatpush2.msra.mxu0 %v3081
    %3438 = vmatprep.subr.mxu0 %v3078
    %3439 = vmatpush2.msra.mxu0 %v3077
    %3440 = vmatprep.subr.mxu0 %v3074
    %3441 = vmatpush2.msra.mxu0 %v3073
    %3442 = vmatprep.subr.mxu0 %v3070
    %3443 = vmatpush2.msra.mxu0 %v3069
    %3444 = vmatprep.subr.mxu0 %v3066
    %3445 = vmatpush2.msra.mxu0 %v3065
    %3446 = vmatprep.subr.mxu0 %v3062
    %3447 = vmatpush2.msra.mxu0 %v3061
    %3448 = vmatprep.subr.mxu0 %v3058
    %3449 = vmatpush2.msra.mxu0 %v3057
    %3450 = vmatprep.subr.mxu0 %v3054
    %3451 = vmatpush2.msra.mxu0 %v3053
    %3452 = vmatprep.subr.mxu0 %v3050
    %3453 = vmatpush2.msra.mxu0 %v3049
    %3454 = vmatprep.mubr.f32.mxu0 %v479
    %3455 = vmatmul.mubr.f32.gmra.mxu0 %v1431
    %v3456 = vpop.f32.mrf.mxu0
    %v3457 = vadd.f32 %v3124, %v3456
    %v3458 = vpop.f32.mrf.mxu0
    %v3459 = vadd.f32 %v3128, %v3458
    %3460 = vmatprep.mubr.f32.mxu0 %v480
    %3461 = vmatmul.mubr.f32.gmra.mxu0 %v1480
    %v3462 = vpop.f32.mrf.mxu0
    %v3463 = vadd.f32 %v3124, %v3462
    %v3464 = vpop.f32.mrf.mxu0
    %v3465 = vadd.f32 %v3128, %v3464
    %3466 = vmatprep.mubr.f32.mxu0 %v481
    %3467 = vmatmul.mubr.f32.gmra.mxu0 %v1529
    %v3468 = vpop.f32.mrf.mxu0
    %v3469 = vadd.f32 %v3124, %v3468
    %v3470 = vpop.f32.mrf.mxu0
    %v3471 = vadd.f32 %v3128, %v3470
    %3472 = vmatprep.mubr.f32.mxu0 %v482
    %3473 = vmatmul.mubr.f32.gmra.mxu0 %v1578
    %v3474 = vpop.f32.mrf.mxu0
    %v3475 = vadd.f32 %v3124, %v3474
    %v3476 = vpop.f32.mrf.mxu0
    %v3477 = vadd.f32 %v3128, %v3476
    %3478 = vmatprep.mubr.f32.mxu0 %v483
    %3479 = vmatmul.mubr.f32.gmra.mxu0 %v1627
    %v3480 = vpop.f32.mrf.mxu0
    %v3481 = vadd.f32 %v3124, %v3480
    %v3482 = vpop.f32.mrf.mxu0
    %v3483 = vadd.f32 %v3128, %v3482
    %3484 = vmatprep.mubr.f32.mxu0 %v484
    %3485 = vmatmul.mubr.f32.gmra.mxu0 %v1676
    %v3486 = vpop.f32.mrf.mxu0
    %v3487 = vadd.f32 %v3124, %v3486
    %v3488 = vpop.f32.mrf.mxu0
    %v3489 = vadd.f32 %v3128, %v3488
    %3490 = vmatprep.mubr.f32.mxu0 %v485
    %3491 = vmatmul.mubr.f32.gmra.mxu0 %v1725
    %v3492 = vpop.f32.mrf.mxu0
    %v3493 = vadd.f32 %v3124, %v3492
    %v3494 = vpop.f32.mrf.mxu0
    %v3495 = vadd.f32 %v3128, %v3494
    %3496 = vmatprep.mubr.f32.mxu0 %v486
    %3497 = vmatmul.mubr.f32.gmra.mxu0 %v1774
    %v3498 = vpop.f32.mrf.mxu0
    %v3499 = vadd.f32 %v3124, %v3498
    %v3500 = vpop.f32.mrf.mxu0
    %v3501 = vadd.f32 %v3128, %v3500
    %3502 = vmatprep.mubr.f32.mxu0 %v487
    %3503 = vmatmul.mubr.f32.gmra.mxu0 %v1823
    %v3504 = vpop.f32.mrf.mxu0
    %v3505 = vadd.f32 %v3124, %v3504
    %v3506 = vpop.f32.mrf.mxu0
    %v3507 = vadd.f32 %v3128, %v3506
    %3508 = vmatprep.mubr.f32.mxu0 %v488
    %3509 = vmatmul.mubr.f32.gmra.mxu0 %v1872
    %v3510 = vpop.f32.mrf.mxu0
    %v3511 = vadd.f32 %v3124, %v3510
    %v3512 = vpop.f32.mrf.mxu0
    %v3513 = vadd.f32 %v3128, %v3512
    %3514 = vmatprep.mubr.f32.mxu0 %v489
    %3515 = vmatmul.mubr.f32.gmra.mxu0 %v1921
    %v3516 = vpop.f32.mrf.mxu0
    %v3517 = vadd.f32 %v3124, %v3516
    %v3518 = vpop.f32.mrf.mxu0
    %v3519 = vadd.f32 %v3128, %v3518
    %3520 = vmatprep.mubr.f32.mxu0 %v490
    %3521 = vmatmul.mubr.f32.gmra.mxu0 %v1970
    %v3522 = vpop.f32.mrf.mxu0
    %v3523 = vadd.f32 %v3124, %v3522
    %v3524 = vpop.f32.mrf.mxu0
    %v3525 = vadd.f32 %v3128, %v3524
    %3526 = vmatprep.mubr.f32.mxu0 %v491
    %3527 = vmatmul.mubr.f32.gmra.mxu0 %v2019
    %v3528 = vpop.f32.mrf.mxu0
    %v3529 = vadd.f32 %v3124, %v3528
    %v3530 = vpop.f32.mrf.mxu0
    %v3531 = vadd.f32 %v3128, %v3530
    %3532 = vmatprep.mubr.f32.mxu0 %v492
    %3533 = vmatmul.mubr.f32.gmra.mxu0 %v2068
    %v3534 = vpop.f32.mrf.mxu0
    %v3535 = vadd.f32 %v3124, %v3534
    %v3536 = vpop.f32.mrf.mxu0
    %v3537 = vadd.f32 %v3128, %v3536
    %3538 = vmatprep.mubr.f32.mxu0 %v493
    %3539 = vmatmul.mubr.f32.gmra.mxu0 %v2117
    %v3540 = vpop.f32.mrf.mxu0
    %v3541 = vadd.f32 %v3124, %v3540
    %v3542 = vpop.f32.mrf.mxu0
    %v3543 = vadd.f32 %v3128, %v3542
    %3544 = vmatprep.mubr.f32.mxu0 %v494
    %3545 = vmatmul.mubr.f32.gmra.mxu0 %v2166
    %v3546 = vpop.f32.mrf.mxu0
    %v3547 = vadd.f32 %v3124, %v3546
    %v3548 = vpop.f32.mrf.mxu0
    %v3549 = vadd.f32 %v3128, %v3548
    %3550 = vmatprep.mubr.f32.mxu0 %v495
    %3551 = vmatmul.mubr.f32.gmra.mxu0 %v2215
    %v3552 = vpop.f32.mrf.mxu0
    %v3553 = vadd.f32 %v3124, %v3552
    %v3554 = vpop.f32.mrf.mxu0
    %v3555 = vadd.f32 %v3128, %v3554
    %3556 = vmatprep.mubr.f32.mxu0 %v496
    %3557 = vmatmul.mubr.f32.gmra.mxu0 %v2264
    %v3558 = vpop.f32.mrf.mxu0
    %v3559 = vadd.f32 %v3124, %v3558
    %v3560 = vpop.f32.mrf.mxu0
    %v3561 = vadd.f32 %v3128, %v3560
    %3562 = vmatprep.mubr.f32.mxu0 %v497
    %3563 = vmatmul.mubr.f32.gmra.mxu0 %v2313
    %v3564 = vpop.f32.mrf.mxu0
    %v3565 = vadd.f32 %v3124, %v3564
    %v3566 = vpop.f32.mrf.mxu0
    %v3567 = vadd.f32 %v3128, %v3566
    %3568 = vmatprep.mubr.f32.mxu0 %v498
    %3569 = vmatmul.mubr.f32.gmra.mxu0 %v2362
    %v3570 = vpop.f32.mrf.mxu0
    %v3571 = vadd.f32 %v3124, %v3570
    %v3572 = vpop.f32.mrf.mxu0
    %v3573 = vadd.f32 %v3128, %v3572
    %3574 = vmatprep.mubr.f32.mxu0 %v499
    %3575 = vmatmul.mubr.f32.gmra.mxu0 %v2411
    %v3576 = vpop.f32.mrf.mxu0
    %v3577 = vadd.f32 %v3124, %v3576
    %v3578 = vpop.f32.mrf.mxu0
    %v3579 = vadd.f32 %v3128, %v3578
    %3580 = vmatprep.mubr.f32.mxu0 %v500
    %3581 = vmatmul.mubr.f32.gmra.mxu0 %v2460
    %v3582 = vpop.f32.mrf.mxu0
    %v3583 = vadd.f32 %v3124, %v3582
    %v3584 = vpop.f32.mrf.mxu0
    %v3585 = vadd.f32 %v3128, %v3584
    %3586 = vmatprep.mubr.f32.mxu0 %v501
    %3587 = vmatmul.mubr.f32.gmra.mxu0 %v2509
    %v3588 = vpop.f32.mrf.mxu0
    %v3589 = vadd.f32 %v3124, %v3588
    %v3590 = vpop.f32.mrf.mxu0
    %v3591 = vadd.f32 %v3128, %v3590
    %3592 = vmatprep.mubr.f32.mxu0 %v502
    %3593 = vmatmul.mubr.f32.gmra.mxu0 %v2558
    %v3594 = vpop.f32.mrf.mxu0
    %v3595 = vadd.f32 %v3124, %v3594
    %v3596 = vpop.f32.mrf.mxu0
    %v3597 = vadd.f32 %v3128, %v3596
    %3598 = vmatprep.mubr.f32.mxu0 %v503
    %3599 = vmatmul.mubr.f32.gmra.mxu0 %v2607
    %v3600 = vpop.f32.mrf.mxu0
    %v3601 = vadd.f32 %v3124, %v3600
    %v3602 = vpop.f32.mrf.mxu0
    %v3603 = vadd.f32 %v3128, %v3602
    %3604 = vmatprep.mubr.f32.mxu0 %v504
    %3605 = vmatmul.mubr.f32.gmra.mxu0 %v2656
    %v3606 = vpop.f32.mrf.mxu0
    %v3607 = vadd.f32 %v3124, %v3606
    %v3608 = vpop.f32.mrf.mxu0
    %v3609 = vadd.f32 %v3128, %v3608
    %3610 = vmatprep.mubr.f32.mxu0 %v505
    %3611 = vmatmul.mubr.f32.gmra.mxu0 %v2705
    %v3612 = vpop.f32.mrf.mxu0
    %v3613 = vadd.f32 %v3124, %v3612
    %v3614 = vpop.f32.mrf.mxu0
    %v3615 = vadd.f32 %v3128, %v3614
    %3616 = vmatprep.mubr.f32.mxu0 %v506
    %3617 = vmatmul.mubr.f32.gmra.mxu0 %v2754
    %v3618 = vpop.f32.mrf.mxu0
    %v3619 = vadd.f32 %v3124, %v3618
    %v3620 = vpop.f32.mrf.mxu0
    %v3621 = vadd.f32 %v3128, %v3620
    %3622 = vmatprep.mubr.f32.mxu0 %v507
    %3623 = vmatmul.mubr.f32.gmra.mxu0 %v2803
    %v3624 = vpop.f32.mrf.mxu0
    %v3625 = vadd.f32 %v3124, %v3624
    %v3626 = vpop.f32.mrf.mxu0
    %v3627 = vadd.f32 %v3128, %v3626
    %3628 = vmatprep.mubr.f32.mxu0 %v508
    %3629 = vmatmul.mubr.f32.gmra.mxu0 %v2852
    %v3630 = vpop.f32.mrf.mxu0
    %v3631 = vadd.f32 %v3124, %v3630
    %v3632 = vpop.f32.mrf.mxu0
    %v3633 = vadd.f32 %v3128, %v3632
    %3634 = vmatprep.mubr.f32.mxu0 %v509
    %3635 = vmatmul.mubr.f32.gmra.mxu0 %v2901
    %v3636 = vpop.f32.mrf.mxu0
    %v3637 = vadd.f32 %v3124, %v3636
    %v3638 = vpop.f32.mrf.mxu0
    %v3639 = vadd.f32 %v3128, %v3638
    %3640 = vmatprep.mubr.f32.mxu0 %v510
    %3641 = vmatmul.mubr.f32.gmra.mxu0 %v2950
    %v3642 = vpop.f32.mrf.mxu0
    %v3643 = vadd.f32 %v3124, %v3642
    %v3644 = vpop.f32.mrf.mxu0
    %v3645 = vadd.f32 %v3128, %v3644
    %3646 = vdwg.mxu0
    %v3647 = vxor.u32 %v3200, 2147483648
    %v3648 = vxor.u32 %v3202, 2147483648
    %v3649 = vxor.u32 %v3457, 2147483648
    %v3650 = vxor.u32 %v3206, 2147483648
    %v3651 = vxor.u32 %v3208, 2147483648
    %v3652 = vxor.u32 %v3463, 2147483648
    %v3653 = vxor.u32 %v3212, 2147483648
    %v3654 = vxor.u32 %v3214, 2147483648
    %v3655 = vxor.u32 %v3469, 2147483648
    %v3656 = vxor.u32 %v3218, 2147483648
    %v3657 = vxor.u32 %v3220, 2147483648
    %v3658 = vxor.u32 %v3475, 2147483648
    %v3659 = vxor.u32 %v3224, 2147483648
    %v3660 = vxor.u32 %v3226, 2147483648
    %v3661 = vxor.u32 %v3481, 2147483648
    %v3662 = vxor.u32 %v3230, 2147483648
    %v3663 = vxor.u32 %v3232, 2147483648
    %v3664 = vxor.u32 %v3487, 2147483648
    %v3665 = vxor.u32 %v3236, 2147483648
    %v3666 = vxor.u32 %v3238, 2147483648
    %v3667 = vxor.u32 %v3493, 2147483648
    %v3668 = vxor.u32 %v3242, 2147483648
    %v3669 = vxor.u32 %v3244, 2147483648
    %v3670 = vxor.u32 %v3499, 2147483648
    %v3671 = vxor.u32 %v3248, 2147483648
    %v3672 = vxor.u32 %v3250, 2147483648
    %v3673 = vxor.u32 %v3505, 2147483648
    %v3674 = vxor.u32 %v3254, 2147483648
    %v3675 = vxor.u32 %v3256, 2147483648
    %v3676 = vxor.u32 %v3511, 2147483648
    %v3677 = vxor.u32 %v3260, 2147483648
    %v3678 = vxor.u32 %v3262, 2147483648
    %v3679 = vxor.u32 %v3517, 2147483648
    %v3680 = vxor.u32 %v3266, 2147483648
    %v3681 = vxor.u32 %v3268, 2147483648
    %v3682 = vxor.u32 %v3523, 2147483648
    %v3683 = vxor.u32 %v3272, 2147483648
    %v3684 = vxor.u32 %v3274, 2147483648
    %v3685 = vxor.u32 %v3529, 2147483648
    %v3686 = vxor.u32 %v3278, 2147483648
    %v3687 = vxor.u32 %v3280, 2147483648
    %v3688 = vxor.u32 %v3535, 2147483648
    %v3689 = vxor.u32 %v3284, 2147483648
    %v3690 = vxor.u32 %v3286, 2147483648
    %v3691 = vxor.u32 %v3541, 2147483648
    %v3692 = vxor.u32 %v3290, 2147483648
    %v3693 = vxor.u32 %v3292, 2147483648
    %v3694 = vxor.u32 %v3547, 2147483648
    %v3695 = vxor.u32 %v3296, 2147483648
    %v3696 = vxor.u32 %v3298, 2147483648
    %v3697 = vxor.u32 %v3553, 2147483648
    %v3698 = vxor.u32 %v3302, 2147483648
    %v3699 = vxor.u32 %v3304, 2147483648
    %v3700 = vxor.u32 %v3559, 2147483648
    %v3701 = vxor.u32 %v3308, 2147483648
    %v3702 = vxor.u32 %v3310, 2147483648
    %v3703 = vxor.u32 %v3565, 2147483648
    %v3704 = vxor.u32 %v3314, 2147483648
    %v3705 = vxor.u32 %v3316, 2147483648
    %v3706 = vxor.u32 %v3571, 2147483648
    %v3707 = vxor.u32 %v3320, 2147483648
    %v3708 = vxor.u32 %v3322, 2147483648
    %v3709 = vxor.u32 %v3577, 2147483648
    %v3710 = vxor.u32 %v3326, 2147483648
    %v3711 = vxor.u32 %v3328, 2147483648
    %v3712 = vxor.u32 %v3583, 2147483648
    %v3713 = vxor.u32 %v3332, 2147483648
    %v3714 = vxor.u32 %v3334, 2147483648
    %v3715 = vxor.u32 %v3589, 2147483648
    %v3716 = vxor.u32 %v3338, 2147483648
    %v3717 = vxor.u32 %v3340, 2147483648
    %v3718 = vxor.u32 %v3595, 2147483648
    %v3719 = vxor.u32 %v3344, 2147483648
    %v3720 = vxor.u32 %v3346, 2147483648
    %v3721 = vxor.u32 %v3601, 2147483648
    %v3722 = vxor.u32 %v3350, 2147483648
    %v3723 = vxor.u32 %v3352, 2147483648
    %v3724 = vxor.u32 %v3607, 2147483648
    %v3725 = vxor.u32 %v3356, 2147483648
    %v3726 = vxor.u32 %v3358, 2147483648
    %v3727 = vxor.u32 %v3613, 2147483648
    %v3728 = vxor.u32 %v3362, 2147483648
    %v3729 = vxor.u32 %v3364, 2147483648
    %v3730 = vxor.u32 %v3619, 2147483648
    %v3731 = vxor.u32 %v3368, 2147483648
    %v3732 = vxor.u32 %v3370, 2147483648
    %v3733 = vxor.u32 %v3625, 2147483648
    %v3734 = vxor.u32 %v3374, 2147483648
    %v3735 = vxor.u32 %v3376, 2147483648
    %v3736 = vxor.u32 %v3631, 2147483648
    %v3737 = vxor.u32 %v3380, 2147483648
    %v3738 = vxor.u32 %v3382, 2147483648
    %v3739 = vxor.u32 %v3637, 2147483648
    %v3740 = vxor.u32 %v3386, 2147483648
    %v3741 = vxor.u32 %v3388, 2147483648
    %v3742 = vxor.u32 %v3643, 2147483648
    %v3743 = vmul.f32 %v3647, 1.442695
    %v3744 = vpow.pop %v3743
    %v3745 = vmul.f32 %v3648, 1.442695
    %v3746 = vpow.pop %v3745
    %v3747 = vmul.f32 %v3649, 1.442695
    %v3748 = vpow.pop %v3747
    %v3749 = vmul.f32 %v3650, 1.442695
    %v3750 = vpow.pop %v3749
    %v3751 = vmul.f32 %v3651, 1.442695
    %v3752 = vpow.pop %v3751
    %v3753 = vmul.f32 %v3652, 1.442695
    %v3754 = vpow.pop %v3753
    %v3755 = vmul.f32 %v3653, 1.442695
    %v3756 = vpow.pop %v3755
    %v3757 = vmul.f32 %v3654, 1.442695
    %v3758 = vpow.pop %v3757
    %v3759 = vmul.f32 %v3655, 1.442695
    %v3760 = vpow.pop %v3759
    %v3761 = vmul.f32 %v3656, 1.442695
    %v3762 = vpow.pop %v3761
    %v3763 = vmul.f32 %v3657, 1.442695
    %v3764 = vpow.pop %v3763
    %v3765 = vmul.f32 %v3658, 1.442695
    %v3766 = vpow.pop %v3765
    %v3767 = vmul.f32 %v3659, 1.442695
    %v3768 = vpow.pop %v3767
    %v3769 = vmul.f32 %v3660, 1.442695
    %v3770 = vpow.pop %v3769
    %v3771 = vmul.f32 %v3661, 1.442695
    %v3772 = vpow.pop %v3771
    %v3773 = vmul.f32 %v3662, 1.442695
    %v3774 = vpow.pop %v3773
    %v3775 = vmul.f32 %v3663, 1.442695
    %v3776 = vpow.pop %v3775
    %v3777 = vmul.f32 %v3664, 1.442695
    %v3778 = vpow.pop %v3777
    %v3779 = vmul.f32 %v3665, 1.442695
    %v3780 = vpow.pop %v3779
    %v3781 = vmul.f32 %v3666, 1.442695
    %v3782 = vpow.pop %v3781
    %v3783 = vmul.f32 %v3667, 1.442695
    %v3784 = vpow.pop %v3783
    %v3785 = vmul.f32 %v3668, 1.442695
    %v3786 = vpow.pop %v3785
    %v3787 = vmul.f32 %v3669, 1.442695
    %v3788 = vpow.pop %v3787
    %v3789 = vmul.f32 %v3670, 1.442695
    %v3790 = vpow.pop %v3789
    %v3791 = vmul.f32 %v3671, 1.442695
    %v3792 = vpow.pop %v3791
    %v3793 = vmul.f32 %v3672, 1.442695
    %v3794 = vpow.pop %v3793
    %v3795 = vmul.f32 %v3673, 1.442695
    %v3796 = vpow.pop %v3795
    %v3797 = vmul.f32 %v3674, 1.442695
    %v3798 = vpow.pop %v3797
    %v3799 = vmul.f32 %v3675, 1.442695
    %v3800 = vpow.pop %v3799
    %v3801 = vmul.f32 %v3676, 1.442695
    %v3802 = vpow.pop %v3801
    %v3803 = vmul.f32 %v3677, 1.442695
    %v3804 = vpow.pop %v3803
    %v3805 = vmul.f32 %v3678, 1.442695
    %v3806 = vpow.pop %v3805
    %v3807 = vmul.f32 %v3679, 1.442695
    %v3808 = vpow.pop %v3807
    %v3809 = vmul.f32 %v3680, 1.442695
    %v3810 = vpow.pop %v3809
    %v3811 = vmul.f32 %v3681, 1.442695
    %v3812 = vpow.pop %v3811
    %v3813 = vmul.f32 %v3682, 1.442695
    %v3814 = vpow.pop %v3813
    %v3815 = vmul.f32 %v3683, 1.442695
    %v3816 = vpow.pop %v3815
    %v3817 = vmul.f32 %v3684, 1.442695
    %v3818 = vpow.pop %v3817
    %v3819 = vmul.f32 %v3685, 1.442695
    %v3820 = vpow.pop %v3819
    %v3821 = vmul.f32 %v3686, 1.442695
    %v3822 = vpow.pop %v3821
    %v3823 = vmul.f32 %v3687, 1.442695
    %v3824 = vpow.pop %v3823
    %v3825 = vmul.f32 %v3688, 1.442695
    %v3826 = vpow.pop %v3825
    %v3827 = vmul.f32 %v3689, 1.442695
    %v3828 = vpow.pop %v3827
    %v3829 = vmul.f32 %v3690, 1.442695
    %v3830 = vpow.pop %v3829
    %v3831 = vmul.f32 %v3691, 1.442695
    %v3832 = vpow.pop %v3831
    %v3833 = vmul.f32 %v3692, 1.442695
    %v3834 = vpow.pop %v3833
    %v3835 = vmul.f32 %v3693, 1.442695
    %v3836 = vpow.pop %v3835
    %v3837 = vmul.f32 %v3694, 1.442695
    %v3838 = vpow.pop %v3837
    %v3839 = vmul.f32 %v3695, 1.442695
    %v3840 = vpow.pop %v3839
    %v3841 = vmul.f32 %v3696, 1.442695
    %v3842 = vpow.pop %v3841
    %v3843 = vmul.f32 %v3697, 1.442695
    %v3844 = vpow.pop %v3843
    %v3845 = vmul.f32 %v3698, 1.442695
    %v3846 = vpow.pop %v3845
    %v3847 = vmul.f32 %v3699, 1.442695
    %v3848 = vpow.pop %v3847
    %v3849 = vmul.f32 %v3700, 1.442695
    %v3850 = vpow.pop %v3849
    %v3851 = vmul.f32 %v3701, 1.442695
    %v3852 = vpow.pop %v3851
    %v3853 = vmul.f32 %v3702, 1.442695
    %v3854 = vpow.pop %v3853
    %v3855 = vmul.f32 %v3703, 1.442695
    %v3856 = vpow.pop %v3855
    %v3857 = vmul.f32 %v3704, 1.442695
    %v3858 = vpow.pop %v3857
    %v3859 = vmul.f32 %v3705, 1.442695
    %v3860 = vpow.pop %v3859
    %v3861 = vmul.f32 %v3706, 1.442695
    %v3862 = vpow.pop %v3861
    %v3863 = vmul.f32 %v3707, 1.442695
    %v3864 = vpow.pop %v3863
    %v3865 = vmul.f32 %v3708, 1.442695
    %v3866 = vpow.pop %v3865
    %v3867 = vmul.f32 %v3709, 1.442695
    %v3868 = vpow.pop %v3867
    %v3869 = vmul.f32 %v3710, 1.442695
    %v3870 = vpow.pop %v3869
    %v3871 = vmul.f32 %v3711, 1.442695
    %v3872 = vpow.pop %v3871
    %v3873 = vmul.f32 %v3712, 1.442695
    %v3874 = vpow.pop %v3873
    %v3875 = vmul.f32 %v3713, 1.442695
    %v3876 = vpow.pop %v3875
    %v3877 = vmul.f32 %v3714, 1.442695
    %v3878 = vpow.pop %v3877
    %v3879 = vmul.f32 %v3715, 1.442695
    %v3880 = vpow.pop %v3879
    %v3881 = vmul.f32 %v3716, 1.442695
    %v3882 = vpow.pop %v3881
    %v3883 = vmul.f32 %v3717, 1.442695
    %v3884 = vpow.pop %v3883
    %v3885 = vmul.f32 %v3718, 1.442695
    %v3886 = vpow.pop %v3885
    %v3887 = vmul.f32 %v3719, 1.442695
    %v3888 = vpow.pop %v3887
    %v3889 = vmul.f32 %v3720, 1.442695
    %v3890 = vpow.pop %v3889
    %v3891 = vmul.f32 %v3721, 1.442695
    %v3892 = vpow.pop %v3891
    %v3893 = vmul.f32 %v3722, 1.442695
    %v3894 = vpow.pop %v3893
    %v3895 = vmul.f32 %v3723, 1.442695
    %v3896 = vpow.pop %v3895
    %v3897 = vmul.f32 %v3724, 1.442695
    %v3898 = vpow.pop %v3897
    %v3899 = vmul.f32 %v3725, 1.442695
    %v3900 = vpow.pop %v3899
    %v3901 = vmul.f32 %v3726, 1.442695
    %v3902 = vpow.pop %v3901
    %v3903 = vmul.f32 %v3727, 1.442695
    %v3904 = vpow.pop %v3903
    %v3905 = vmul.f32 %v3728, 1.442695
    %v3906 = vpow.pop %v3905
    %v3907 = vmul.f32 %v3729, 1.442695
    %v3908 = vpow.pop %v3907
    %v3909 = vmul.f32 %v3730, 1.442695
    %v3910 = vpow.pop %v3909
    %v3911 = vmul.f32 %v3731, 1.442695
    %v3912 = vpow.pop %v3911
    %v3913 = vmul.f32 %v3732, 1.442695
    %v3914 = vpow.pop %v3913
    %v3915 = vmul.f32 %v3733, 1.442695
    %v3916 = vpow.pop %v3915
    %v3917 = vmul.f32 %v3734, 1.442695
    %v3918 = vpow.pop %v3917
    %v3919 = vmul.f32 %v3735, 1.442695
    %v3920 = vpow.pop %v3919
    %v3921 = vmul.f32 %v3736, 1.442695
    %v3922 = vpow.pop %v3921
    %v3923 = vmul.f32 %v3737, 1.442695
    %v3924 = vpow.pop %v3923
    %v3925 = vmul.f32 %v3738, 1.442695
    %v3926 = vpow.pop %v3925
    %v3927 = vmul.f32 %v3739, 1.442695
    %v3928 = vpow.pop %v3927
    %v3929 = vmul.f32 %v3740, 1.442695
    %v3930 = vpow.pop %v3929
    %v3931 = vmul.f32 %v3741, 1.442695
    %v3932 = vpow.pop %v3931
    %v3933 = vmul.f32 %v3742, 1.442695
    %v3934 = vpow.pop %v3933
    %v3935 = vadd.f32 %v3744, 1.0
    %v3936 = vadd.f32 %v3746, 1.0
    %v3937 = vadd.f32 %v3748, 1.0
    %v3938 = vadd.f32 %v3750, 1.0
    %v3939 = vadd.f32 %v3752, 1.0
    %v3940 = vadd.f32 %v3754, 1.0
    %v3941 = vadd.f32 %v3756, 1.0
    %v3942 = vadd.f32 %v3758, 1.0
    %v3943 = vadd.f32 %v3760, 1.0
    %v3944 = vadd.f32 %v3762, 1.0
    %v3945 = vadd.f32 %v3764, 1.0
    %v3946 = vadd.f32 %v3766, 1.0
    %v3947 = vadd.f32 %v3768, 1.0
    %v3948 = vadd.f32 %v3770, 1.0
    %v3949 = vadd.f32 %v3772, 1.0
    %v3950 = vadd.f32 %v3774, 1.0
    %v3951 = vadd.f32 %v3776, 1.0
    %v3952 = vadd.f32 %v3778, 1.0
    %v3953 = vadd.f32 %v3780, 1.0
    %v3954 = vadd.f32 %v3782, 1.0
    %v3955 = vadd.f32 %v3784, 1.0
    %v3956 = vadd.f32 %v3786, 1.0
    %v3957 = vadd.f32 %v3788, 1.0
    %v3958 = vadd.f32 %v3790, 1.0
    %v3959 = vadd.f32 %v3792, 1.0
    %v3960 = vadd.f32 %v3794, 1.0
    %v3961 = vadd.f32 %v3796, 1.0
    %v3962 = vadd.f32 %v3798, 1.0
    %v3963 = vadd.f32 %v3800, 1.0
    %v3964 = vadd.f32 %v3802, 1.0
    %v3965 = vadd.f32 %v3804, 1.0
    %v3966 = vadd.f32 %v3806, 1.0
    %v3967 = vadd.f32 %v3808, 1.0
    %v3968 = vadd.f32 %v3810, 1.0
    %v3969 = vadd.f32 %v3812, 1.0
    %v3970 = vadd.f32 %v3814, 1.0
    %v3971 = vadd.f32 %v3816, 1.0
    %v3972 = vadd.f32 %v3818, 1.0
    %v3973 = vadd.f32 %v3820, 1.0
    %v3974 = vadd.f32 %v3822, 1.0
    %v3975 = vadd.f32 %v3824, 1.0
    %v3976 = vadd.f32 %v3826, 1.0
    %v3977 = vadd.f32 %v3828, 1.0
    %v3978 = vadd.f32 %v3830, 1.0
    %v3979 = vadd.f32 %v3832, 1.0
    %v3980 = vadd.f32 %v3834, 1.0
    %v3981 = vadd.f32 %v3836, 1.0
    %v3982 = vadd.f32 %v3838, 1.0
    %v3983 = vadd.f32 %v3840, 1.0
    %v3984 = vadd.f32 %v3842, 1.0
    %v3985 = vadd.f32 %v3844, 1.0
    %v3986 = vadd.f32 %v3846, 1.0
    %v3987 = vadd.f32 %v3848, 1.0
    %v3988 = vadd.f32 %v3850, 1.0
    %v3989 = vadd.f32 %v3852, 1.0
    %v3990 = vadd.f32 %v3854, 1.0
    %v3991 = vadd.f32 %v3856, 1.0
    %v3992 = vadd.f32 %v3858, 1.0
    %v3993 = vadd.f32 %v3860, 1.0
    %v3994 = vadd.f32 %v3862, 1.0
    %v3995 = vadd.f32 %v3864, 1.0
    %v3996 = vadd.f32 %v3866, 1.0
    %v3997 = vadd.f32 %v3868, 1.0
    %v3998 = vadd.f32 %v3870, 1.0
    %v3999 = vadd.f32 %v3872, 1.0
    %v4000 = vadd.f32 %v3874, 1.0
    %v4001 = vadd.f32 %v3876, 1.0
    %v4002 = vadd.f32 %v3878, 1.0
    %v4003 = vadd.f32 %v3880, 1.0
    %v4004 = vadd.f32 %v3882, 1.0
    %v4005 = vadd.f32 %v3884, 1.0
    %v4006 = vadd.f32 %v3886, 1.0
    %v4007 = vadd.f32 %v3888, 1.0
    %v4008 = vadd.f32 %v3890, 1.0
    %v4009 = vadd.f32 %v3892, 1.0
    %v4010 = vadd.f32 %v3894, 1.0
    %v4011 = vadd.f32 %v3896, 1.0
    %v4012 = vadd.f32 %v3898, 1.0
    %v4013 = vadd.f32 %v3900, 1.0
    %v4014 = vadd.f32 %v3902, 1.0
    %v4015 = vadd.f32 %v3904, 1.0
    %v4016 = vadd.f32 %v3906, 1.0
    %v4017 = vadd.f32 %v3908, 1.0
    %v4018 = vadd.f32 %v3910, 1.0
    %v4019 = vadd.f32 %v3912, 1.0
    %v4020 = vadd.f32 %v3914, 1.0
    %v4021 = vadd.f32 %v3916, 1.0
    %v4022 = vadd.f32 %v3918, 1.0
    %v4023 = vadd.f32 %v3920, 1.0
    %v4024 = vadd.f32 %v3922, 1.0
    %v4025 = vadd.f32 %v3924, 1.0
    %v4026 = vadd.f32 %v3926, 1.0
    %v4027 = vadd.f32 %v3928, 1.0
    %v4028 = vadd.f32 %v3930, 1.0
    %v4029 = vadd.f32 %v3932, 1.0
    %v4030 = vadd.f32 %v3934, 1.0
    %v4031 = vrcp.pop %v3935
    %v4032 = vmul.f32 1.0, %v4031
    %v4033 = vrcp.pop %v3936
    %v4034 = vmul.f32 1.0, %v4033
    %v4035 = vrcp.pop %v3937
    %v4036 = vmul.f32 1.0, %v4035
    %v4037 = vrcp.pop %v3938
    %v4038 = vmul.f32 1.0, %v4037
    %v4039 = vrcp.pop %v3939
    %v4040 = vmul.f32 1.0, %v4039
    %v4041 = vrcp.pop %v3940
    %v4042 = vmul.f32 1.0, %v4041
    %v4043 = vrcp.pop %v3941
    %v4044 = vmul.f32 1.0, %v4043
    %v4045 = vrcp.pop %v3942
    %v4046 = vmul.f32 1.0, %v4045
    %v4047 = vrcp.pop %v3943
    %v4048 = vmul.f32 1.0, %v4047
    %v4049 = vrcp.pop %v3944
    %v4050 = vmul.f32 1.0, %v4049
    %v4051 = vrcp.pop %v3945
    %v4052 = vmul.f32 1.0, %v4051
    %v4053 = vrcp.pop %v3946
    %v4054 = vmul.f32 1.0, %v4053
    %v4055 = vrcp.pop %v3947
    %v4056 = vmul.f32 1.0, %v4055
    %v4057 = vrcp.pop %v3948
    %v4058 = vmul.f32 1.0, %v4057
    %v4059 = vrcp.pop %v3949
    %v4060 = vmul.f32 1.0, %v4059
    %v4061 = vrcp.pop %v3950
    %v4062 = vmul.f32 1.0, %v4061
    %v4063 = vrcp.pop %v3951
    %v4064 = vmul.f32 1.0, %v4063
    %v4065 = vrcp.pop %v3952
    %v4066 = vmul.f32 1.0, %v4065
    %v4067 = vrcp.pop %v3953
    %v4068 = vmul.f32 1.0, %v4067
    %v4069 = vrcp.pop %v3954
    %v4070 = vmul.f32 1.0, %v4069
    %v4071 = vrcp.pop %v3955
    %v4072 = vmul.f32 1.0, %v4071
    %v4073 = vrcp.pop %v3956
    %v4074 = vmul.f32 1.0, %v4073
    %v4075 = vrcp.pop %v3957
    %v4076 = vmul.f32 1.0, %v4075
    %v4077 = vrcp.pop %v3958
    %v4078 = vmul.f32 1.0, %v4077
    %v4079 = vrcp.pop %v3959
    %v4080 = vmul.f32 1.0, %v4079
    %v4081 = vrcp.pop %v3960
    %v4082 = vmul.f32 1.0, %v4081
    %v4083 = vrcp.pop %v3961
    %v4084 = vmul.f32 1.0, %v4083
    %v4085 = vrcp.pop %v3962
    %v4086 = vmul.f32 1.0, %v4085
    %v4087 = vrcp.pop %v3963
    %v4088 = vmul.f32 1.0, %v4087
    %v4089 = vrcp.pop %v3964
    %v4090 = vmul.f32 1.0, %v4089
    %v4091 = vrcp.pop %v3965
    %v4092 = vmul.f32 1.0, %v4091
    %v4093 = vrcp.pop %v3966
    %v4094 = vmul.f32 1.0, %v4093
    %v4095 = vrcp.pop %v3967
    %v4096 = vmul.f32 1.0, %v4095
    %v4097 = vrcp.pop %v3968
    %v4098 = vmul.f32 1.0, %v4097
    %v4099 = vrcp.pop %v3969
    %v4100 = vmul.f32 1.0, %v4099
    %v4101 = vrcp.pop %v3970
    %v4102 = vmul.f32 1.0, %v4101
    %v4103 = vrcp.pop %v3971
    %v4104 = vmul.f32 1.0, %v4103
    %v4105 = vrcp.pop %v3972
    %v4106 = vmul.f32 1.0, %v4105
    %v4107 = vrcp.pop %v3973
    %v4108 = vmul.f32 1.0, %v4107
    %v4109 = vrcp.pop %v3974
    %v4110 = vmul.f32 1.0, %v4109
    %v4111 = vrcp.pop %v3975
    %v4112 = vmul.f32 1.0, %v4111
    %v4113 = vrcp.pop %v3976
    %v4114 = vmul.f32 1.0, %v4113
    %v4115 = vrcp.pop %v3977
    %v4116 = vmul.f32 1.0, %v4115
    %v4117 = vrcp.pop %v3978
    %v4118 = vmul.f32 1.0, %v4117
    %v4119 = vrcp.pop %v3979
    %v4120 = vmul.f32 1.0, %v4119
    %v4121 = vrcp.pop %v3980
    %v4122 = vmul.f32 1.0, %v4121
    %v4123 = vrcp.pop %v3981
    %v4124 = vmul.f32 1.0, %v4123
    %v4125 = vrcp.pop %v3982
    %v4126 = vmul.f32 1.0, %v4125
    %v4127 = vrcp.pop %v3983
    %v4128 = vmul.f32 1.0, %v4127
    %v4129 = vrcp.pop %v3984
    %v4130 = vmul.f32 1.0, %v4129
    %v4131 = vrcp.pop %v3985
    %v4132 = vmul.f32 1.0, %v4131
    %v4133 = vrcp.pop %v3986
    %v4134 = vmul.f32 1.0, %v4133
    %v4135 = vrcp.pop %v3987
    %v4136 = vmul.f32 1.0, %v4135
    %v4137 = vrcp.pop %v3988
    %v4138 = vmul.f32 1.0, %v4137
    %v4139 = vrcp.pop %v3989
    %v4140 = vmul.f32 1.0, %v4139
    %v4141 = vrcp.pop %v3990
    %v4142 = vmul.f32 1.0, %v4141
    %v4143 = vrcp.pop %v3991
    %v4144 = vmul.f32 1.0, %v4143
    %v4145 = vrcp.pop %v3992
    %v4146 = vmul.f32 1.0, %v4145
    %v4147 = vrcp.pop %v3993
    %v4148 = vmul.f32 1.0, %v4147
    %v4149 = vrcp.pop %v3994
    %v4150 = vmul.f32 1.0, %v4149
    %v4151 = vrcp.pop %v3995
    %v4152 = vmul.f32 1.0, %v4151
    %v4153 = vrcp.pop %v3996
    %v4154 = vmul.f32 1.0, %v4153
    %v4155 = vrcp.pop %v3997
    %v4156 = vmul.f32 1.0, %v4155
    %v4157 = vrcp.pop %v3998
    %v4158 = vmul.f32 1.0, %v4157
    %v4159 = vrcp.pop %v3999
    %v4160 = vmul.f32 1.0, %v4159
    %v4161 = vrcp.pop %v4000
    %v4162 = vmul.f32 1.0, %v4161
    %v4163 = vrcp.pop %v4001
    %v4164 = vmul.f32 1.0, %v4163
    %v4165 = vrcp.pop %v4002
    %v4166 = vmul.f32 1.0, %v4165
    %v4167 = vrcp.pop %v4003
    %v4168 = vmul.f32 1.0, %v4167
    %v4169 = vrcp.pop %v4004
    %v4170 = vmul.f32 1.0, %v4169
    %v4171 = vrcp.pop %v4005
    %v4172 = vmul.f32 1.0, %v4171
    %v4173 = vrcp.pop %v4006
    %v4174 = vmul.f32 1.0, %v4173
    %v4175 = vrcp.pop %v4007
    %v4176 = vmul.f32 1.0, %v4175
    %v4177 = vrcp.pop %v4008
    %v4178 = vmul.f32 1.0, %v4177
    %v4179 = vrcp.pop %v4009
    %v4180 = vmul.f32 1.0, %v4179
    %v4181 = vrcp.pop %v4010
    %v4182 = vmul.f32 1.0, %v4181
    %v4183 = vrcp.pop %v4011
    %v4184 = vmul.f32 1.0, %v4183
    %v4185 = vrcp.pop %v4012
    %v4186 = vmul.f32 1.0, %v4185
    %v4187 = vrcp.pop %v4013
    %v4188 = vmul.f32 1.0, %v4187
    %v4189 = vrcp.pop %v4014
    %v4190 = vmul.f32 1.0, %v4189
    %v4191 = vrcp.pop %v4015
    %v4192 = vmul.f32 1.0, %v4191
    %v4193 = vrcp.pop %v4016
    %v4194 = vmul.f32 1.0, %v4193
    %v4195 = vrcp.pop %v4017
    %v4196 = vmul.f32 1.0, %v4195
    %v4197 = vrcp.pop %v4018
    %v4198 = vmul.f32 1.0, %v4197
    %v4199 = vrcp.pop %v4019
    %v4200 = vmul.f32 1.0, %v4199
    %v4201 = vrcp.pop %v4020
    %v4202 = vmul.f32 1.0, %v4201
    %v4203 = vrcp.pop %v4021
    %v4204 = vmul.f32 1.0, %v4203
    %v4205 = vrcp.pop %v4022
    %v4206 = vmul.f32 1.0, %v4205
    %v4207 = vrcp.pop %v4023
    %v4208 = vmul.f32 1.0, %v4207
    %v4209 = vrcp.pop %v4024
    %v4210 = vmul.f32 1.0, %v4209
    %v4211 = vrcp.pop %v4025
    %v4212 = vmul.f32 1.0, %v4211
    %v4213 = vrcp.pop %v4026
    %v4214 = vmul.f32 1.0, %v4213
    %v4215 = vrcp.pop %v4027
    %v4216 = vmul.f32 1.0, %v4215
    %v4217 = vrcp.pop %v4028
    %v4218 = vmul.f32 1.0, %v4217
    %v4219 = vrcp.pop %v4029
    %v4220 = vmul.f32 1.0, %v4219
    %v4221 = vrcp.pop %v4030
    %v4222 = vmul.f32 1.0, %v4221
    %v4223 = vtanh.pop %v3459
    %v4224 = vtanh.pop %v3465
    %v4225 = vtanh.pop %v3471
    %v4226 = vtanh.pop %v3477
    %v4227 = vtanh.pop %v3483
    %v4228 = vtanh.pop %v3489
    %v4229 = vtanh.pop %v3495
    %v4230 = vtanh.pop %v3501
    %v4231 = vtanh.pop %v3507
    %v4232 = vtanh.pop %v3513
    %v4233 = vtanh.pop %v3519
    %v4234 = vtanh.pop %v3525
    %v4235 = vtanh.pop %v3531
    %v4236 = vtanh.pop %v3537
    %v4237 = vtanh.pop %v3543
    %v4238 = vtanh.pop %v3549
    %v4239 = vtanh.pop %v3555
    %v4240 = vtanh.pop %v3561
    %v4241 = vtanh.pop %v3567
    %v4242 = vtanh.pop %v3573
    %v4243 = vtanh.pop %v3579
    %v4244 = vtanh.pop %v3585
    %v4245 = vtanh.pop %v3591
    %v4246 = vtanh.pop %v3597
    %v4247 = vtanh.pop %v3603
    %v4248 = vtanh.pop %v3609
    %v4249 = vtanh.pop %v3615
    %v4250 = vtanh.pop %v3621
    %v4251 = vtanh.pop %v3627
    %v4252 = vtanh.pop %v3633
    %v4253 = vtanh.pop %v3639
    %v4254 = vtanh.pop %v3645
    %v4255 = vmul.f32 %v4034, %v839
    %v4256 = vmul.f32 %v4040, %v840
    %v4257 = vmul.f32 %v4046, %v841
    %v4258 = vmul.f32 %v4052, %v842
    %v4259 = vmul.f32 %v4058, %v843
    %v4260 = vmul.f32 %v4064, %v844
    %v4261 = vmul.f32 %v4070, %v845
    %v4262 = vmul.f32 %v4076, %v846
    %v4263 = vmul.f32 %v4082, %v847
    %v4264 = vmul.f32 %v4088, %v848
    %v4265 = vmul.f32 %v4094, %v849
    %v4266 = vmul.f32 %v4100, %v850
    %v4267 = vmul.f32 %v4106, %v851
    %v4268 = vmul.f32 %v4112, %v852
    %v4269 = vmul.f32 %v4118, %v853
    %v4270 = vmul.f32 %v4124, %v854
    %v4271 = vmul.f32 %v4130, %v855
    %v4272 = vmul.f32 %v4136, %v856
    %v4273 = vmul.f32 %v4142, %v857
    %v4274 = vmul.f32 %v4148, %v858
    %v4275 = vmul.f32 %v4154, %v859
    %v4276 = vmul.f32 %v4160, %v860
    %v4277 = vmul.f32 %v4166, %v861
    %v4278 = vmul.f32 %v4172, %v862
    %v4279 = vmul.f32 %v4178, %v863
    %v4280 = vmul.f32 %v4184, %v864
    %v4281 = vmul.f32 %v4190, %v865
    %v4282 = vmul.f32 %v4196, %v866
    %v4283 = vmul.f32 %v4202, %v867
    %v4284 = vmul.f32 %v4208, %v868
    %v4285 = vmul.f32 %v4214, %v869
    %v4286 = vmul.f32 %v4220, %v870
    %v4287 = vmul.f32 %v4032, %v4223
    %v4288 = vmul.f32 %v4038, %v4224
    %v4289 = vmul.f32 %v4044, %v4225
    %v4290 = vmul.f32 %v4050, %v4226
    %v4291 = vmul.f32 %v4056, %v4227
    %v4292 = vmul.f32 %v4062, %v4228
    %v4293 = vmul.f32 %v4068, %v4229
    %v4294 = vmul.f32 %v4074, %v4230
    %v4295 = vmul.f32 %v4080, %v4231
    %v4296 = vmul.f32 %v4086, %v4232
    %v4297 = vmul.f32 %v4092, %v4233
    %v4298 = vmul.f32 %v4098, %v4234
    %v4299 = vmul.f32 %v4104, %v4235
    %v4300 = vmul.f32 %v4110, %v4236
    %v4301 = vmul.f32 %v4116, %v4237
    %v4302 = vmul.f32 %v4122, %v4238
    %v4303 = vmul.f32 %v4128, %v4239
    %v4304 = vmul.f32 %v4134, %v4240
    %v4305 = vmul.f32 %v4140, %v4241
    %v4306 = vmul.f32 %v4146, %v4242
    %v4307 = vmul.f32 %v4152, %v4243
    %v4308 = vmul.f32 %v4158, %v4244
    %v4309 = vmul.f32 %v4164, %v4245
    %v4310 = vmul.f32 %v4170, %v4246
    %v4311 = vmul.f32 %v4176, %v4247
    %v4312 = vmul.f32 %v4182, %v4248
    %v4313 = vmul.f32 %v4188, %v4249
    %v4314 = vmul.f32 %v4194, %v4250
    %v4315 = vmul.f32 %v4200, %v4251
    %v4316 = vmul.f32 %v4206, %v4252
    %v4317 = vmul.f32 %v4212, %v4253
    %v4318 = vmul.f32 %v4218, %v4254
    %v4319 = vadd.f32 %v4255, %v4287
    %v4320 = vadd.f32 %v4256, %v4288
    %v4321 = vadd.f32 %v4257, %v4289
    %v4322 = vadd.f32 %v4258, %v4290
    %v4323 = vadd.f32 %v4259, %v4291
    %v4324 = vadd.f32 %v4260, %v4292
    %v4325 = vadd.f32 %v4261, %v4293
    %v4326 = vadd.f32 %v4262, %v4294
    %v4327 = vadd.f32 %v4263, %v4295
    %v4328 = vadd.f32 %v4264, %v4296
    %v4329 = vadd.f32 %v4265, %v4297
    %v4330 = vadd.f32 %v4266, %v4298
    %v4331 = vadd.f32 %v4267, %v4299
    %v4332 = vadd.f32 %v4268, %v4300
    %v4333 = vadd.f32 %v4269, %v4301
    %v4334 = vadd.f32 %v4270, %v4302
    %v4335 = vadd.f32 %v4271, %v4303
    %v4336 = vadd.f32 %v4272, %v4304
    %v4337 = vadd.f32 %v4273, %v4305
    %v4338 = vadd.f32 %v4274, %v4306
    %v4339 = vadd.f32 %v4275, %v4307
    %v4340 = vadd.f32 %v4276, %v4308
    %v4341 = vadd.f32 %v4277, %v4309
    %v4342 = vadd.f32 %v4278, %v4310
    %v4343 = vadd.f32 %v4279, %v4311
    %v4344 = vadd.f32 %v4280, %v4312
    %v4345 = vadd.f32 %v4281, %v4313
    %v4346 = vadd.f32 %v4282, %v4314
    %v4347 = vadd.f32 %v4283, %v4315
    %v4348 = vadd.f32 %v4284, %v4316
    %v4349 = vadd.f32 %v4285, %v4317
    %v4350 = vadd.f32 %v4286, %v4318
    %v4351 = vtanh.pop %v4319
    %v4352 = vtanh.pop %v4320
    %v4353 = vtanh.pop %v4321
    %v4354 = vtanh.pop %v4322
    %v4355 = vtanh.pop %v4323
    %v4356 = vtanh.pop %v4324
    %v4357 = vtanh.pop %v4325
    %v4358 = vtanh.pop %v4326
    %v4359 = vtanh.pop %v4327
    %v4360 = vtanh.pop %v4328
    %v4361 = vtanh.pop %v4329
    %v4362 = vtanh.pop %v4330
    %v4363 = vtanh.pop %v4331
    %v4364 = vtanh.pop %v4332
    %v4365 = vtanh.pop %v4333
    %v4366 = vtanh.pop %v4334
    %v4367 = vtanh.pop %v4335
    %v4368 = vtanh.pop %v4336
    %v4369 = vtanh.pop %v4337
    %v4370 = vtanh.pop %v4338
    %v4371 = vtanh.pop %v4339
    %v4372 = vtanh.pop %v4340
    %v4373 = vtanh.pop %v4341
    %v4374 = vtanh.pop %v4342
    %v4375 = vtanh.pop %v4343
    %v4376 = vtanh.pop %v4344
    %v4377 = vtanh.pop %v4345
    %v4378 = vtanh.pop %v4346
    %v4379 = vtanh.pop %v4347
    %v4380 = vtanh.pop %v4348
    %v4381 = vtanh.pop %v4349
    %v4382 = vtanh.pop %v4350
    %v4383 = vmul.f32 %v4036, %v4351
    %v4384 = vmul.f32 %v4042, %v4352
    %v4385 = vmul.f32 %v4048, %v4353
    %v4386 = vmul.f32 %v4054, %v4354
    %v4387 = vmul.f32 %v4060, %v4355
    %v4388 = vmul.f32 %v4066, %v4356
    %v4389 = vmul.f32 %v4072, %v4357
    %v4390 = vmul.f32 %v4078, %v4358
    %v4391 = vmul.f32 %v4084, %v4359
    %v4392 = vmul.f32 %v4090, %v4360
    %v4393 = vmul.f32 %v4096, %v4361
    %v4394 = vmul.f32 %v4102, %v4362
    %v4395 = vmul.f32 %v4108, %v4363
    %v4396 = vmul.f32 %v4114, %v4364
    %v4397 = vmul.f32 %v4120, %v4365
    %v4398 = vmul.f32 %v4126, %v4366
    %v4399 = vmul.f32 %v4132, %v4367
    %v4400 = vmul.f32 %v4138, %v4368
    %v4401 = vmul.f32 %v4144, %v4369
    %v4402 = vmul.f32 %v4150, %v4370
    %v4403 = vmul.f32 %v4156, %v4371
    %v4404 = vmul.f32 %v4162, %v4372
    %v4405 = vmul.f32 %v4168, %v4373
    %v4406 = vmul.f32 %v4174, %v4374
    %v4407 = vmul.f32 %v4180, %v4375
    %v4408 = vmul.f32 %v4186, %v4376
    %v4409 = vmul.f32 %v4192, %v4377
    %v4410 = vmul.f32 %v4198, %v4378
    %v4411 = vmul.f32 %v4204, %v4379
    %v4412 = vmul.f32 %v4210, %v4380
    %v4413 = vmul.f32 %v4216, %v4381
    %v4414 = vmul.f32 %v4222, %v4382
    %4415 = vst [vmem:[#allocation16] sm:$0xff] %v4383
    %4416 = vst [vmem:[#allocation16 + $0x8] sm:$0xff] %v4384
    %4417 = vst [vmem:[#allocation16 + $0x10] sm:$0xff] %v4385
    %4418 = vst [vmem:[#allocation16 + $0x18] sm:$0xff] %v4386
    %4419 = vst [vmem:[#allocation16 + $0x20] sm:$0xff] %v4387
    %4420 = vst [vmem:[#allocation16 + $0x28] sm:$0xff] %v4388
    %4421 = vst [vmem:[#allocation16 + $0x30] sm:$0xff] %v4389
    %4422 = vst [vmem:[#allocation16 + $0x38] sm:$0xff] %v4390
    %4423 = vst [vmem:[#allocation16 + $0x40] sm:$0xff] %v4391
    %4424 = vst [vmem:[#allocation16 + $0x48] sm:$0xff] %v4392
    %4425 = vst [vmem:[#allocation16 + $0x50] sm:$0xff] %v4393
    %4426 = vst [vmem:[#allocation16 + $0x58] sm:$0xff] %v4394
    %4427 = vst [vmem:[#allocation16 + $0x60] sm:$0xff] %v4395
    %4428 = vst [vmem:[#allocation16 + $0x68] sm:$0xff] %v4396
    %4429 = vst [vmem:[#allocation16 + $0x70] sm:$0xff] %v4397
    %4430 = vst [vmem:[#allocation16 + $0x78] sm:$0xff] %v4398
    %4431 = vst [vmem:[#allocation16 + $0x80] sm:$0xff] %v4399
    %4432 = vst [vmem:[#allocation16 + $0x88] sm:$0xff] %v4400
    %4433 = vst [vmem:[#allocation16 + $0x90] sm:$0xff] %v4401
    %4434 = vst [vmem:[#allocation16 + $0x98] sm:$0xff] %v4402
    %4435 = vst [vmem:[#allocation16 + $0xa0] sm:$0xff] %v4403
    %4436 = vst [vmem:[#allocation16 + $0xa8] sm:$0xff] %v4404
    %4437 = vst [vmem:[#allocation16 + $0xb0] sm:$0xff] %v4405
    %4438 = vst [vmem:[#allocation16 + $0xb8] sm:$0xff] %v4406
    %4439 = vst [vmem:[#allocation16 + $0xc0] sm:$0xff] %v4407
    %4440 = vst [vmem:[#allocation16 + $0xc8] sm:$0xff] %v4408
    %4441 = vst [vmem:[#allocation16 + $0xd0] sm:$0xff] %v4409
    %4442 = vst [vmem:[#allocation16 + $0xd8] sm:$0xff] %v4410
    %4443 = vst [vmem:[#allocation16 + $0xe0] sm:$0xff] %v4411
    %4444 = vst [vmem:[#allocation16 + $0xe8] sm:$0xff] %v4412
    %4445 = vst [vmem:[#allocation16 + $0xf0] sm:$0xff] %v4413
    %4446 = vst [vmem:[#allocation16 + $0xf8] sm:$0xff] %v4414
    %4447 = vst [vmem:[#allocation17] sm:$0xff] %v4319
    %4448 = vst [vmem:[#allocation17 + $0x8] sm:$0xff] %v4320
    %4449 = vst [vmem:[#allocation17 + $0x10] sm:$0xff] %v4321
    %4450 = vst [vmem:[#allocation17 + $0x18] sm:$0xff] %v4322
    %4451 = vst [vmem:[#allocation17 + $0x20] sm:$0xff] %v4323
    %4452 = vst [vmem:[#allocation17 + $0x28] sm:$0xff] %v4324
    %4453 = vst [vmem:[#allocation17 + $0x30] sm:$0xff] %v4325
    %4454 = vst [vmem:[#allocation17 + $0x38] sm:$0xff] %v4326
    %4455 = vst [vmem:[#allocation17 + $0x40] sm:$0xff] %v4327
    %4456 = vst [vmem:[#allocation17 + $0x48] sm:$0xff] %v4328
    %4457 = vst [vmem:[#allocation17 + $0x50] sm:$0xff] %v4329
    %4458 = vst [vmem:[#allocation17 + $0x58] sm:$0xff] %v4330
    %4459 = vst [vmem:[#allocation17 + $0x60] sm:$0xff] %v4331
    %4460 = vst [vmem:[#allocation17 + $0x68] sm:$0xff] %v4332
    %4461 = vst [vmem:[#allocation17 + $0x70] sm:$0xff] %v4333
    %4462 = vst [vmem:[#allocation17 + $0x78] sm:$0xff] %v4334
    %4463 = vst [vmem:[#allocation17 + $0x80] sm:$0xff] %v4335
    %4464 = vst [vmem:[#allocation17 + $0x88] sm:$0xff] %v4336
    %4465 = vst [vmem:[#allocation17 + $0x90] sm:$0xff] %v4337
    %4466 = vst [vmem:[#allocation17 + $0x98] sm:$0xff] %v4338
    %4467 = vst [vmem:[#allocation17 + $0xa0] sm:$0xff] %v4339
    %4468 = vst [vmem:[#allocation17 + $0xa8] sm:$0xff] %v4340
    %4469 = vst [vmem:[#allocation17 + $0xb0] sm:$0xff] %v4341
    %4470 = vst [vmem:[#allocation17 + $0xb8] sm:$0xff] %v4342
    %4471 = vst [vmem:[#allocation17 + $0xc0] sm:$0xff] %v4343
    %4472 = vst [vmem:[#allocation17 + $0xc8] sm:$0xff] %v4344
    %4473 = vst [vmem:[#allocation17 + $0xd0] sm:$0xff] %v4345
    %4474 = vst [vmem:[#allocation17 + $0xd8] sm:$0xff] %v4346
    %4475 = vst [vmem:[#allocation17 + $0xe0] sm:$0xff] %v4347
    %4476 = vst [vmem:[#allocation17 + $0xe8] sm:$0xff] %v4348
    %4477 = vst [vmem:[#allocation17 + $0xf0] sm:$0xff] %v4349
    %4478 = vst [vmem:[#allocation17 + $0xf8] sm:$0xff] %v4350
    // Predicated region
    $region78: #{lattice_rnn_cell_forward.1} parent=1 // pred_check
      _
    $region79: #{lattice_rnn_cell_forward.1} parent=1 // pred_check_branch
      %4480 = sbr.rel (0) target = $region81
    $region80: #{lattice_rnn_cell_forward.1} parent=1 // pred_region
      %s4482 = ssub.s32 4096, 4096
      %4483 = vsyncadd [#allocation4], %s4482
      %s4484 = sshll.u32 [#allocation16], 4
      %s4485 = int_to_ptr.vmem [resolvable:$true] %s4484
      %4490 = dma.vmem_to_hbm [thread:$0]  %s4485, 4096, %s11, [#allocation4], 128, 128, 8
    $region81: #{lattice_rnn_cell_forward.1} parent=1 // pred_fallthru
      _
    // Predicated region
    $region82: #{lattice_rnn_cell_forward.1} parent=1 // pred_check
      _
    $region83: #{lattice_rnn_cell_forward.1} parent=1 // pred_check_branch
      %4492 = sbr.rel (0) target = $region85
    $region84: #{lattice_rnn_cell_forward.1} parent=1 // pred_region
      %s4494 = ssub.s32 4096, 4096
      %4495 = vsyncadd [#allocation18], %s4494
      %s4496 = sshll.u32 [#allocation17], 4
      %s4497 = int_to_ptr.vmem [resolvable:$true] %s4496
      %4502 = dma.vmem_to_hbm [thread:$0]  %s4497, 4096, %s12, [#allocation18], 128, 128, 8
    $region85: #{lattice_rnn_cell_forward.1} parent=1 // pred_fallthru
      _
    // Predicated region
    $region86: #{lattice_rnn_cell_forward.1} parent=1 // pred_check
      _
    $region87: #{lattice_rnn_cell_forward.1} parent=1 // pred_check_branch
      %4504 = sbr.rel (0) target = $region89
    $region88: #{lattice_rnn_cell_forward.1} parent=1 // pred_region
      %4505 = dma.done [#allocation4], 4096
    $region89: #{lattice_rnn_cell_forward.1} parent=1 // pred_fallthru
      _
    // Predicated region
    $region90: #{lattice_rnn_cell_forward.1} parent=1 // pred_check
      _
    $region91: #{lattice_rnn_cell_forward.1} parent=1 // pred_check_branch
      %4507 = sbr.rel (0) target = $region93
    $region92: #{lattice_rnn_cell_forward.1} parent=1 // pred_region
      %4508 = dma.done [#allocation18], 4096
    $region93: #{lattice_rnn_cell_forward.1} parent=1 // pred_fallthru
      _
    %4509 = vsyncpa [#allocation3], 1
    %4510 = vsyncpa [#allocation6], 1
    %4511 = vsyncpa [#allocation9], 1
    %4512 = vsyncpa [#allocation12], 1
    %4513 = vsyncpa [#allocation15], 1
    %4514 = vsyncpa [#allocation4], 1
    %4515 = vsyncpa [#allocation18], 1

</llo_original>
